<compile_context>
chip_gen: v6e
topology: v6e:2x2x1
jax: 0.10.0
libtpu: 0.0.40
codegen_flags: <defaults>
</compile_context>

<pallas_src>
import math

import jax
import jax.numpy as jnp
from jax import lax
from jax.experimental import pallas as pl
from jax.experimental.pallas import tpu as pltpu


def _round_up(x, m):
    return ((x + m - 1) // m) * m


# ----------------------------------------------------------------------------
# Pallas kernel: one batch tile (tb rows) through the whole merged network
# ----------------------------------------------------------------------------
def gnn_kernel(iu_ref, ir_ref, tu_ref, tr_ref, b1u_ref, b1r_ref,
               w2u_ref, w2r_ref, b2_ref, w3_ref, b3_ref, wh_ref, bh_ref,
               out_ref):
    f32, bf16 = jnp.float32, jnp.bfloat16
    tb = iu_ref.shape[0]
    nu = tu_ref.shape[0]
    nr = tr_ref.shape[0]

    # fused embedding gather: one_hot(idx) @ (table @ W1) == table[idx] @ W1   (exact)
    oh_u = (iu_ref[...] == lax.broadcasted_iota(jnp.int32, (tb, nu), 1)).astype(bf16)
    oh_r = (ir_ref[...] == lax.broadcasted_iota(jnp.int32, (tb, nr), 1)).astype(bf16)

    # layer 1, both branches (bn1/bn2 + embedding table folded into tu/tr)
    h1u = jnp.maximum(
        jnp.dot(oh_u, tu_ref[...], preferred_element_type=f32) + b1u_ref[...], 0.0)
    h1r = jnp.maximum(
        jnp.dot(oh_r, tr_ref[...], preferred_element_type=f32) + b1r_ref[...], 0.0)

    # layer 2: w_uo2/w_ro2 pre-folded into w_ur1 (+bn3), split per branch -> no concat needed
    h2 = (jnp.dot(h1u.astype(bf16), w2u_ref[...], preferred_element_type=f32)
          + jnp.dot(h1r.astype(bf16), w2r_ref[...], preferred_element_type=f32)
          + b2_ref[...])
    h2 = jnp.maximum(h2, 0.0)                                          # (tb, D) f32

    # layer 3: relu(bn4(w_ur2(.)))  (bn4 folded)
    h3 = jnp.maximum(
        jnp.dot(h2.astype(bf16), w3_ref[...], preferred_element_type=f32) + b3_ref[...],
        0.0)                                                           # (tb, 16) f32

    # head: (8,16) x (tb,16)^T so scores are lane-dense; row 0 carries the result.
    s = lax.dot_general(wh_ref[...], h3.astype(bf16),
                        dimension_numbers=(((1,), (1,)), ((), ())),
                        preferred_element_type=f32)                    # (8, tb)
    out_ref[...] = (s[0:1, :] + bh_ref[...])[None]                     # (1, 1, tb)


# ----------------------------------------------------------------------------
# Wrapper: batch tiling, weight merging, table folding
# ----------------------------------------------------------------------------
def gnn_forward_pallas(nodes_u, nodes_r, user_table, item_table, params, *, tb=4096):
    """nodes_*: (B,) int ids.  *_table: (N, D) f32 embedding tables.  params: see _build_params."""
    B = int(nodes_u.shape[0])
    D = int(user_table.shape[1])
    kp = _merge_params(params, user_table, item_table, D)

    # --- tile size: as large as allowed (amortize ~0.35us/grid-step), multiple of 128
    #     (lane-dense scores), but keep the grid >= 2 steps so ("parallel",) can shard
    #     batch tiles across both v7x TensorCores (v5e/v6e are single-TC, no harm).
    tb = int(min(max(tb, 128), 8192))
    if B > 128:
        tb = min(tb, _round_up((B + 1) // 2, 128))
    tb = _round_up(tb, 128)
    g = (B + tb - 1) // tb

    iu = nodes_u.astype(jnp.int32).reshape(B, 1)
    ir = nodes_r.astype(jnp.int32).reshape(B, 1)

    cp_kwargs = dict(dimension_semantics=("parallel",))
    if tb > 2048:
        # v5e's default scoped VMEM (16 MiB) can be tight with very large tiles.
        cp_kwargs["vmem_limit_bytes"] = 48 * 1024 * 1024

    const = lambda i: (0, 0)   # weights/biases: same block every step -> fetched once, VMEM-resident
    out = pl.pallas_call(
        gnn_kernel,
        out_shape=jax.ShapeDtypeStruct((g, 1, tb), jnp.float32),
        grid=(g,),
        in_specs=[
            pl.BlockSpec((tb, 1), lambda i: (i, 0)),   # nodes_u ids (tiled over batch), int32
            pl.BlockSpec((tb, 1), lambda i: (i, 0)),   # nodes_r ids
            pl.BlockSpec(kp["tu"].shape, const),       # user_table @ W_uo1 (bn1 folded), bf16
            pl.BlockSpec(kp["tr"].shape, const),       # item_table @ W_ro1 (bn2 folded), bf16
            pl.BlockSpec((1, D), const),               # b1u, f32
            pl.BlockSpec((1, D), const),               # b1r, f32
            pl.BlockSpec((D, D), const),               # W2u = w_uo2 @ w_ur1[:D] (bn3 folded), bf16
            pl.BlockSpec((D, D), const),               # W2r = w_ro2 @ w_ur1[D:], bf16
            pl.BlockSpec((1, D), const),               # b2, f32
            pl.BlockSpec((D, 16), const),              # W3 = w_ur2 (bn4 folded), bf16
            pl.BlockSpec((1, 16), const),              # b3, f32
            pl.BlockSpec((8, 16), const),              # head weight (rows replicated), bf16
            pl.BlockSpec((1, 1), const),               # head bias, f32
        ],
        out_specs=pl.BlockSpec((1, 1, tb), lambda i: (i, 0, 0)),
        compiler_params=pltpu.CompilerParams(**cp_kwargs),
    )(iu, ir, kp["tu"], kp["tr"], kp["b1u"], kp["b1r"],
      kp["w2u"], kp["w2r"], kp["b2"], kp["w3"], kp["b3"], kp["wh"], kp["bh"])

    return out.reshape(g * tb)[:B]                      # scores.squeeze()


# ----------------------------------------------------------------------------
# Deterministic parameter construction, BN folding, branch/table merging (plain-JAX glue)
# ----------------------------------------------------------------------------
def _linear_init(key, fan_in, fan_out):
    # PyTorch nn.Linear default: U(-1/sqrt(fan_in), 1/sqrt(fan_in)); W stored (in, out)
    kw, kb = jax.random.split(key)
    bound = 1.0 / math.sqrt(fan_in)
    w = jax.random.uniform(kw, (fan_in, fan_out), jnp.float32, -bound, bound)
    b = jax.random.uniform(kb, (1, fan_out), jnp.float32, -bound, bound)
    return w, b


def _bn_init(key, dim, eps=1e-5):
    # eval-mode BatchNorm1d: y = (x - mean)/sqrt(var+eps)*gamma + beta  ->  y = x*scale + shift
    k1, k2, k3, k4 = jax.random.split(key, 4)
    gamma = jax.random.uniform(k1, (dim,), jnp.float32, 0.5, 1.5)
    beta = jax.random.uniform(k2, (dim,), jnp.float32, -0.1, 0.1)
    mean = jax.random.uniform(k3, (dim,), jnp.float32, -0.2, 0.2)
    var = jax.random.uniform(k4, (dim,), jnp.float32, 0.5, 1.5)
    scale = gamma / jnp.sqrt(var + eps)
    shift = beta - mean * scale
    return scale, shift


def _fold_bn(w, b, scale, shift):
    # bn(x @ W + b) == x @ (W * scale) + (b * scale + shift)
    return w * scale[None, :], b * scale[None, :] + shift[None, :]


def _build_params(key, D):
    keys = jax.random.split(key, 11)
    wuo1, buo1 = _linear_init(keys[0], D, D)
    wuo2, buo2 = _linear_init(keys[1], D, D)
    wro1, bro1 = _linear_init(keys[2], D, D)
    wro2, bro2 = _linear_init(keys[3], D, D)
    wur1, bur1 = _linear_init(keys[4], 2 * D, D)
    wur2, bur2 = _linear_init(keys[5], D, 16)
    wur3, bur3 = _linear_init(keys[6], 16, 1)
    bn1s, bn1t = _bn_init(keys[7], D)
    bn2s, bn2t = _bn_init(keys[8], D)
    bn3s, bn3t = _bn_init(keys[9], D)
    bn4s, bn4t = _bn_init(keys[10], 16)
    # fold eval-mode BN affine into the preceding Linear (exact)
    wuo1, buo1 = _fold_bn(wuo1, buo1, bn1s, bn1t)
    wro1, bro1 = _fold_bn(wro1, bro1, bn2s, bn2t)
    wur1, bur1 = _fold_bn(wur1, bur1, bn3s, bn3t)
    wur2, bur2 = _fold_bn(wur2, bur2, bn4s, bn4t)
    return dict(wuo1=wuo1, buo1=buo1, wuo2=wuo2, buo2=buo2,
                wro1=wro1, bro1=bro1, wro2=wro2, bro2=bro2,
                wur1=wur1, bur1=bur1, wur2=wur2, bur2=bur2,
                wur3=wur3, bur3=bur3)


def _merge_params(p, user_table, item_table, D):
    """Algebraic merge (exact in eval mode): tables folded into layer 1, branches into layer 2."""
    f32, bf16 = jnp.float32, jnp.bfloat16
    nu = _round_up(int(user_table.shape[0]), 128)   # pad tables to 128 rows for a clean
    nr = _round_up(int(item_table.shape[0]), 128)   # lane-dense one-hot contraction dim
    # TODO(synk): for tables too large to stay VMEM-resident, fall back to an XLA bf16 gather
    # feeding the kernel with (tb, D) activation blocks instead of node ids.
    tu = jnp.zeros((nu, D), f32).at[:user_table.shape[0]].set(user_table @ p["wuo1"])
    tr = jnp.zeros((nr, D), f32).at[:item_table.shape[0]].set(item_table @ p["wro1"])
    # layer 2: no nonlinearity between w_uo2/w_ro2 and w_ur1 -> pre-multiply, split per branch
    w1u, w1r = p["wur1"][:D, :], p["wur1"][D:, :]
    w2u = p["wuo2"] @ w1u
    w2r = p["wro2"] @ w1r
    b2 = p["buo2"] @ w1u + p["bro2"] @ w1r + p["bur1"]      # kept f32 (fold-then-cast concern)
    # layer 3 and head unchanged
    wh = jnp.tile(p["wur3"].T, (8, 1))                      # (8, 16), rows replicated
    return dict(tu=tu.astype(bf16), tr=tr.astype(bf16),
                b1u=p["buo1"], b1r=p["bro1"],
                w2u=w2u.astype(bf16), w2r=w2r.astype(bf16), b2=b2,
                w3=p["wur2"].astype(bf16), b3=p["bur2"],
                wh=wh.astype(bf16), bh=p["bur3"])


# ----------------------------------------------------------------------------
# Pure-JAX f32 reference with the ORIGINAL (unmerged) structure
# ----------------------------------------------------------------------------
def _reference(nodes_u, nodes_r, user_table, item_table, p):
    relu = lambda z: jnp.maximum(z, 0.0)
    eu = user_table[nodes_u]
    er = item_table[nodes_r]
    x_u = relu(eu @ p["wuo1"] + p["buo1"]) @ p["wuo2"] + p["buo2"]
    x_r = relu(er @ p["wro1"] + p["bro1"]) @ p["wro2"] + p["bro2"]
    h = relu(jnp.concatenate([x_u, x_r], axis=1) @ p["wur1"] + p["bur1"])
    h = relu(h @ p["wur2"] + p["bur2"])
    return (h @ p["wur3"] + p["bur3"]).reshape(-1)


if __name__ == "__main__":
    key = jax.random.PRNGKey(0)
    k_emb_u, k_emb_r, k_par, k_nu, k_nr = jax.random.split(key, 5)

    B = 1000          # batch of (user, rating-history) node pairs (exercises grid + ragged tile)
    D = 32            # enc_u.embed_dim
    NUM_USERS = 200
    NUM_ITEMS = 150

    # enc_u / enc_r_history modeled as deterministic embedding tables
    user_table = jax.random.normal(k_emb_u, (NUM_USERS, D), jnp.float32)
    item_table = jax.random.normal(k_emb_r, (NUM_ITEMS, D), jnp.float32)

    nodes_u = jax.random.randint(k_nu, (B,), 0, NUM_USERS)
    nodes_r = jax.random.randint(k_nr, (B,), 0, NUM_ITEMS)

    params = _build_params(k_par, D)

    scores = gnn_forward_pallas(nodes_u, nodes_r, user_table, item_table, params)
    scores = jax.block_until_ready(scores)

    ref = _reference(nodes_u, nodes_r, user_table, item_table, params)
    assert scores.shape == (B,)
    max_err = float(jnp.max(jnp.abs(scores - ref)))
    assert jnp.allclose(scores, ref, atol=5e-2, rtol=5e-2), (max_err, scores[:5], ref[:5])

    print("KERNEL_OK")
</pallas_src>

<mosaic_0001>
module attributes {stable_mosaic.version = 11 : i64} {
  func.func @gnn_kernel(%arg0: i32, %arg1: memref<512x1xi32, #tpu.memory_space<vmem>>, %arg2: memref<512x1xi32, #tpu.memory_space<vmem>>, %arg3: memref<256x32xbf16, #tpu.memory_space<vmem>>, %arg4: memref<256x32xbf16, #tpu.memory_space<vmem>>, %arg5: memref<1x32xf32, #tpu.memory_space<vmem>>, %arg6: memref<1x32xf32, #tpu.memory_space<vmem>>, %arg7: memref<32x32xbf16, #tpu.memory_space<vmem>>, %arg8: memref<32x32xbf16, #tpu.memory_space<vmem>>, %arg9: memref<1x32xf32, #tpu.memory_space<vmem>>, %arg10: memref<32x16xbf16, #tpu.memory_space<vmem>>, %arg11: memref<1x16xf32, #tpu.memory_space<vmem>>, %arg12: memref<8x16xbf16, #tpu.memory_space<vmem>>, %arg13: memref<1x1xf32, #tpu.memory_space<vmem>>, %arg14: memref<1x1x512xf32, #tpu.memory_space<vmem>>) attributes {dimension_semantics = [#tpu.dimension_semantics<parallel>], iteration_bounds = array<i64: 2>, scalar_prefetch = 0 : i64, scratch_operands = 0 : i64, tpu.core_type = #tpu.core_type<tc>, window_params = [{transform_indices = @transform_0, window_bounds = array<i64: 512, 1>}, {transform_indices = @transform_1, window_bounds = array<i64: 512, 1>}, {pipeline_mode = #tpu.pipeline_mode<synchronous>, transform_indices = @transform_2, window_bounds = array<i64: 256, 32>}, {pipeline_mode = #tpu.pipeline_mode<synchronous>, transform_indices = @transform_3, window_bounds = array<i64: 256, 32>}, {pipeline_mode = #tpu.pipeline_mode<synchronous>, transform_indices = @transform_4, window_bounds = array<i64: 1, 32>}, {pipeline_mode = #tpu.pipeline_mode<synchronous>, transform_indices = @transform_5, window_bounds = array<i64: 1, 32>}, {pipeline_mode = #tpu.pipeline_mode<synchronous>, transform_indices = @transform_6, window_bounds = array<i64: 32, 32>}, {pipeline_mode = #tpu.pipeline_mode<synchronous>, transform_indices = @transform_7, window_bounds = array<i64: 32, 32>}, {pipeline_mode = #tpu.pipeline_mode<synchronous>, transform_indices = @transform_8, window_bounds = array<i64: 1, 32>}, {pipeline_mode = #tpu.pipeline_mode<synchronous>, transform_indices = @transform_9, window_bounds = array<i64: 32, 16>}, {pipeline_mode = #tpu.pipeline_mode<synchronous>, transform_indices = @transform_10, window_bounds = array<i64: 1, 16>}, {pipeline_mode = #tpu.pipeline_mode<synchronous>, transform_indices = @transform_11, window_bounds = array<i64: 8, 16>}, {pipeline_mode = #tpu.pipeline_mode<synchronous>, transform_indices = @transform_12, window_bounds = array<i64: 1, 1>}, {transform_indices = @transform_13, window_bounds = array<i64: 1, 1, 512>}]} {
    %c0 = arith.constant 0 : index
    %c0_0 = arith.constant 0 : index
    %0 = vector.load %arg1[%c0, %c0_0] : memref<512x1xi32, #tpu.memory_space<vmem>>, vector<512x1xi32>
    %1 = tpu.iota {dimensions = array<i32: 1>} : vector<512x256xi32>
    %2 = vector.broadcast %0 : vector<512x1xi32> to vector<512x256xi32>
    %3 = arith.cmpi eq, %2, %1 : vector<512x256xi32>
    %4 = arith.extui %3 : vector<512x256xi1> to vector<512x256xi32>
    %5 = arith.sitofp %4 : vector<512x256xi32> to vector<512x256xf32>
    %6 = arith.truncf %5 : vector<512x256xf32> to vector<512x256xbf16>
    %c0_1 = arith.constant 0 : index
    %c0_2 = arith.constant 0 : index
    %7 = vector.load %arg2[%c0_1, %c0_2] : memref<512x1xi32, #tpu.memory_space<vmem>>, vector<512x1xi32>
    %8 = tpu.iota {dimensions = array<i32: 1>} : vector<512x256xi32>
    %9 = vector.broadcast %7 : vector<512x1xi32> to vector<512x256xi32>
    %10 = arith.cmpi eq, %9, %8 : vector<512x256xi32>
    %11 = arith.extui %10 : vector<512x256xi1> to vector<512x256xi32>
    %12 = arith.sitofp %11 : vector<512x256xi32> to vector<512x256xf32>
    %13 = arith.truncf %12 : vector<512x256xf32> to vector<512x256xbf16>
    %c0_3 = arith.constant 0 : index
    %c0_4 = arith.constant 0 : index
    %14 = vector.load %arg3[%c0_3, %c0_4] : memref<256x32xbf16, #tpu.memory_space<vmem>>, vector<256x32xbf16>
    %cst = arith.constant dense<0.000000e+00> : vector<512x32xf32>
    %15 = tpu.matmul %6, %14, %cst {dimension_numbers = #tpu.dot_dimension_numbers<[1], [0], [0], [1], [0, 0, 1, 1], [], []>} : vector<512x256xbf16>, vector<256x32xbf16>, vector<512x32xf32> -> vector<512x32xf32>
    %c0_5 = arith.constant 0 : index
    %c0_6 = arith.constant 0 : index
    %16 = vector.load %arg5[%c0_5, %c0_6] : memref<1x32xf32, #tpu.memory_space<vmem>>, vector<1x32xf32>
    %17 = vector.broadcast %16 : vector<1x32xf32> to vector<512x32xf32>
    %18 = arith.addf %15, %17 : vector<512x32xf32>
    %cst_7 = arith.constant 0.000000e+00 : f32
    %19 = vector.broadcast %cst_7 : f32 to vector<512x32xf32>
    %20 = arith.maximumf %18, %19 : vector<512x32xf32>
    %c0_8 = arith.constant 0 : index
    %c0_9 = arith.constant 0 : index
    %21 = vector.load %arg4[%c0_8, %c0_9] : memref<256x32xbf16, #tpu.memory_space<vmem>>, vector<256x32xbf16>
    %cst_10 = arith.constant dense<0.000000e+00> : vector<512x32xf32>
    %22 = tpu.matmul %13, %21, %cst_10 {dimension_numbers = #tpu.dot_dimension_numbers<[1], [0], [0], [1], [0, 0, 1, 1], [], []>} : vector<512x256xbf16>, vector<256x32xbf16>, vector<512x32xf32> -> vector<512x32xf32>
    %c0_11 = arith.constant 0 : index
    %c0_12 = arith.constant 0 : index
    %23 = vector.load %arg6[%c0_11, %c0_12] : memref<1x32xf32, #tpu.memory_space<vmem>>, vector<1x32xf32>
    %24 = vector.broadcast %23 : vector<1x32xf32> to vector<512x32xf32>
    %25 = arith.addf %22, %24 : vector<512x32xf32>
    %cst_13 = arith.constant 0.000000e+00 : f32
    %26 = vector.broadcast %cst_13 : f32 to vector<512x32xf32>
    %27 = arith.maximumf %25, %26 : vector<512x32xf32>
    %28 = arith.truncf %20 : vector<512x32xf32> to vector<512x32xbf16>
    %c0_14 = arith.constant 0 : index
    %c0_15 = arith.constant 0 : index
    %29 = vector.load %arg7[%c0_14, %c0_15] : memref<32x32xbf16, #tpu.memory_space<vmem>>, vector<32x32xbf16>
    %cst_16 = arith.constant dense<0.000000e+00> : vector<512x32xf32>
    %30 = tpu.matmul %28, %29, %cst_16 {dimension_numbers = #tpu.dot_dimension_numbers<[1], [0], [0], [1], [0, 0, 1, 1], [], []>} : vector<512x32xbf16>, vector<32x32xbf16>, vector<512x32xf32> -> vector<512x32xf32>
    %31 = arith.truncf %27 : vector<512x32xf32> to vector<512x32xbf16>
    %c0_17 = arith.constant 0 : index
    %c0_18 = arith.constant 0 : index
    %32 = vector.load %arg8[%c0_17, %c0_18] : memref<32x32xbf16, #tpu.memory_space<vmem>>, vector<32x32xbf16>
    %cst_19 = arith.constant dense<0.000000e+00> : vector<512x32xf32>
    %33 = tpu.matmul %31, %32, %cst_19 {dimension_numbers = #tpu.dot_dimension_numbers<[1], [0], [0], [1], [0, 0, 1, 1], [], []>} : vector<512x32xbf16>, vector<32x32xbf16>, vector<512x32xf32> -> vector<512x32xf32>
    %34 = arith.addf %30, %33 : vector<512x32xf32>
    %c0_20 = arith.constant 0 : index
    %c0_21 = arith.constant 0 : index
    %35 = vector.load %arg9[%c0_20, %c0_21] : memref<1x32xf32, #tpu.memory_space<vmem>>, vector<1x32xf32>
    %36 = vector.broadcast %35 : vector<1x32xf32> to vector<512x32xf32>
    %37 = arith.addf %34, %36 : vector<512x32xf32>
    %cst_22 = arith.constant 0.000000e+00 : f32
    %38 = vector.broadcast %cst_22 : f32 to vector<512x32xf32>
    %39 = arith.maximumf %37, %38 : vector<512x32xf32>
    %40 = arith.truncf %39 : vector<512x32xf32> to vector<512x32xbf16>
    %c0_23 = arith.constant 0 : index
    %c0_24 = arith.constant 0 : index
    %41 = vector.load %arg10[%c0_23, %c0_24] : memref<32x16xbf16, #tpu.memory_space<vmem>>, vector<32x16xbf16>
    %cst_25 = arith.constant dense<0.000000e+00> : vector<512x16xf32>
    %42 = tpu.matmul %40, %41, %cst_25 {dimension_numbers = #tpu.dot_dimension_numbers<[1], [0], [0], [1], [0, 0, 1, 1], [], []>} : vector<512x32xbf16>, vector<32x16xbf16>, vector<512x16xf32> -> vector<512x16xf32>
    %c0_26 = arith.constant 0 : index
    %c0_27 = arith.constant 0 : index
    %43 = vector.load %arg11[%c0_26, %c0_27] : memref<1x16xf32, #tpu.memory_space<vmem>>, vector<1x16xf32>
    %44 = vector.broadcast %43 : vector<1x16xf32> to vector<512x16xf32>
    %45 = arith.addf %42, %44 : vector<512x16xf32>
    %cst_28 = arith.constant 0.000000e+00 : f32
    %46 = vector.broadcast %cst_28 : f32 to vector<512x16xf32>
    %47 = arith.maximumf %45, %46 : vector<512x16xf32>
    %c0_29 = arith.constant 0 : index
    %c0_30 = arith.constant 0 : index
    %48 = vector.load %arg12[%c0_29, %c0_30] : memref<8x16xbf16, #tpu.memory_space<vmem>>, vector<8x16xbf16>
    %49 = arith.truncf %47 : vector<512x16xf32> to vector<512x16xbf16>
    %cst_31 = arith.constant dense<0.000000e+00> : vector<8x512xf32>
    %50 = tpu.matmul %48, %49, %cst_31 {dimension_numbers = #tpu.dot_dimension_numbers<[1], [1], [0], [0], [0, 0, 1, 0], [], []>} : vector<8x16xbf16>, vector<512x16xbf16>, vector<8x512xf32> -> vector<8x512xf32>
    %51 = vector.extract_strided_slice %50 {offsets = [0, 0], sizes = [1, 512], strides = [1, 1]} : vector<8x512xf32> to vector<1x512xf32>
    %c0_32 = arith.constant 0 : index
    %c0_33 = arith.constant 0 : index
    %52 = vector.load %arg13[%c0_32, %c0_33] : memref<1x1xf32, #tpu.memory_space<vmem>>, vector<1x1xf32>
    %53 = vector.broadcast %52 : vector<1x1xf32> to vector<1x512xf32>
    %54 = arith.addf %51, %53 : vector<1x512xf32>
    %55 = vector.shape_cast %54 : vector<1x512xf32> to vector<1x1x512xf32>
    %c0_34 = arith.constant 0 : index
    %c0_35 = arith.constant 0 : index
    %c0_36 = arith.constant 0 : index
    %56 = vector.load %arg14[%c0_34, %c0_35, %c0_36] : memref<1x1x512xf32, #tpu.memory_space<vmem>>, vector<1x1x512xf32>
    tpu.vector_store %arg14[%c0_34, %c0_35, %c0_36], %55 {strides = array<i32>} : memref<1x1x512xf32, #tpu.memory_space<vmem>>, vector<1x1x512xf32>,
    return
  }
  func.func @transform_0(%arg0: i32) -> (i32, i32) {
    %c0_i32 = arith.constant 0 : i32
    %c0_i32_0 = arith.constant 0 : i32
    return %arg0, %c0_i32 : i32, i32
  }
  func.func @transform_1(%arg0: i32) -> (i32, i32) {
    %c0_i32 = arith.constant 0 : i32
    %c0_i32_0 = arith.constant 0 : i32
    return %arg0, %c0_i32 : i32, i32
  }
  func.func @transform_2(%arg0: i32) -> (i32, i32) {
    %c0_i32 = arith.constant 0 : i32
    %c0_i32_0 = arith.constant 0 : i32
    %c0_i32_1 = arith.constant 0 : i32
    return %c0_i32, %c0_i32_0 : i32, i32
  }
  func.func @transform_3(%arg0: i32) -> (i32, i32) {
    %c0_i32 = arith.constant 0 : i32
    %c0_i32_0 = arith.constant 0 : i32
    %c0_i32_1 = arith.constant 0 : i32
    return %c0_i32, %c0_i32_0 : i32, i32
  }
  func.func @transform_4(%arg0: i32) -> (i32, i32) {
    %c0_i32 = arith.constant 0 : i32
    %c0_i32_0 = arith.constant 0 : i32
    %c0_i32_1 = arith.constant 0 : i32
    return %c0_i32, %c0_i32_0 : i32, i32
  }
  func.func @transform_5(%arg0: i32) -> (i32, i32) {
    %c0_i32 = arith.constant 0 : i32
    %c0_i32_0 = arith.constant 0 : i32
    %c0_i32_1 = arith.constant 0 : i32
    return %c0_i32, %c0_i32_0 : i32, i32
  }
  func.func @transform_6(%arg0: i32) -> (i32, i32) {
    %c0_i32 = arith.constant 0 : i32
    %c0_i32_0 = arith.constant 0 : i32
    %c0_i32_1 = arith.constant 0 : i32
    return %c0_i32, %c0_i32_0 : i32, i32
  }
  func.func @transform_7(%arg0: i32) -> (i32, i32) {
    %c0_i32 = arith.constant 0 : i32
    %c0_i32_0 = arith.constant 0 : i32
    %c0_i32_1 = arith.constant 0 : i32
    return %c0_i32, %c0_i32_0 : i32, i32
  }
  func.func @transform_8(%arg0: i32) -> (i32, i32) {
    %c0_i32 = arith.constant 0 : i32
    %c0_i32_0 = arith.constant 0 : i32
    %c0_i32_1 = arith.constant 0 : i32
    return %c0_i32, %c0_i32_0 : i32, i32
  }
  func.func @transform_9(%arg0: i32) -> (i32, i32) {
    %c0_i32 = arith.constant 0 : i32
    %c0_i32_0 = arith.constant 0 : i32
    %c0_i32_1 = arith.constant 0 : i32
    return %c0_i32, %c0_i32_0 : i32, i32
  }
  func.func @transform_10(%arg0: i32) -> (i32, i32) {
    %c0_i32 = arith.constant 0 : i32
    %c0_i32_0 = arith.constant 0 : i32
    %c0_i32_1 = arith.constant 0 : i32
    return %c0_i32, %c0_i32_0 : i32, i32
  }
  func.func @transform_11(%arg0: i32) -> (i32, i32) {
    %c0_i32 = arith.constant 0 : i32
    %c0_i32_0 = arith.constant 0 : i32
    %c0_i32_1 = arith.constant 0 : i32
    return %c0_i32, %c0_i32_0 : i32, i32
  }
  func.func @transform_12(%arg0: i32) -> (i32, i32) {
    %c0_i32 = arith.constant 0 : i32
    %c0_i32_0 = arith.constant 0 : i32
    %c0_i32_1 = arith.constant 0 : i32
    return %c0_i32, %c0_i32_0 : i32, i32
  }
  func.func @transform_13(%arg0: i32) -> (i32, i32, i32) {
    %c0_i32 = arith.constant 0 : i32
    %c0_i32_0 = arith.constant 0 : i32
    %c0_i32_1 = arith.constant 0 : i32
    return %arg0, %c0_i32, %c0_i32_0 : i32, i32, i32
  }
}

</mosaic_0001>

<llo_original>
// kernel: tpu_custom_call.1
$region0: #{tpu_custom_call.1}
  #allocation0 [shape = 'u32[]', space=smem, size = 0x4, offset = 0x4, fixed_abs, tag = 'smem constant byte address 0x4 - core index']
  #allocation1 [shape = 'u32[144,128]{1,0:T(1,128)}', space=vmem, size = 0x12000, scoped, tag = 'internal scratch']
  #allocation2 [shape = 'f32[1,1]{1,0:T(1,128)S(1)}', space=vmem, size = 0x200, scoped, tag = 'scoped memory for tpu_custom_call.1']
  %s0 = inlined_call_operand.vmem [shape: s32[1000,1], index: 0, kind: input, shape index: {}]
  %s1 = inlined_call_operand.vmem [shape: s32[1000,1], index: 1, kind: input, shape index: {}]
  %s2 = inlined_call_operand.vmem [shape: bf16[256,32], index: 2, kind: input, shape index: {}]
  %s3 = inlined_call_operand.vmem [shape: bf16[256,32], index: 3, kind: input, shape index: {}]
  %s4 = inlined_call_operand.vmem [shape: f32[1,32], index: 4, kind: input, shape index: {}]
  %s5 = inlined_call_operand.vmem [shape: f32[1,32], index: 5, kind: input, shape index: {}]
  %s6 = inlined_call_operand.vmem [shape: bf16[32,32], index: 6, kind: input, shape index: {}]
  %s7 = inlined_call_operand.vmem [shape: bf16[32,32], index: 7, kind: input, shape index: {}]
  %s8 = inlined_call_operand.vmem [shape: f32[1,32], index: 8, kind: input, shape index: {}]
  %s9 = inlined_call_operand.vmem [shape: bf16[32,16], index: 9, kind: input, shape index: {}]
  %s10 = inlined_call_operand.vmem [shape: f32[1,16], index: 10, kind: input, shape index: {}]
  %s11 = inlined_call_operand.vmem [shape: bf16[8,16], index: 11, kind: input, shape index: {}]
  %s12 = inlined_call_operand.<no memory space> [shape: f32[1,1], index: 12, kind: input, shape index: {}]
  %s13 = inlined_call_operand.hbm [shape: f32[2,1,512], index: 13, kind: output, shape index: {}]
  %s14 = sld [smem:[#allocation0]]
  $region85: #{tpu_custom_call.1} parent=0
    _
  %s16 = ssub.s32 1, %s14
  %s17 = scalar_select 0, %s16, %s14
  %v18 = vstv %s12
  %19 = vst [vmem:[#allocation2] sm:$0x1] %v18
  $region1: #{tpu_custom_call.1} parent=0
    #allocation3 [shape = 'u8[4096]{0}', space=vmem, size = 0x1000, scoped, tag = 'output window, operand 0']
    #allocation4 [shape = 's32[2]{0}', space=sflag, size = 0x8, scoped, tag = 'scoped memory for tpu_custom_call.1']
    %20 = vsyncpa [#allocation4], 0
    %s21 = scalar_lea.sflag [#allocation4], 1
    %22 = vsyncpa %s21, 0
    loop: start=0, step=1, limit=4
    $region2: #{tpu_custom_call.1} parent=1 // loop_pre_header
      _
    $region3: #{tpu_custom_call.1} parent=1 // loop_header
      %s24 = sphi 0, %s28
      %p25 = scmp.ge.s32.totalorder %s24, 4
      %s34 = sphi 0, %s36
      %s37 = sphi 0, %s34
      %s38 = sphi 0, %s37
      %s54 = sphi 0, %s38
      %s60 = sphi 0, %s62
      %s63 = sphi 0, %s60
      %s64 = sphi 0, %s63
      %s80 = sphi 0, %s64
      %s84 = sphi 0, %s84
      %s86 = sphi 0, %s84
      %s87 = sphi 0, %s86
      %s101 = sphi 0, %s87
      %s105 = sphi 0, %s105
      %s107 = sphi 0, %s105
      %s108 = sphi 0, %s107
      %s122 = sphi 0, %s108
      %s126 = sphi 0, %s126
      %s128 = sphi 0, %s126
      %s129 = sphi 0, %s128
      %s143 = sphi 0, %s129
      %s147 = sphi 0, %s147
      %s149 = sphi 0, %s147
      %s150 = sphi 0, %s149
      %s164 = sphi 0, %s150
      %s168 = sphi 0, %s168
      %s170 = sphi 0, %s168
      %s171 = sphi 0, %s170
      %s185 = sphi 0, %s171
      %s189 = sphi 0, %s189
      %s191 = sphi 0, %s189
      %s192 = sphi 0, %s191
      %s206 = sphi 0, %s192
      %s210 = sphi 0, %s210
      %s212 = sphi 0, %s210
      %s213 = sphi 0, %s212
      %s227 = sphi 0, %s213
      %s231 = sphi 0, %s231
      %s233 = sphi 0, %s231
      %s234 = sphi 0, %s233
      %s248 = sphi 0, %s234
      %s252 = sphi 0, %s252
      %s254 = sphi 0, %s252
      %s255 = sphi 0, %s254
      %s269 = sphi 0, %s255
      %s273 = sphi 0, %s273
      %s275 = sphi 0, %s273
      %s276 = sphi 0, %s275
      %s290 = sphi 0, %s276
      %s294 = sphi 0, %s294
      %s296 = sphi 0, %s294
      %s297 = sphi 0, %s296
      %s311 = sphi 0, %s297
      %s317 = sphi 0, %s319
      %s320 = sphi 0, %s317
      %s321 = sphi 0, %s320
      %s337 = sphi 0, %s321
    $region4: #{tpu_custom_call.1} parent=1 // loop_header_branch
      %27 = sbr.rel (%p25) target = $region8
    $region5: #{tpu_custom_call.1} parent=1 // loop_body
      %s29 = ssub.s32 %s24, 1
      %s30 = ssub.s32 %s24, 2
      %s31 = sadd.s32 %s24, 1
      %s32 = ssub.s32 %s24, %s31
      %p33 = scmp.eq.s32.totalorder %s32, 0
      %s35 = sadd.s32 %s34, 1
      %s36 = scalar_select %p33, %s34, %s35
      %p39 = pneg %p33
      %p40 = scmp.eq.s32.totalorder %s24, 1
      %p41 = por %p39, %p40
      %p42 = scmp.ne.s32.totalorder %s34, %s37
      %p43 = scmp.eq.s32.totalorder %s24, 0
      %p44 = por %p42, %p43
      %p45 = scmp.ne.s32.totalorder %s34, %s37
      %p46 = scmp.eq.s32.totalorder %s29, 1
      %p47 = por %p45, %p46
      %p48 = scmp.ne.s32.totalorder %s37, %s38
      %p49 = scmp.eq.s32.totalorder %s29, 0
      %p50 = por %p48, %p49
      %p51 = scmp.ne.s32.totalorder %s37, %s38
      %p52 = scmp.eq.s32.totalorder %s30, 1
      %p53 = por %p51, %p52
      %p55 = scmp.ne.s32.totalorder %s38, %s54
      %p56 = scmp.eq.s32.totalorder %s30, 0
      %p57 = por %p55, %p56
      %s58 = ssub.s32 %s24, %s31
      %p59 = scmp.eq.s32.totalorder %s58, 0
      %s61 = sadd.s32 %s60, 1
      %s62 = scalar_select %p59, %s60, %s61
      %p65 = pneg %p59
      %p66 = scmp.eq.s32.totalorder %s24, 1
      %p67 = por %p65, %p66
      %p68 = scmp.ne.s32.totalorder %s60, %s63
      %p69 = scmp.eq.s32.totalorder %s24, 0
      %p70 = por %p68, %p69
      %p71 = scmp.ne.s32.totalorder %s60, %s63
      %p72 = scmp.eq.s32.totalorder %s29, 1
      %p73 = por %p71, %p72
      %p74 = scmp.ne.s32.totalorder %s63, %s64
      %p75 = scmp.eq.s32.totalorder %s29, 0
      %p76 = por %p74, %p75
      %p77 = scmp.ne.s32.totalorder %s63, %s64
      %p78 = scmp.eq.s32.totalorder %s30, 1
      %p79 = por %p77, %p78
      %p81 = scmp.ne.s32.totalorder %s64, %s80
      %p82 = scmp.eq.s32.totalorder %s30, 0
      %p83 = por %p81, %p82
      %s85 = sadd.s32 %s84, 1
      %p88 = scmp.eq.s32.totalorder %s24, 1
      %p89 = scmp.ne.s32.totalorder %s84, %s86
      %p90 = scmp.eq.s32.totalorder %s24, 0
      %p91 = por %p89, %p90
      %p92 = scmp.ne.s32.totalorder %s84, %s86
      %p93 = scmp.eq.s32.totalorder %s29, 1
      %p94 = por %p92, %p93
      %p95 = scmp.ne.s32.totalorder %s86, %s87
      %p96 = scmp.eq.s32.totalorder %s29, 0
      %p97 = por %p95, %p96
      %p98 = scmp.ne.s32.totalorder %s86, %s87
      %p99 = scmp.eq.s32.totalorder %s30, 1
      %p100 = por %p98, %p99
      %p102 = scmp.ne.s32.totalorder %s87, %s101
      %p103 = scmp.eq.s32.totalorder %s30, 0
      %p104 = por %p102, %p103
      %s106 = sadd.s32 %s105, 1
      %p109 = scmp.eq.s32.totalorder %s24, 1
      %p110 = scmp.ne.s32.totalorder %s105, %s107
      %p111 = scmp.eq.s32.totalorder %s24, 0
      %p112 = por %p110, %p111
      %p113 = scmp.ne.s32.totalorder %s105, %s107
      %p114 = scmp.eq.s32.totalorder %s29, 1
      %p115 = por %p113, %p114
      %p116 = scmp.ne.s32.totalorder %s107, %s108
      %p117 = scmp.eq.s32.totalorder %s29, 0
      %p118 = por %p116, %p117
      %p119 = scmp.ne.s32.totalorder %s107, %s108
      %p120 = scmp.eq.s32.totalorder %s30, 1
      %p121 = por %p119, %p120
      %p123 = scmp.ne.s32.totalorder %s108, %s122
      %p124 = scmp.eq.s32.totalorder %s30, 0
      %p125 = por %p123, %p124
      %s127 = sadd.s32 %s126, 1
      %p130 = scmp.eq.s32.totalorder %s24, 1
      %p131 = scmp.ne.s32.totalorder %s126, %s128
      %p132 = scmp.eq.s32.totalorder %s24, 0
      %p133 = por %p131, %p132
      %p134 = scmp.ne.s32.totalorder %s126, %s128
      %p135 = scmp.eq.s32.totalorder %s29, 1
      %p136 = por %p134, %p135
      %p137 = scmp.ne.s32.totalorder %s128, %s129
      %p138 = scmp.eq.s32.totalorder %s29, 0
      %p139 = por %p137, %p138
      %p140 = scmp.ne.s32.totalorder %s128, %s129
      %p141 = scmp.eq.s32.totalorder %s30, 1
      %p142 = por %p140, %p141
      %p144 = scmp.ne.s32.totalorder %s129, %s143
      %p145 = scmp.eq.s32.totalorder %s30, 0
      %p146 = por %p144, %p145
      %s148 = sadd.s32 %s147, 1
      %p151 = scmp.eq.s32.totalorder %s24, 1
      %p152 = scmp.ne.s32.totalorder %s147, %s149
      %p153 = scmp.eq.s32.totalorder %s24, 0
      %p154 = por %p152, %p153
      %p155 = scmp.ne.s32.totalorder %s147, %s149
      %p156 = scmp.eq.s32.totalorder %s29, 1
      %p157 = por %p155, %p156
      %p158 = scmp.ne.s32.totalorder %s149, %s150
      %p159 = scmp.eq.s32.totalorder %s29, 0
      %p160 = por %p158, %p159
      %p161 = scmp.ne.s32.totalorder %s149, %s150
      %p162 = scmp.eq.s32.totalorder %s30, 1
      %p163 = por %p161, %p162
      %p165 = scmp.ne.s32.totalorder %s150, %s164
      %p166 = scmp.eq.s32.totalorder %s30, 0
      %p167 = por %p165, %p166
      %s169 = sadd.s32 %s168, 1
      %p172 = scmp.eq.s32.totalorder %s24, 1
      %p173 = scmp.ne.s32.totalorder %s168, %s170
      %p174 = scmp.eq.s32.totalorder %s24, 0
      %p175 = por %p173, %p174
      %p176 = scmp.ne.s32.totalorder %s168, %s170
      %p177 = scmp.eq.s32.totalorder %s29, 1
      %p178 = por %p176, %p177
      %p179 = scmp.ne.s32.totalorder %s170, %s171
      %p180 = scmp.eq.s32.totalorder %s29, 0
      %p181 = por %p179, %p180
      %p182 = scmp.ne.s32.totalorder %s170, %s171
      %p183 = scmp.eq.s32.totalorder %s30, 1
      %p184 = por %p182, %p183
      %p186 = scmp.ne.s32.totalorder %s171, %s185
      %p187 = scmp.eq.s32.totalorder %s30, 0
      %p188 = por %p186, %p187
      %s190 = sadd.s32 %s189, 1
      %p193 = scmp.eq.s32.totalorder %s24, 1
      %p194 = scmp.ne.s32.totalorder %s189, %s191
      %p195 = scmp.eq.s32.totalorder %s24, 0
      %p196 = por %p194, %p195
      %p197 = scmp.ne.s32.totalorder %s189, %s191
      %p198 = scmp.eq.s32.totalorder %s29, 1
      %p199 = por %p197, %p198
      %p200 = scmp.ne.s32.totalorder %s191, %s192
      %p201 = scmp.eq.s32.totalorder %s29, 0
      %p202 = por %p200, %p201
      %p203 = scmp.ne.s32.totalorder %s191, %s192
      %p204 = scmp.eq.s32.totalorder %s30, 1
      %p205 = por %p203, %p204
      %p207 = scmp.ne.s32.totalorder %s192, %s206
      %p208 = scmp.eq.s32.totalorder %s30, 0
      %p209 = por %p207, %p208
      %s211 = sadd.s32 %s210, 1
      %p214 = scmp.eq.s32.totalorder %s24, 1
      %p215 = scmp.ne.s32.totalorder %s210, %s212
      %p216 = scmp.eq.s32.totalorder %s24, 0
      %p217 = por %p215, %p216
      %p218 = scmp.ne.s32.totalorder %s210, %s212
      %p219 = scmp.eq.s32.totalorder %s29, 1
      %p220 = por %p218, %p219
      %p221 = scmp.ne.s32.totalorder %s212, %s213
      %p222 = scmp.eq.s32.totalorder %s29, 0
      %p223 = por %p221, %p222
      %p224 = scmp.ne.s32.totalorder %s212, %s213
      %p225 = scmp.eq.s32.totalorder %s30, 1
      %p226 = por %p224, %p225
      %p228 = scmp.ne.s32.totalorder %s213, %s227
      %p229 = scmp.eq.s32.totalorder %s30, 0
      %p230 = por %p228, %p229
      %s232 = sadd.s32 %s231, 1
      %p235 = scmp.eq.s32.totalorder %s24, 1
      %p236 = scmp.ne.s32.totalorder %s231, %s233
      %p237 = scmp.eq.s32.totalorder %s24, 0
      %p238 = por %p236, %p237
      %p239 = scmp.ne.s32.totalorder %s231, %s233
      %p240 = scmp.eq.s32.totalorder %s29, 1
      %p241 = por %p239, %p240
      %p242 = scmp.ne.s32.totalorder %s233, %s234
      %p243 = scmp.eq.s32.totalorder %s29, 0
      %p244 = por %p242, %p243
      %p245 = scmp.ne.s32.totalorder %s233, %s234
      %p246 = scmp.eq.s32.totalorder %s30, 1
      %p247 = por %p245, %p246
      %p249 = scmp.ne.s32.totalorder %s234, %s248
      %p250 = scmp.eq.s32.totalorder %s30, 0
      %p251 = por %p249, %p250
      %s253 = sadd.s32 %s252, 1
      %p256 = scmp.eq.s32.totalorder %s24, 1
      %p257 = scmp.ne.s32.totalorder %s252, %s254
      %p258 = scmp.eq.s32.totalorder %s24, 0
      %p259 = por %p257, %p258
      %p260 = scmp.ne.s32.totalorder %s252, %s254
      %p261 = scmp.eq.s32.totalorder %s29, 1
      %p262 = por %p260, %p261
      %p263 = scmp.ne.s32.totalorder %s254, %s255
      %p264 = scmp.eq.s32.totalorder %s29, 0
      %p265 = por %p263, %p264
      %p266 = scmp.ne.s32.totalorder %s254, %s255
      %p267 = scmp.eq.s32.totalorder %s30, 1
      %p268 = por %p266, %p267
      %p270 = scmp.ne.s32.totalorder %s255, %s269
      %p271 = scmp.eq.s32.totalorder %s30, 0
      %p272 = por %p270, %p271
      %s274 = sadd.s32 %s273, 1
      %p277 = scmp.eq.s32.totalorder %s24, 1
      %p278 = scmp.ne.s32.totalorder %s273, %s275
      %p279 = scmp.eq.s32.totalorder %s24, 0
      %p280 = por %p278, %p279
      %p281 = scmp.ne.s32.totalorder %s273, %s275
      %p282 = scmp.eq.s32.totalorder %s29, 1
      %p283 = por %p281, %p282
      %p284 = scmp.ne.s32.totalorder %s275, %s276
      %p285 = scmp.eq.s32.totalorder %s29, 0
      %p286 = por %p284, %p285
      %p287 = scmp.ne.s32.totalorder %s275, %s276
      %p288 = scmp.eq.s32.totalorder %s30, 1
      %p289 = por %p287, %p288
      %p291 = scmp.ne.s32.totalorder %s276, %s290
      %p292 = scmp.eq.s32.totalorder %s30, 0
      %p293 = por %p291, %p292
      %s295 = sadd.s32 %s294, 1
      %p298 = scmp.eq.s32.totalorder %s24, 1
      %p299 = scmp.ne.s32.totalorder %s294, %s296
      %p300 = scmp.eq.s32.totalorder %s24, 0
      %p301 = por %p299, %p300
      %p302 = scmp.ne.s32.totalorder %s294, %s296
      %p303 = scmp.eq.s32.totalorder %s29, 1
      %p304 = por %p302, %p303
      %p305 = scmp.ne.s32.totalorder %s296, %s297
      %p306 = scmp.eq.s32.totalorder %s29, 0
      %p307 = por %p305, %p306
      %p308 = scmp.ne.s32.totalorder %s296, %s297
      %p309 = scmp.eq.s32.totalorder %s30, 1
      %p310 = por %p308, %p309
      %p312 = scmp.ne.s32.totalorder %s297, %s311
      %p313 = scmp.eq.s32.totalorder %s30, 0
      %p314 = por %p312, %p313
      %s315 = ssub.s32 %s24, %s31
      %p316 = scmp.eq.s32.totalorder %s315, 0
      %s318 = sadd.s32 %s317, 1
      %s319 = scalar_select %p316, %s317, %s318
      %p322 = pneg %p316
      %p323 = scmp.eq.s32.totalorder %s24, 1
      %p324 = por %p322, %p323
      %p325 = scmp.ne.s32.totalorder %s317, %s320
      %p326 = scmp.eq.s32.totalorder %s24, 0
      %p327 = por %p325, %p326
      %p328 = scmp.ne.s32.totalorder %s317, %s320
      %p329 = scmp.eq.s32.totalorder %s29, 1
      %p330 = por %p328, %p329
      %p331 = scmp.ne.s32.totalorder %s320, %s321
      %p332 = scmp.eq.s32.totalorder %s29, 0
      %p333 = por %p331, %p332
      %p334 = scmp.ne.s32.totalorder %s320, %s321
      %p335 = scmp.eq.s32.totalorder %s30, 1
      %p336 = por %p334, %p335
      %p338 = scmp.ne.s32.totalorder %s321, %s337
      %p339 = scmp.eq.s32.totalorder %s30, 0
      %p340 = por %p338, %p339
      %p341 = scmp.le.s32.totalorder 1, %s24
      %p342 = scmp.lt.s32.totalorder %s24, 3
      %p343 = pnand %p341, %p342
      %p344 = pneg %p343
      // Predicated region
      $region9: #{tpu_custom_call.1} parent=5 // pred_check
        _
      $region10: #{tpu_custom_call.1} parent=5 // pred_check_branch
        %346 = sbr.rel (%p343) target = $region12
      $region11: #{tpu_custom_call.1} parent=5 // pred_region
        %s347 = ssub.s32 %s24, 1
        // Predicated region
        $region13: #{tpu_custom_call.1} parent=11 // pred_check
          %p348 = pneg %p97
        $region14: #{tpu_custom_call.1} parent=11 // pred_check_branch
          %350 = sbr.rel (%p348) target = $region16
        $region15: #{tpu_custom_call.1} parent=11 // pred_region
          _
        $region16: #{tpu_custom_call.1} parent=11 // pred_fallthru
          _
        // Predicated region
        $region17: #{tpu_custom_call.1} parent=11 // pred_check
          %p351 = pneg %p118
        $region18: #{tpu_custom_call.1} parent=11 // pred_check_branch
          %353 = sbr.rel (%p351) target = $region20
        $region19: #{tpu_custom_call.1} parent=11 // pred_region
          _
        $region20: #{tpu_custom_call.1} parent=11 // pred_fallthru
          _
        // Predicated region
        $region21: #{tpu_custom_call.1} parent=11 // pred_check
          %p354 = pneg %p139
        $region22: #{tpu_custom_call.1} parent=11 // pred_check_branch
          %356 = sbr.rel (%p354) target = $region24
        $region23: #{tpu_custom_call.1} parent=11 // pred_region
          _
        $region24: #{tpu_custom_call.1} parent=11 // pred_fallthru
          _
        // Predicated region
        $region25: #{tpu_custom_call.1} parent=11 // pred_check
          %p357 = pneg %p160
        $region26: #{tpu_custom_call.1} parent=11 // pred_check_branch
          %359 = sbr.rel (%p357) target = $region28
        $region27: #{tpu_custom_call.1} parent=11 // pred_region
          _
        $region28: #{tpu_custom_call.1} parent=11 // pred_fallthru
          _
        // Predicated region
        $region29: #{tpu_custom_call.1} parent=11 // pred_check
          %p360 = pneg %p181
        $region30: #{tpu_custom_call.1} parent=11 // pred_check_branch
          %362 = sbr.rel (%p360) target = $region32
        $region31: #{tpu_custom_call.1} parent=11 // pred_region
          _
        $region32: #{tpu_custom_call.1} parent=11 // pred_fallthru
          _
        // Predicated region
        $region33: #{tpu_custom_call.1} parent=11 // pred_check
          %p363 = pneg %p202
        $region34: #{tpu_custom_call.1} parent=11 // pred_check_branch
          %365 = sbr.rel (%p363) target = $region36
        $region35: #{tpu_custom_call.1} parent=11 // pred_region
          _
        $region36: #{tpu_custom_call.1} parent=11 // pred_fallthru
          _
        // Predicated region
        $region37: #{tpu_custom_call.1} parent=11 // pred_check
          %p366 = pneg %p223
        $region38: #{tpu_custom_call.1} parent=11 // pred_check_branch
          %368 = sbr.rel (%p366) target = $region40
        $region39: #{tpu_custom_call.1} parent=11 // pred_region
          _
        $region40: #{tpu_custom_call.1} parent=11 // pred_fallthru
          _
        // Predicated region
        $region41: #{tpu_custom_call.1} parent=11 // pred_check
          %p369 = pneg %p244
        $region42: #{tpu_custom_call.1} parent=11 // pred_check_branch
          %371 = sbr.rel (%p369) target = $region44
        $region43: #{tpu_custom_call.1} parent=11 // pred_region
          _
        $region44: #{tpu_custom_call.1} parent=11 // pred_fallthru
          _
        // Predicated region
        $region45: #{tpu_custom_call.1} parent=11 // pred_check
          %p372 = pneg %p265
        $region46: #{tpu_custom_call.1} parent=11 // pred_check_branch
          %374 = sbr.rel (%p372) target = $region48
        $region47: #{tpu_custom_call.1} parent=11 // pred_region
          _
        $region48: #{tpu_custom_call.1} parent=11 // pred_fallthru
          _
        // Predicated region
        $region49: #{tpu_custom_call.1} parent=11 // pred_check
          %p375 = pneg %p286
        $region50: #{tpu_custom_call.1} parent=11 // pred_check_branch
          %377 = sbr.rel (%p375) target = $region52
        $region51: #{tpu_custom_call.1} parent=11 // pred_region
          _
        $region52: #{tpu_custom_call.1} parent=11 // pred_fallthru
          _
        // Predicated region
        $region53: #{tpu_custom_call.1} parent=11 // pred_check
          %p378 = pneg %p307
        $region54: #{tpu_custom_call.1} parent=11 // pred_check_branch
          %380 = sbr.rel (%p378) target = $region56
        $region55: #{tpu_custom_call.1} parent=11 // pred_region
          _
        $region56: #{tpu_custom_call.1} parent=11 // pred_fallthru
          _
      $region12: #{tpu_custom_call.1} parent=5 // pred_fallthru
        _
      %p381 = scmp.lt.s32.totalorder %s24, 2
      // Predicated region
      $region57: #{tpu_custom_call.1} parent=5 // pred_check
        %p382 = pneg %p381
      $region58: #{tpu_custom_call.1} parent=5 // pred_check_branch
        %384 = sbr.rel (%p382) target = $region60
      $region59: #{tpu_custom_call.1} parent=5 // pred_region
        // Predicated region
        $region61: #{tpu_custom_call.1} parent=59 // pred_check
          %p385 = pneg %p44
        $region62: #{tpu_custom_call.1} parent=59 // pred_check_branch
          %387 = sbr.rel (%p385) target = $region64
        $region63: #{tpu_custom_call.1} parent=59 // pred_region
          %s388 = smul.u32 64, %s24
          %s389 = ssub.s32 125, %s388
          %p390 = scmp.lt.s32.totalorder %s389, 64
          %s391 = scalar_select %p390, %s389, 64
          %s392 = smul.u32 128, %s391
          %p393 = scmp.lt.s32.totalorder %s388, 124
          %s394 = scalar_select %p393, %s388, 124
          %s395 = smul.addr %s394, 8
          %s396 = scalar_lea.vmem %s0, %s395
          %s397 = smul.u32 64, %s24
          %s398 = ssub.s32 125, %s397
          %p399 = scmp.lt.s32.totalorder %s398, 64
          %s400 = scalar_select %p399, %s398, 64
          %s401 = smul.u32 128, %s400
        $region64: #{tpu_custom_call.1} parent=59 // pred_fallthru
          _
        // Predicated region
        $region65: #{tpu_custom_call.1} parent=59 // pred_check
          %p402 = pneg %p70
        $region66: #{tpu_custom_call.1} parent=59 // pred_check_branch
          %404 = sbr.rel (%p402) target = $region68
        $region67: #{tpu_custom_call.1} parent=59 // pred_region
          %s405 = smul.u32 64, %s24
          %s406 = ssub.s32 125, %s405
          %p407 = scmp.lt.s32.totalorder %s406, 64
          %s408 = scalar_select %p407, %s406, 64
          %s409 = smul.u32 128, %s408
          %p410 = scmp.lt.s32.totalorder %s405, 124
          %s411 = scalar_select %p410, %s405, 124
          %s412 = smul.addr %s411, 8
          %s413 = scalar_lea.vmem %s1, %s412
          %s414 = smul.u32 64, %s24
          %s415 = ssub.s32 125, %s414
          %p416 = scmp.lt.s32.totalorder %s415, 64
          %s417 = scalar_select %p416, %s415, 64
          %s418 = smul.u32 128, %s417
        $region68: #{tpu_custom_call.1} parent=59 // pred_fallthru
          _
      $region60: #{tpu_custom_call.1} parent=5 // pred_fallthru
        _
      %p419 = scmp.le.s32.totalorder 1, %s24
      %p420 = scmp.lt.s32.totalorder %s24, 3
      %p421 = pnand %p419, %p420
      %p422 = pneg %p421
      // Predicated region
      $region69: #{tpu_custom_call.1} parent=5 // pred_check
        _
      $region70: #{tpu_custom_call.1} parent=5 // pred_check_branch
        %424 = sbr.rel (%p421) target = $region72
      $region71: #{tpu_custom_call.1} parent=5 // pred_region
        %s425 = ssub.s32 %s24, 1
        %s426 = smul.u32 64, %s29
        %s427 = ssub.s32 125, %s426
        %p428 = scmp.lt.s32.totalorder %s427, 64
        %s429 = scalar_select %p428, %s427, 64
        %s430 = smul.u32 128, %s429
        %p431 = scmp.lt.s32.totalorder %s426, 124
        %s432 = scalar_select %p431, %s426, 124
        %s433 = smul.addr %s432, 8
        %s434 = scalar_lea.vmem %s0, %s433
        %p435 = pneg %p50
        %p436 = pneg %p47
        %s437 = smul.u32 64, %s29
        %s438 = ssub.s32 125, %s437
        %p439 = scmp.lt.s32.totalorder %s438, 64
        %s440 = scalar_select %p439, %s438, 64
        %s441 = smul.u32 128, %s440
        %p442 = scmp.lt.s32.totalorder %s437, 124
        %s443 = scalar_select %p442, %s437, 124
        %s444 = smul.addr %s443, 8
        %s445 = scalar_lea.vmem %s1, %s444
        %p446 = pneg %p76
        %p447 = pneg %p73
        %p448 = pneg %p97
        %p449 = pneg %p94
        %p450 = pneg %p118
        %p451 = pneg %p115
        %p452 = pneg %p139
        %p453 = pneg %p136
        %p454 = pneg %p160
        %p455 = pneg %p157
        %p456 = pneg %p181
        %p457 = pneg %p178
        %p458 = pneg %p202
        %p459 = pneg %p199
        %p460 = pneg %p223
        %p461 = pneg %p220
        %p462 = pneg %p244
        %p463 = pneg %p241
        %p464 = pneg %p265
        %p465 = pneg %p262
        %p466 = pneg %p286
        %p467 = pneg %p283
        %p468 = pneg %p307
        %p469 = pneg %p304
        %p470 = pneg %p333
        %p471 = pneg %p330
        %s472 = sand.u32 %s320, 1
        %s473 = scalar_lea.sflag [#allocation4], %s472
        %s474 = sand.u32 %s320, 1
        %s475 = smul.addr %s474, 4
        %s476 = scalar_lea.vmem [#allocation3], %s475
        %s477 = smul.u32 64, %s29
        %s478 = ssub.s32 125, %s477
        %p479 = scmp.lt.s32.totalorder %s478, 64
        %s480 = scalar_select %p479, %s478, 64
        %s481 = smul.u32 128, %s480
        %p482 = scmp.lt.s32.totalorder %s477, 124
        %s483 = scalar_select %p482, %s477, 124
        %s484 = smul.addr %s483, 8
        %s485 = scalar_lea.vmem %s0, %s484
        %s486 = smul.u32 64, %s29
        %s487 = ssub.s32 125, %s486
        %p488 = scmp.lt.s32.totalorder %s487, 64
        %s489 = scalar_select %p488, %s487, 64
        %s490 = smul.u32 128, %s489
        %s491 = smul.u32 64, %s29
        %s492 = ssub.s32 125, %s491
        %p493 = scmp.lt.s32.totalorder %s492, 64
        %s494 = scalar_select %p493, %s492, 64
        %s495 = smul.u32 128, %s494
        %p496 = scmp.lt.s32.totalorder %s491, 124
        %s497 = scalar_select %p496, %s491, 124
        %s498 = smul.addr %s497, 8
        %s499 = scalar_lea.vmem %s1, %s498
        %s500 = smul.u32 64, %s29
        %s501 = ssub.s32 125, %s500
        %p502 = scmp.lt.s32.totalorder %s501, 64
        %s503 = scalar_select %p502, %s501, 64
        %s504 = smul.u32 128, %s503
        %v506 = vld [vmem:[%s485] sm:$0xff]
        %v507 = vld [vmem:[%s485 + $0x8] sm:$0xff]
        %v508 = vld [vmem:[%s485 + $0x10] sm:$0xff]
        %v509 = vld [vmem:[%s485 + $0x18] sm:$0xff]
        %v510 = vld [vmem:[%s485 + $0x20] sm:$0xff]
        %v511 = vld [vmem:[%s485 + $0x28] sm:$0xff]
        %v512 = vld [vmem:[%s485 + $0x30] sm:$0xff]
        %v513 = vld [vmem:[%s485 + $0x38] sm:$0xff]
        %v514 = vld [vmem:[%s485 + $0x40] sm:$0xff]
        %v515 = vld [vmem:[%s485 + $0x48] sm:$0xff]
        %v516 = vld [vmem:[%s485 + $0x50] sm:$0xff]
        %v517 = vld [vmem:[%s485 + $0x58] sm:$0xff]
        %v518 = vld [vmem:[%s485 + $0x60] sm:$0xff]
        %v519 = vld [vmem:[%s485 + $0x68] sm:$0xff]
        %v520 = vld [vmem:[%s485 + $0x70] sm:$0xff]
        %v521 = vld [vmem:[%s485 + $0x78] sm:$0xff]
        %v522 = vld [vmem:[%s485 + $0x80] sm:$0xff]
        %v523 = vld [vmem:[%s485 + $0x88] sm:$0xff]
        %v524 = vld [vmem:[%s485 + $0x90] sm:$0xff]
        %v525 = vld [vmem:[%s485 + $0x98] sm:$0xff]
        %v526 = vld [vmem:[%s485 + $0xa0] sm:$0xff]
        %v527 = vld [vmem:[%s485 + $0xa8] sm:$0xff]
        %v528 = vld [vmem:[%s485 + $0xb0] sm:$0xff]
        %v529 = vld [vmem:[%s485 + $0xb8] sm:$0xff]
        %v530 = vld [vmem:[%s485 + $0xc0] sm:$0xff]
        %v531 = vld [vmem:[%s485 + $0xc8] sm:$0xff]
        %v532 = vld [vmem:[%s485 + $0xd0] sm:$0xff]
        %v533 = vld [vmem:[%s485 + $0xd8] sm:$0xff]
        %v534 = vld [vmem:[%s485 + $0xe0] sm:$0xff]
        %v535 = vld [vmem:[%s485 + $0xe8] sm:$0xff]
        %v536 = vld [vmem:[%s485 + $0xf0] sm:$0xff]
        %v537 = vld [vmem:[%s485 + $0xf8] sm:$0xff]
        %v538 = vld [vmem:[%s485 + $0x100] sm:$0xff]
        %v539 = vld [vmem:[%s485 + $0x108] sm:$0xff]
        %v540 = vld [vmem:[%s485 + $0x110] sm:$0xff]
        %v541 = vld [vmem:[%s485 + $0x118] sm:$0xff]
        %v542 = vld [vmem:[%s485 + $0x120] sm:$0xff]
        %v543 = vld [vmem:[%s485 + $0x128] sm:$0xff]
        %v544 = vld [vmem:[%s485 + $0x130] sm:$0xff]
        %v545 = vld [vmem:[%s485 + $0x138] sm:$0xff]
        %v546 = vld [vmem:[%s485 + $0x140] sm:$0xff]
        %v547 = vld [vmem:[%s485 + $0x148] sm:$0xff]
        %v548 = vld [vmem:[%s485 + $0x150] sm:$0xff]
        %v549 = vld [vmem:[%s485 + $0x158] sm:$0xff]
        %v550 = vld [vmem:[%s485 + $0x160] sm:$0xff]
        %v551 = vld [vmem:[%s485 + $0x168] sm:$0xff]
        %v552 = vld [vmem:[%s485 + $0x170] sm:$0xff]
        %v553 = vld [vmem:[%s485 + $0x178] sm:$0xff]
        %v554 = vld [vmem:[%s485 + $0x180] sm:$0xff]
        %v555 = vld [vmem:[%s485 + $0x188] sm:$0xff]
        %v556 = vld [vmem:[%s485 + $0x190] sm:$0xff]
        %v557 = vld [vmem:[%s485 + $0x198] sm:$0xff]
        %v558 = vld [vmem:[%s485 + $0x1a0] sm:$0xff]
        %v559 = vld [vmem:[%s485 + $0x1a8] sm:$0xff]
        %v560 = vld [vmem:[%s485 + $0x1b0] sm:$0xff]
        %v561 = vld [vmem:[%s485 + $0x1b8] sm:$0xff]
        %v562 = vld [vmem:[%s485 + $0x1c0] sm:$0xff]
        %v563 = vld [vmem:[%s485 + $0x1c8] sm:$0xff]
        %v564 = vld [vmem:[%s485 + $0x1d0] sm:$0xff]
        %v565 = vld [vmem:[%s485 + $0x1d8] sm:$0xff]
        %v566 = vld [vmem:[%s485 + $0x1e0] sm:$0xff]
        %v567 = vld [vmem:[%s485 + $0x1e8] sm:$0xff]
        %v568 = vld [vmem:[%s485 + $0x1f0] sm:$0xff]
        %v569 = vld [vmem:[%s485 + $0x1f8] sm:$0xff]
        %v570 = vlaneseq
        %v571 = vand.u32 %v570, 127
        %v572 = vadd.s32 %v571, 128
        %573 = vset.pattern.permute.xlu0 0
        %574 = vperm.xlu0 %573, %v506
        %v575 = vpop.permute.xlu0 %574
        %576 = vset.pattern.permute.xlu0 0
        %577 = vperm.xlu0 %576, %v507
        %v578 = vpop.permute.xlu0 %577
        %579 = vset.pattern.permute.xlu0 0
        %580 = vperm.xlu0 %579, %v508
        %v581 = vpop.permute.xlu0 %580
        %582 = vset.pattern.permute.xlu0 0
        %583 = vperm.xlu0 %582, %v509
        %v584 = vpop.permute.xlu0 %583
        %585 = vset.pattern.permute.xlu0 0
        %586 = vperm.xlu0 %585, %v510
        %v587 = vpop.permute.xlu0 %586
        %588 = vset.pattern.permute.xlu0 0
        %589 = vperm.xlu0 %588, %v511
        %v590 = vpop.permute.xlu0 %589
        %591 = vset.pattern.permute.xlu0 0
        %592 = vperm.xlu0 %591, %v512
        %v593 = vpop.permute.xlu0 %592
        %594 = vset.pattern.permute.xlu0 0
        %595 = vperm.xlu0 %594, %v513
        %v596 = vpop.permute.xlu0 %595
        %597 = vset.pattern.permute.xlu0 0
        %598 = vperm.xlu0 %597, %v514
        %v599 = vpop.permute.xlu0 %598
        %600 = vset.pattern.permute.xlu0 0
        %601 = vperm.xlu0 %600, %v515
        %v602 = vpop.permute.xlu0 %601
        %603 = vset.pattern.permute.xlu0 0
        %604 = vperm.xlu0 %603, %v516
        %v605 = vpop.permute.xlu0 %604
        %606 = vset.pattern.permute.xlu0 0
        %607 = vperm.xlu0 %606, %v517
        %v608 = vpop.permute.xlu0 %607
        %609 = vset.pattern.permute.xlu0 0
        %610 = vperm.xlu0 %609, %v518
        %v611 = vpop.permute.xlu0 %610
        %612 = vset.pattern.permute.xlu0 0
        %613 = vperm.xlu0 %612, %v519
        %v614 = vpop.permute.xlu0 %613
        %615 = vset.pattern.permute.xlu0 0
        %616 = vperm.xlu0 %615, %v520
        %v617 = vpop.permute.xlu0 %616
        %618 = vset.pattern.permute.xlu0 0
        %619 = vperm.xlu0 %618, %v521
        %v620 = vpop.permute.xlu0 %619
        %621 = vset.pattern.permute.xlu0 0
        %622 = vperm.xlu0 %621, %v522
        %v623 = vpop.permute.xlu0 %622
        %624 = vset.pattern.permute.xlu0 0
        %625 = vperm.xlu0 %624, %v523
        %v626 = vpop.permute.xlu0 %625
        %627 = vset.pattern.permute.xlu0 0
        %628 = vperm.xlu0 %627, %v524
        %v629 = vpop.permute.xlu0 %628
        %630 = vset.pattern.permute.xlu0 0
        %631 = vperm.xlu0 %630, %v525
        %v632 = vpop.permute.xlu0 %631
        %633 = vset.pattern.permute.xlu0 0
        %634 = vperm.xlu0 %633, %v526
        %v635 = vpop.permute.xlu0 %634
        %636 = vset.pattern.permute.xlu0 0
        %637 = vperm.xlu0 %636, %v527
        %v638 = vpop.permute.xlu0 %637
        %639 = vset.pattern.permute.xlu0 0
        %640 = vperm.xlu0 %639, %v528
        %v641 = vpop.permute.xlu0 %640
        %642 = vset.pattern.permute.xlu0 0
        %643 = vperm.xlu0 %642, %v529
        %v644 = vpop.permute.xlu0 %643
        %645 = vset.pattern.permute.xlu0 0
        %646 = vperm.xlu0 %645, %v530
        %v647 = vpop.permute.xlu0 %646
        %648 = vset.pattern.permute.xlu0 0
        %649 = vperm.xlu0 %648, %v531
        %v650 = vpop.permute.xlu0 %649
        %651 = vset.pattern.permute.xlu0 0
        %652 = vperm.xlu0 %651, %v532
        %v653 = vpop.permute.xlu0 %652
        %654 = vset.pattern.permute.xlu0 0
        %655 = vperm.xlu0 %654, %v533
        %v656 = vpop.permute.xlu0 %655
        %657 = vset.pattern.permute.xlu0 0
        %658 = vperm.xlu0 %657, %v534
        %v659 = vpop.permute.xlu0 %658
        %660 = vset.pattern.permute.xlu0 0
        %661 = vperm.xlu0 %660, %v535
        %v662 = vpop.permute.xlu0 %661
        %663 = vset.pattern.permute.xlu0 0
        %664 = vperm.xlu0 %663, %v536
        %v665 = vpop.permute.xlu0 %664
        %666 = vset.pattern.permute.xlu0 0
        %667 = vperm.xlu0 %666, %v537
        %v668 = vpop.permute.xlu0 %667
        %669 = vset.pattern.permute.xlu0 0
        %670 = vperm.xlu0 %669, %v538
        %v671 = vpop.permute.xlu0 %670
        %672 = vset.pattern.permute.xlu0 0
        %673 = vperm.xlu0 %672, %v539
        %v674 = vpop.permute.xlu0 %673
        %675 = vset.pattern.permute.xlu0 0
        %676 = vperm.xlu0 %675, %v540
        %v677 = vpop.permute.xlu0 %676
        %678 = vset.pattern.permute.xlu0 0
        %679 = vperm.xlu0 %678, %v541
        %v680 = vpop.permute.xlu0 %679
        %681 = vset.pattern.permute.xlu0 0
        %682 = vperm.xlu0 %681, %v542
        %v683 = vpop.permute.xlu0 %682
        %684 = vset.pattern.permute.xlu0 0
        %685 = vperm.xlu0 %684, %v543
        %v686 = vpop.permute.xlu0 %685
        %687 = vset.pattern.permute.xlu0 0
        %688 = vperm.xlu0 %687, %v544
        %v689 = vpop.permute.xlu0 %688
        %690 = vset.pattern.permute.xlu0 0
        %691 = vperm.xlu0 %690, %v545
        %v692 = vpop.permute.xlu0 %691
        %693 = vset.pattern.permute.xlu0 0
        %694 = vperm.xlu0 %693, %v546
        %v695 = vpop.permute.xlu0 %694
        %696 = vset.pattern.permute.xlu0 0
        %697 = vperm.xlu0 %696, %v547
        %v698 = vpop.permute.xlu0 %697
        %699 = vset.pattern.permute.xlu0 0
        %700 = vperm.xlu0 %699, %v548
        %v701 = vpop.permute.xlu0 %700
        %702 = vset.pattern.permute.xlu0 0
        %703 = vperm.xlu0 %702, %v549
        %v704 = vpop.permute.xlu0 %703
        %705 = vset.pattern.permute.xlu0 0
        %706 = vperm.xlu0 %705, %v550
        %v707 = vpop.permute.xlu0 %706
        %708 = vset.pattern.permute.xlu0 0
        %709 = vperm.xlu0 %708, %v551
        %v710 = vpop.permute.xlu0 %709
        %711 = vset.pattern.permute.xlu0 0
        %712 = vperm.xlu0 %711, %v552
        %v713 = vpop.permute.xlu0 %712
        %714 = vset.pattern.permute.xlu0 0
        %715 = vperm.xlu0 %714, %v553
        %v716 = vpop.permute.xlu0 %715
        %717 = vset.pattern.permute.xlu0 0
        %718 = vperm.xlu0 %717, %v554
        %v719 = vpop.permute.xlu0 %718
        %720 = vset.pattern.permute.xlu0 0
        %721 = vperm.xlu0 %720, %v555
        %v722 = vpop.permute.xlu0 %721
        %723 = vset.pattern.permute.xlu0 0
        %724 = vperm.xlu0 %723, %v556
        %v725 = vpop.permute.xlu0 %724
        %726 = vset.pattern.permute.xlu0 0
        %727 = vperm.xlu0 %726, %v557
        %v728 = vpop.permute.xlu0 %727
        %729 = vset.pattern.permute.xlu0 0
        %730 = vperm.xlu0 %729, %v558
        %v731 = vpop.permute.xlu0 %730
        %732 = vset.pattern.permute.xlu0 0
        %733 = vperm.xlu0 %732, %v559
        %v734 = vpop.permute.xlu0 %733
        %735 = vset.pattern.permute.xlu0 0
        %736 = vperm.xlu0 %735, %v560
        %v737 = vpop.permute.xlu0 %736
        %738 = vset.pattern.permute.xlu0 0
        %739 = vperm.xlu0 %738, %v561
        %v740 = vpop.permute.xlu0 %739
        %741 = vset.pattern.permute.xlu0 0
        %742 = vperm.xlu0 %741, %v562
        %v743 = vpop.permute.xlu0 %742
        %744 = vset.pattern.permute.xlu0 0
        %745 = vperm.xlu0 %744, %v563
        %v746 = vpop.permute.xlu0 %745
        %747 = vset.pattern.permute.xlu0 0
        %748 = vperm.xlu0 %747, %v564
        %v749 = vpop.permute.xlu0 %748
        %750 = vset.pattern.permute.xlu0 0
        %751 = vperm.xlu0 %750, %v565
        %v752 = vpop.permute.xlu0 %751
        %753 = vset.pattern.permute.xlu0 0
        %754 = vperm.xlu0 %753, %v566
        %v755 = vpop.permute.xlu0 %754
        %756 = vset.pattern.permute.xlu0 0
        %757 = vperm.xlu0 %756, %v567
        %v758 = vpop.permute.xlu0 %757
        %759 = vset.pattern.permute.xlu0 0
        %760 = vperm.xlu0 %759, %v568
        %v761 = vpop.permute.xlu0 %760
        %762 = vset.pattern.permute.xlu0 0
        %763 = vperm.xlu0 %762, %v569
        %v764 = vpop.permute.xlu0 %763
        %vm765 = vcmp.eq.s32.totalorder %v575, %v571
        %vm766 = vcmp.eq.s32.totalorder %v575, %v572
        %vm767 = vcmp.eq.s32.totalorder %v578, %v571
        %vm768 = vcmp.eq.s32.totalorder %v578, %v572
        %vm769 = vcmp.eq.s32.totalorder %v581, %v571
        %vm770 = vcmp.eq.s32.totalorder %v581, %v572
        %vm771 = vcmp.eq.s32.totalorder %v584, %v571
        %vm772 = vcmp.eq.s32.totalorder %v584, %v572
        %vm773 = vcmp.eq.s32.totalorder %v587, %v571
        %vm774 = vcmp.eq.s32.totalorder %v587, %v572
        %vm775 = vcmp.eq.s32.totalorder %v590, %v571
        %vm776 = vcmp.eq.s32.totalorder %v590, %v572
        %vm777 = vcmp.eq.s32.totalorder %v593, %v571
        %vm778 = vcmp.eq.s32.totalorder %v593, %v572
        %vm779 = vcmp.eq.s32.totalorder %v596, %v571
        %vm780 = vcmp.eq.s32.totalorder %v596, %v572
        %vm781 = vcmp.eq.s32.totalorder %v599, %v571
        %vm782 = vcmp.eq.s32.totalorder %v599, %v572
        %vm783 = vcmp.eq.s32.totalorder %v602, %v571
        %vm784 = vcmp.eq.s32.totalorder %v602, %v572
        %vm785 = vcmp.eq.s32.totalorder %v605, %v571
        %vm786 = vcmp.eq.s32.totalorder %v605, %v572
        %vm787 = vcmp.eq.s32.totalorder %v608, %v571
        %vm788 = vcmp.eq.s32.totalorder %v608, %v572
        %vm789 = vcmp.eq.s32.totalorder %v611, %v571
        %vm790 = vcmp.eq.s32.totalorder %v611, %v572
        %vm791 = vcmp.eq.s32.totalorder %v614, %v571
        %vm792 = vcmp.eq.s32.totalorder %v614, %v572
        %vm793 = vcmp.eq.s32.totalorder %v617, %v571
        %vm794 = vcmp.eq.s32.totalorder %v617, %v572
        %vm795 = vcmp.eq.s32.totalorder %v620, %v571
        %vm796 = vcmp.eq.s32.totalorder %v620, %v572
        %vm797 = vcmp.eq.s32.totalorder %v623, %v571
        %vm798 = vcmp.eq.s32.totalorder %v623, %v572
        %vm799 = vcmp.eq.s32.totalorder %v626, %v571
        %vm800 = vcmp.eq.s32.totalorder %v626, %v572
        %vm801 = vcmp.eq.s32.totalorder %v629, %v571
        %vm802 = vcmp.eq.s32.totalorder %v629, %v572
        %vm803 = vcmp.eq.s32.totalorder %v632, %v571
        %vm804 = vcmp.eq.s32.totalorder %v632, %v572
        %vm805 = vcmp.eq.s32.totalorder %v635, %v571
        %vm806 = vcmp.eq.s32.totalorder %v635, %v572
        %vm807 = vcmp.eq.s32.totalorder %v638, %v571
        %vm808 = vcmp.eq.s32.totalorder %v638, %v572
        %vm809 = vcmp.eq.s32.totalorder %v641, %v571
        %vm810 = vcmp.eq.s32.totalorder %v641, %v572
        %vm811 = vcmp.eq.s32.totalorder %v644, %v571
        %vm812 = vcmp.eq.s32.totalorder %v644, %v572
        %vm813 = vcmp.eq.s32.totalorder %v647, %v571
        %vm814 = vcmp.eq.s32.totalorder %v647, %v572
        %vm815 = vcmp.eq.s32.totalorder %v650, %v571
        %vm816 = vcmp.eq.s32.totalorder %v650, %v572
        %vm817 = vcmp.eq.s32.totalorder %v653, %v571
        %vm818 = vcmp.eq.s32.totalorder %v653, %v572
        %vm819 = vcmp.eq.s32.totalorder %v656, %v571
        %vm820 = vcmp.eq.s32.totalorder %v656, %v572
        %vm821 = vcmp.eq.s32.totalorder %v659, %v571
        %vm822 = vcmp.eq.s32.totalorder %v659, %v572
        %vm823 = vcmp.eq.s32.totalorder %v662, %v571
        %vm824 = vcmp.eq.s32.totalorder %v662, %v572
        %vm825 = vcmp.eq.s32.totalorder %v665, %v571
        %vm826 = vcmp.eq.s32.totalorder %v665, %v572
        %vm827 = vcmp.eq.s32.totalorder %v668, %v571
        %vm828 = vcmp.eq.s32.totalorder %v668, %v572
        %vm829 = vcmp.eq.s32.totalorder %v671, %v571
        %vm830 = vcmp.eq.s32.totalorder %v671, %v572
        %vm831 = vcmp.eq.s32.totalorder %v674, %v571
        %vm832 = vcmp.eq.s32.totalorder %v674, %v572
        %vm833 = vcmp.eq.s32.totalorder %v677, %v571
        %vm834 = vcmp.eq.s32.totalorder %v677, %v572
        %vm835 = vcmp.eq.s32.totalorder %v680, %v571
        %vm836 = vcmp.eq.s32.totalorder %v680, %v572
        %vm837 = vcmp.eq.s32.totalorder %v683, %v571
        %vm838 = vcmp.eq.s32.totalorder %v683, %v572
        %vm839 = vcmp.eq.s32.totalorder %v686, %v571
        %vm840 = vcmp.eq.s32.totalorder %v686, %v572
        %vm841 = vcmp.eq.s32.totalorder %v689, %v571
        %vm842 = vcmp.eq.s32.totalorder %v689, %v572
        %vm843 = vcmp.eq.s32.totalorder %v692, %v571
        %vm844 = vcmp.eq.s32.totalorder %v692, %v572
        %vm845 = vcmp.eq.s32.totalorder %v695, %v571
        %vm846 = vcmp.eq.s32.totalorder %v695, %v572
        %vm847 = vcmp.eq.s32.totalorder %v698, %v571
        %vm848 = vcmp.eq.s32.totalorder %v698, %v572
        %vm849 = vcmp.eq.s32.totalorder %v701, %v571
        %vm850 = vcmp.eq.s32.totalorder %v701, %v572
        %vm851 = vcmp.eq.s32.totalorder %v704, %v571
        %vm852 = vcmp.eq.s32.totalorder %v704, %v572
        %vm853 = vcmp.eq.s32.totalorder %v707, %v571
        %vm854 = vcmp.eq.s32.totalorder %v707, %v572
        %vm855 = vcmp.eq.s32.totalorder %v710, %v571
        %vm856 = vcmp.eq.s32.totalorder %v710, %v572
        %vm857 = vcmp.eq.s32.totalorder %v713, %v571
        %vm858 = vcmp.eq.s32.totalorder %v713, %v572
        %vm859 = vcmp.eq.s32.totalorder %v716, %v571
        %vm860 = vcmp.eq.s32.totalorder %v716, %v572
        %vm861 = vcmp.eq.s32.totalorder %v719, %v571
        %vm862 = vcmp.eq.s32.totalorder %v719, %v572
        %vm863 = vcmp.eq.s32.totalorder %v722, %v571
        %vm864 = vcmp.eq.s32.totalorder %v722, %v572
        %vm865 = vcmp.eq.s32.totalorder %v725, %v571
        %vm866 = vcmp.eq.s32.totalorder %v725, %v572
        %vm867 = vcmp.eq.s32.totalorder %v728, %v571
        %vm868 = vcmp.eq.s32.totalorder %v728, %v572
        %vm869 = vcmp.eq.s32.totalorder %v731, %v571
        %vm870 = vcmp.eq.s32.totalorder %v731, %v572
        %vm871 = vcmp.eq.s32.totalorder %v734, %v571
        %vm872 = vcmp.eq.s32.totalorder %v734, %v572
        %vm873 = vcmp.eq.s32.totalorder %v737, %v571
        %vm874 = vcmp.eq.s32.totalorder %v737, %v572
        %vm875 = vcmp.eq.s32.totalorder %v740, %v571
        %vm876 = vcmp.eq.s32.totalorder %v740, %v572
        %vm877 = vcmp.eq.s32.totalorder %v743, %v571
        %vm878 = vcmp.eq.s32.totalorder %v743, %v572
        %vm879 = vcmp.eq.s32.totalorder %v746, %v571
        %vm880 = vcmp.eq.s32.totalorder %v746, %v572
        %vm881 = vcmp.eq.s32.totalorder %v749, %v571
        %vm882 = vcmp.eq.s32.totalorder %v749, %v572
        %vm883 = vcmp.eq.s32.totalorder %v752, %v571
        %vm884 = vcmp.eq.s32.totalorder %v752, %v572
        %vm885 = vcmp.eq.s32.totalorder %v755, %v571
        %vm886 = vcmp.eq.s32.totalorder %v755, %v572
        %vm887 = vcmp.eq.s32.totalorder %v758, %v571
        %vm888 = vcmp.eq.s32.totalorder %v758, %v572
        %vm889 = vcmp.eq.s32.totalorder %v761, %v571
        %vm890 = vcmp.eq.s32.totalorder %v761, %v572
        %vm891 = vcmp.eq.s32.totalorder %v764, %v571
        %vm892 = vcmp.eq.s32.totalorder %v764, %v572
        %v893 = vsel %vm765, 1, 0
        %v894 = vsel %vm766, 1, 0
        %v895 = vsel %vm767, 1, 0
        %v896 = vsel %vm768, 1, 0
        %v897 = vsel %vm769, 1, 0
        %v898 = vsel %vm770, 1, 0
        %v899 = vsel %vm771, 1, 0
        %v900 = vsel %vm772, 1, 0
        %v901 = vsel %vm773, 1, 0
        %v902 = vsel %vm774, 1, 0
        %v903 = vsel %vm775, 1, 0
        %v904 = vsel %vm776, 1, 0
        %v905 = vsel %vm777, 1, 0
        %v906 = vsel %vm778, 1, 0
        %v907 = vsel %vm779, 1, 0
        %v908 = vsel %vm780, 1, 0
        %v909 = vsel %vm781, 1, 0
        %v910 = vsel %vm782, 1, 0
        %v911 = vsel %vm783, 1, 0
        %v912 = vsel %vm784, 1, 0
        %v913 = vsel %vm785, 1, 0
        %v914 = vsel %vm786, 1, 0
        %v915 = vsel %vm787, 1, 0
        %v916 = vsel %vm788, 1, 0
        %v917 = vsel %vm789, 1, 0
        %v918 = vsel %vm790, 1, 0
        %v919 = vsel %vm791, 1, 0
        %v920 = vsel %vm792, 1, 0
        %v921 = vsel %vm793, 1, 0
        %v922 = vsel %vm794, 1, 0
        %v923 = vsel %vm795, 1, 0
        %v924 = vsel %vm796, 1, 0
        %v925 = vsel %vm797, 1, 0
        %v926 = vsel %vm798, 1, 0
        %v927 = vsel %vm799, 1, 0
        %v928 = vsel %vm800, 1, 0
        %v929 = vsel %vm801, 1, 0
        %v930 = vsel %vm802, 1, 0
        %v931 = vsel %vm803, 1, 0
        %v932 = vsel %vm804, 1, 0
        %v933 = vsel %vm805, 1, 0
        %v934 = vsel %vm806, 1, 0
        %v935 = vsel %vm807, 1, 0
        %v936 = vsel %vm808, 1, 0
        %v937 = vsel %vm809, 1, 0
        %v938 = vsel %vm810, 1, 0
        %v939 = vsel %vm811, 1, 0
        %v940 = vsel %vm812, 1, 0
        %v941 = vsel %vm813, 1, 0
        %v942 = vsel %vm814, 1, 0
        %v943 = vsel %vm815, 1, 0
        %v944 = vsel %vm816, 1, 0
        %v945 = vsel %vm817, 1, 0
        %v946 = vsel %vm818, 1, 0
        %v947 = vsel %vm819, 1, 0
        %v948 = vsel %vm820, 1, 0
        %v949 = vsel %vm821, 1, 0
        %v950 = vsel %vm822, 1, 0
        %v951 = vsel %vm823, 1, 0
        %v952 = vsel %vm824, 1, 0
        %v953 = vsel %vm825, 1, 0
        %v954 = vsel %vm826, 1, 0
        %v955 = vsel %vm827, 1, 0
        %v956 = vsel %vm828, 1, 0
        %v957 = vsel %vm829, 1, 0
        %v958 = vsel %vm830, 1, 0
        %v959 = vsel %vm831, 1, 0
        %v960 = vsel %vm832, 1, 0
        %v961 = vsel %vm833, 1, 0
        %v962 = vsel %vm834, 1, 0
        %v963 = vsel %vm835, 1, 0
        %v964 = vsel %vm836, 1, 0
        %v965 = vsel %vm837, 1, 0
        %v966 = vsel %vm838, 1, 0
        %v967 = vsel %vm839, 1, 0
        %v968 = vsel %vm840, 1, 0
        %v969 = vsel %vm841, 1, 0
        %v970 = vsel %vm842, 1, 0
        %v971 = vsel %vm843, 1, 0
        %v972 = vsel %vm844, 1, 0
        %v973 = vsel %vm845, 1, 0
        %v974 = vsel %vm846, 1, 0
        %v975 = vsel %vm847, 1, 0
        %v976 = vsel %vm848, 1, 0
        %v977 = vsel %vm849, 1, 0
        %v978 = vsel %vm850, 1, 0
        %v979 = vsel %vm851, 1, 0
        %v980 = vsel %vm852, 1, 0
        %v981 = vsel %vm853, 1, 0
        %v982 = vsel %vm854, 1, 0
        %v983 = vsel %vm855, 1, 0
        %v984 = vsel %vm856, 1, 0
        %v985 = vsel %vm857, 1, 0
        %v986 = vsel %vm858, 1, 0
        %v987 = vsel %vm859, 1, 0
        %v988 = vsel %vm860, 1, 0
        %v989 = vsel %vm861, 1, 0
        %v990 = vsel %vm862, 1, 0
        %v991 = vsel %vm863, 1, 0
        %v992 = vsel %vm864, 1, 0
        %v993 = vsel %vm865, 1, 0
        %v994 = vsel %vm866, 1, 0
        %v995 = vsel %vm867, 1, 0
        %v996 = vsel %vm868, 1, 0
        %v997 = vsel %vm869, 1, 0
        %v998 = vsel %vm870, 1, 0
        %v999 = vsel %vm871, 1, 0
        %v1000 = vsel %vm872, 1, 0
        %v1001 = vsel %vm873, 1, 0
        %v1002 = vsel %vm874, 1, 0
        %v1003 = vsel %vm875, 1, 0
        %v1004 = vsel %vm876, 1, 0
        %v1005 = vsel %vm877, 1, 0
        %v1006 = vsel %vm878, 1, 0
        %v1007 = vsel %vm879, 1, 0
        %v1008 = vsel %vm880, 1, 0
        %v1009 = vsel %vm881, 1, 0
        %v1010 = vsel %vm882, 1, 0
        %v1011 = vsel %vm883, 1, 0
        %v1012 = vsel %vm884, 1, 0
        %v1013 = vsel %vm885, 1, 0
        %v1014 = vsel %vm886, 1, 0
        %v1015 = vsel %vm887, 1, 0
        %v1016 = vsel %vm888, 1, 0
        %v1017 = vsel %vm889, 1, 0
        %v1018 = vsel %vm890, 1, 0
        %v1019 = vsel %vm891, 1, 0
        %v1020 = vsel %vm892, 1, 0
        %v1021 = vcvt.s32.f32 %v893
        %v1022 = vcvt.s32.f32 %v894
        %v1023 = vcvt.s32.f32 %v895
        %v1024 = vcvt.s32.f32 %v896
        %v1025 = vcvt.s32.f32 %v897
        %v1026 = vcvt.s32.f32 %v898
        %v1027 = vcvt.s32.f32 %v899
        %v1028 = vcvt.s32.f32 %v900
        %v1029 = vcvt.s32.f32 %v901
        %v1030 = vcvt.s32.f32 %v902
        %v1031 = vcvt.s32.f32 %v903
        %v1032 = vcvt.s32.f32 %v904
        %v1033 = vcvt.s32.f32 %v905
        %v1034 = vcvt.s32.f32 %v906
        %v1035 = vcvt.s32.f32 %v907
        %v1036 = vcvt.s32.f32 %v908
        %v1037 = vcvt.s32.f32 %v909
        %v1038 = vcvt.s32.f32 %v910
        %v1039 = vcvt.s32.f32 %v911
        %v1040 = vcvt.s32.f32 %v912
        %v1041 = vcvt.s32.f32 %v913
        %v1042 = vcvt.s32.f32 %v914
        %v1043 = vcvt.s32.f32 %v915
        %v1044 = vcvt.s32.f32 %v916
        %v1045 = vcvt.s32.f32 %v917
        %v1046 = vcvt.s32.f32 %v918
        %v1047 = vcvt.s32.f32 %v919
        %v1048 = vcvt.s32.f32 %v920
        %v1049 = vcvt.s32.f32 %v921
        %v1050 = vcvt.s32.f32 %v922
        %v1051 = vcvt.s32.f32 %v923
        %v1052 = vcvt.s32.f32 %v924
        %v1053 = vcvt.s32.f32 %v925
        %v1054 = vcvt.s32.f32 %v926
        %v1055 = vcvt.s32.f32 %v927
        %v1056 = vcvt.s32.f32 %v928
        %v1057 = vcvt.s32.f32 %v929
        %v1058 = vcvt.s32.f32 %v930
        %v1059 = vcvt.s32.f32 %v931
        %v1060 = vcvt.s32.f32 %v932
        %v1061 = vcvt.s32.f32 %v933
        %v1062 = vcvt.s32.f32 %v934
        %v1063 = vcvt.s32.f32 %v935
        %v1064 = vcvt.s32.f32 %v936
        %v1065 = vcvt.s32.f32 %v937
        %v1066 = vcvt.s32.f32 %v938
        %v1067 = vcvt.s32.f32 %v939
        %v1068 = vcvt.s32.f32 %v940
        %v1069 = vcvt.s32.f32 %v941
        %v1070 = vcvt.s32.f32 %v942
        %v1071 = vcvt.s32.f32 %v943
        %v1072 = vcvt.s32.f32 %v944
        %v1073 = vcvt.s32.f32 %v945
        %v1074 = vcvt.s32.f32 %v946
        %v1075 = vcvt.s32.f32 %v947
        %v1076 = vcvt.s32.f32 %v948
        %v1077 = vcvt.s32.f32 %v949
        %v1078 = vcvt.s32.f32 %v950
        %v1079 = vcvt.s32.f32 %v951
        %v1080 = vcvt.s32.f32 %v952
        %v1081 = vcvt.s32.f32 %v953
        %v1082 = vcvt.s32.f32 %v954
        %v1083 = vcvt.s32.f32 %v955
        %v1084 = vcvt.s32.f32 %v956
        %v1085 = vcvt.s32.f32 %v957
        %v1086 = vcvt.s32.f32 %v958
        %v1087 = vcvt.s32.f32 %v959
        %v1088 = vcvt.s32.f32 %v960
        %v1089 = vcvt.s32.f32 %v961
        %v1090 = vcvt.s32.f32 %v962
        %v1091 = vcvt.s32.f32 %v963
        %v1092 = vcvt.s32.f32 %v964
        %v1093 = vcvt.s32.f32 %v965
        %v1094 = vcvt.s32.f32 %v966
        %v1095 = vcvt.s32.f32 %v967
        %v1096 = vcvt.s32.f32 %v968
        %v1097 = vcvt.s32.f32 %v969
        %v1098 = vcvt.s32.f32 %v970
        %v1099 = vcvt.s32.f32 %v971
        %v1100 = vcvt.s32.f32 %v972
        %v1101 = vcvt.s32.f32 %v973
        %v1102 = vcvt.s32.f32 %v974
        %v1103 = vcvt.s32.f32 %v975
        %v1104 = vcvt.s32.f32 %v976
        %v1105 = vcvt.s32.f32 %v977
        %v1106 = vcvt.s32.f32 %v978
        %v1107 = vcvt.s32.f32 %v979
        %v1108 = vcvt.s32.f32 %v980
        %v1109 = vcvt.s32.f32 %v981
        %v1110 = vcvt.s32.f32 %v982
        %v1111 = vcvt.s32.f32 %v983
        %v1112 = vcvt.s32.f32 %v984
        %v1113 = vcvt.s32.f32 %v985
        %v1114 = vcvt.s32.f32 %v986
        %v1115 = vcvt.s32.f32 %v987
        %v1116 = vcvt.s32.f32 %v988
        %v1117 = vcvt.s32.f32 %v989
        %v1118 = vcvt.s32.f32 %v990
        %v1119 = vcvt.s32.f32 %v991
        %v1120 = vcvt.s32.f32 %v992
        %v1121 = vcvt.s32.f32 %v993
        %v1122 = vcvt.s32.f32 %v994
        %v1123 = vcvt.s32.f32 %v995
        %v1124 = vcvt.s32.f32 %v996
        %v1125 = vcvt.s32.f32 %v997
        %v1126 = vcvt.s32.f32 %v998
        %v1127 = vcvt.s32.f32 %v999
        %v1128 = vcvt.s32.f32 %v1000
        %v1129 = vcvt.s32.f32 %v1001
        %v1130 = vcvt.s32.f32 %v1002
        %v1131 = vcvt.s32.f32 %v1003
        %v1132 = vcvt.s32.f32 %v1004
        %v1133 = vcvt.s32.f32 %v1005
        %v1134 = vcvt.s32.f32 %v1006
        %v1135 = vcvt.s32.f32 %v1007
        %v1136 = vcvt.s32.f32 %v1008
        %v1137 = vcvt.s32.f32 %v1009
        %v1138 = vcvt.s32.f32 %v1010
        %v1139 = vcvt.s32.f32 %v1011
        %v1140 = vcvt.s32.f32 %v1012
        %v1141 = vcvt.s32.f32 %v1013
        %v1142 = vcvt.s32.f32 %v1014
        %v1143 = vcvt.s32.f32 %v1015
        %v1144 = vcvt.s32.f32 %v1016
        %v1145 = vcvt.s32.f32 %v1017
        %v1146 = vcvt.s32.f32 %v1018
        %v1147 = vcvt.s32.f32 %v1019
        %v1148 = vcvt.s32.f32 %v1020
        %v1149 = vpack.c.bf16 %v1023, %v1021
        %v1150 = vpack.c.bf16 %v1024, %v1022
        %v1151 = vpack.c.bf16 %v1027, %v1025
        %v1152 = vpack.c.bf16 %v1028, %v1026
        %v1153 = vpack.c.bf16 %v1031, %v1029
        %v1154 = vpack.c.bf16 %v1032, %v1030
        %v1155 = vpack.c.bf16 %v1035, %v1033
        %v1156 = vpack.c.bf16 %v1036, %v1034
        %v1157 = vpack.c.bf16 %v1039, %v1037
        %v1158 = vpack.c.bf16 %v1040, %v1038
        %v1159 = vpack.c.bf16 %v1043, %v1041
        %v1160 = vpack.c.bf16 %v1044, %v1042
        %v1161 = vpack.c.bf16 %v1047, %v1045
        %v1162 = vpack.c.bf16 %v1048, %v1046
        %v1163 = vpack.c.bf16 %v1051, %v1049
        %v1164 = vpack.c.bf16 %v1052, %v1050
        %v1165 = vpack.c.bf16 %v1055, %v1053
        %v1166 = vpack.c.bf16 %v1056, %v1054
        %v1167 = vpack.c.bf16 %v1059, %v1057
        %v1168 = vpack.c.bf16 %v1060, %v1058
        %v1169 = vpack.c.bf16 %v1063, %v1061
        %v1170 = vpack.c.bf16 %v1064, %v1062
        %v1171 = vpack.c.bf16 %v1067, %v1065
        %v1172 = vpack.c.bf16 %v1068, %v1066
        %v1173 = vpack.c.bf16 %v1071, %v1069
        %v1174 = vpack.c.bf16 %v1072, %v1070
        %v1175 = vpack.c.bf16 %v1075, %v1073
        %v1176 = vpack.c.bf16 %v1076, %v1074
        %v1177 = vpack.c.bf16 %v1079, %v1077
        %v1178 = vpack.c.bf16 %v1080, %v1078
        %v1179 = vpack.c.bf16 %v1083, %v1081
        %v1180 = vpack.c.bf16 %v1084, %v1082
        %v1181 = vpack.c.bf16 %v1087, %v1085
        %v1182 = vpack.c.bf16 %v1088, %v1086
        %v1183 = vpack.c.bf16 %v1091, %v1089
        %v1184 = vpack.c.bf16 %v1092, %v1090
        %v1185 = vpack.c.bf16 %v1095, %v1093
        %v1186 = vpack.c.bf16 %v1096, %v1094
        %v1187 = vpack.c.bf16 %v1099, %v1097
        %v1188 = vpack.c.bf16 %v1100, %v1098
        %v1189 = vpack.c.bf16 %v1103, %v1101
        %v1190 = vpack.c.bf16 %v1104, %v1102
        %v1191 = vpack.c.bf16 %v1107, %v1105
        %v1192 = vpack.c.bf16 %v1108, %v1106
        %v1193 = vpack.c.bf16 %v1111, %v1109
        %v1194 = vpack.c.bf16 %v1112, %v1110
        %v1195 = vpack.c.bf16 %v1115, %v1113
        %v1196 = vpack.c.bf16 %v1116, %v1114
        %v1197 = vpack.c.bf16 %v1119, %v1117
        %v1198 = vpack.c.bf16 %v1120, %v1118
        %v1199 = vpack.c.bf16 %v1123, %v1121
        %v1200 = vpack.c.bf16 %v1124, %v1122
        %v1201 = vpack.c.bf16 %v1127, %v1125
        %v1202 = vpack.c.bf16 %v1128, %v1126
        %v1203 = vpack.c.bf16 %v1131, %v1129
        %v1204 = vpack.c.bf16 %v1132, %v1130
        %v1205 = vpack.c.bf16 %v1135, %v1133
        %v1206 = vpack.c.bf16 %v1136, %v1134
        %v1207 = vpack.c.bf16 %v1139, %v1137
        %v1208 = vpack.c.bf16 %v1140, %v1138
        %v1209 = vpack.c.bf16 %v1143, %v1141
        %v1210 = vpack.c.bf16 %v1144, %v1142
        %v1211 = vpack.c.bf16 %v1147, %v1145
        %v1212 = vpack.c.bf16 %v1148, %v1146
        %v1213 = vld [vmem:[%s499] sm:$0xff]
        %v1214 = vld [vmem:[%s499 + $0x8] sm:$0xff]
        %v1215 = vld [vmem:[%s499 + $0x10] sm:$0xff]
        %v1216 = vld [vmem:[%s499 + $0x18] sm:$0xff]
        %v1217 = vld [vmem:[%s499 + $0x20] sm:$0xff]
        %v1218 = vld [vmem:[%s499 + $0x28] sm:$0xff]
        %v1219 = vld [vmem:[%s499 + $0x30] sm:$0xff]
        %v1220 = vld [vmem:[%s499 + $0x38] sm:$0xff]
        %v1221 = vld [vmem:[%s499 + $0x40] sm:$0xff]
        %v1222 = vld [vmem:[%s499 + $0x48] sm:$0xff]
        %v1223 = vld [vmem:[%s499 + $0x50] sm:$0xff]
        %v1224 = vld [vmem:[%s499 + $0x58] sm:$0xff]
        %v1225 = vld [vmem:[%s499 + $0x60] sm:$0xff]
        %v1226 = vld [vmem:[%s499 + $0x68] sm:$0xff]
        %v1227 = vld [vmem:[%s499 + $0x70] sm:$0xff]
        %v1228 = vld [vmem:[%s499 + $0x78] sm:$0xff]
        %v1229 = vld [vmem:[%s499 + $0x80] sm:$0xff]
        %v1230 = vld [vmem:[%s499 + $0x88] sm:$0xff]
        %v1231 = vld [vmem:[%s499 + $0x90] sm:$0xff]
        %v1232 = vld [vmem:[%s499 + $0x98] sm:$0xff]
        %v1233 = vld [vmem:[%s499 + $0xa0] sm:$0xff]
        %v1234 = vld [vmem:[%s499 + $0xa8] sm:$0xff]
        %v1235 = vld [vmem:[%s499 + $0xb0] sm:$0xff]
        %v1236 = vld [vmem:[%s499 + $0xb8] sm:$0xff]
        %v1237 = vld [vmem:[%s499 + $0xc0] sm:$0xff]
        %v1238 = vld [vmem:[%s499 + $0xc8] sm:$0xff]
        %v1239 = vld [vmem:[%s499 + $0xd0] sm:$0xff]
        %v1240 = vld [vmem:[%s499 + $0xd8] sm:$0xff]
        %v1241 = vld [vmem:[%s499 + $0xe0] sm:$0xff]
        %v1242 = vld [vmem:[%s499 + $0xe8] sm:$0xff]
        %v1243 = vld [vmem:[%s499 + $0xf0] sm:$0xff]
        %v1244 = vld [vmem:[%s499 + $0xf8] sm:$0xff]
        %v1245 = vld [vmem:[%s499 + $0x100] sm:$0xff]
        %v1246 = vld [vmem:[%s499 + $0x108] sm:$0xff]
        %v1247 = vld [vmem:[%s499 + $0x110] sm:$0xff]
        %v1248 = vld [vmem:[%s499 + $0x118] sm:$0xff]
        %v1249 = vld [vmem:[%s499 + $0x120] sm:$0xff]
        %v1250 = vld [vmem:[%s499 + $0x128] sm:$0xff]
        %v1251 = vld [vmem:[%s499 + $0x130] sm:$0xff]
        %v1252 = vld [vmem:[%s499 + $0x138] sm:$0xff]
        %v1253 = vld [vmem:[%s499 + $0x140] sm:$0xff]
        %v1254 = vld [vmem:[%s499 + $0x148] sm:$0xff]
        %v1255 = vld [vmem:[%s499 + $0x150] sm:$0xff]
        %v1256 = vld [vmem:[%s499 + $0x158] sm:$0xff]
        %v1257 = vld [vmem:[%s499 + $0x160] sm:$0xff]
        %v1258 = vld [vmem:[%s499 + $0x168] sm:$0xff]
        %v1259 = vld [vmem:[%s499 + $0x170] sm:$0xff]
        %v1260 = vld [vmem:[%s499 + $0x178] sm:$0xff]
        %v1261 = vld [vmem:[%s499 + $0x180] sm:$0xff]
        %v1262 = vld [vmem:[%s499 + $0x188] sm:$0xff]
        %v1263 = vld [vmem:[%s499 + $0x190] sm:$0xff]
        %v1264 = vld [vmem:[%s499 + $0x198] sm:$0xff]
        %v1265 = vld [vmem:[%s499 + $0x1a0] sm:$0xff]
        %v1266 = vld [vmem:[%s499 + $0x1a8] sm:$0xff]
        %v1267 = vld [vmem:[%s499 + $0x1b0] sm:$0xff]
        %v1268 = vld [vmem:[%s499 + $0x1b8] sm:$0xff]
        %v1269 = vld [vmem:[%s499 + $0x1c0] sm:$0xff]
        %v1270 = vld [vmem:[%s499 + $0x1c8] sm:$0xff]
        %v1271 = vld [vmem:[%s499 + $0x1d0] sm:$0xff]
        %v1272 = vld [vmem:[%s499 + $0x1d8] sm:$0xff]
        %v1273 = vld [vmem:[%s499 + $0x1e0] sm:$0xff]
        %v1274 = vld [vmem:[%s499 + $0x1e8] sm:$0xff]
        %v1275 = vld [vmem:[%s499 + $0x1f0] sm:$0xff]
        %v1276 = vld [vmem:[%s499 + $0x1f8] sm:$0xff]
        %1277 = vset.pattern.permute.xlu0 0
        %1278 = vperm.xlu0 %1277, %v1213
        %v1279 = vpop.permute.xlu0 %1278
        %1280 = vset.pattern.permute.xlu0 0
        %1281 = vperm.xlu0 %1280, %v1214
        %v1282 = vpop.permute.xlu0 %1281
        %1283 = vset.pattern.permute.xlu0 0
        %1284 = vperm.xlu0 %1283, %v1215
        %v1285 = vpop.permute.xlu0 %1284
        %1286 = vset.pattern.permute.xlu0 0
        %1287 = vperm.xlu0 %1286, %v1216
        %v1288 = vpop.permute.xlu0 %1287
        %1289 = vset.pattern.permute.xlu0 0
        %1290 = vperm.xlu0 %1289, %v1217
        %v1291 = vpop.permute.xlu0 %1290
        %1292 = vset.pattern.permute.xlu0 0
        %1293 = vperm.xlu0 %1292, %v1218
        %v1294 = vpop.permute.xlu0 %1293
        %1295 = vset.pattern.permute.xlu0 0
        %1296 = vperm.xlu0 %1295, %v1219
        %v1297 = vpop.permute.xlu0 %1296
        %1298 = vset.pattern.permute.xlu0 0
        %1299 = vperm.xlu0 %1298, %v1220
        %v1300 = vpop.permute.xlu0 %1299
        %1301 = vset.pattern.permute.xlu0 0
        %1302 = vperm.xlu0 %1301, %v1221
        %v1303 = vpop.permute.xlu0 %1302
        %1304 = vset.pattern.permute.xlu0 0
        %1305 = vperm.xlu0 %1304, %v1222
        %v1306 = vpop.permute.xlu0 %1305
        %1307 = vset.pattern.permute.xlu0 0
        %1308 = vperm.xlu0 %1307, %v1223
        %v1309 = vpop.permute.xlu0 %1308
        %1310 = vset.pattern.permute.xlu0 0
        %1311 = vperm.xlu0 %1310, %v1224
        %v1312 = vpop.permute.xlu0 %1311
        %1313 = vset.pattern.permute.xlu0 0
        %1314 = vperm.xlu0 %1313, %v1225
        %v1315 = vpop.permute.xlu0 %1314
        %1316 = vset.pattern.permute.xlu0 0
        %1317 = vperm.xlu0 %1316, %v1226
        %v1318 = vpop.permute.xlu0 %1317
        %1319 = vset.pattern.permute.xlu0 0
        %1320 = vperm.xlu0 %1319, %v1227
        %v1321 = vpop.permute.xlu0 %1320
        %1322 = vset.pattern.permute.xlu0 0
        %1323 = vperm.xlu0 %1322, %v1228
        %v1324 = vpop.permute.xlu0 %1323
        %1325 = vset.pattern.permute.xlu0 0
        %1326 = vperm.xlu0 %1325, %v1229
        %v1327 = vpop.permute.xlu0 %1326
        %1328 = vset.pattern.permute.xlu0 0
        %1329 = vperm.xlu0 %1328, %v1230
        %v1330 = vpop.permute.xlu0 %1329
        %1331 = vset.pattern.permute.xlu0 0
        %1332 = vperm.xlu0 %1331, %v1231
        %v1333 = vpop.permute.xlu0 %1332
        %1334 = vset.pattern.permute.xlu0 0
        %1335 = vperm.xlu0 %1334, %v1232
        %v1336 = vpop.permute.xlu0 %1335
        %1337 = vset.pattern.permute.xlu0 0
        %1338 = vperm.xlu0 %1337, %v1233
        %v1339 = vpop.permute.xlu0 %1338
        %1340 = vset.pattern.permute.xlu0 0
        %1341 = vperm.xlu0 %1340, %v1234
        %v1342 = vpop.permute.xlu0 %1341
        %1343 = vset.pattern.permute.xlu0 0
        %1344 = vperm.xlu0 %1343, %v1235
        %v1345 = vpop.permute.xlu0 %1344
        %1346 = vset.pattern.permute.xlu0 0
        %1347 = vperm.xlu0 %1346, %v1236
        %v1348 = vpop.permute.xlu0 %1347
        %1349 = vset.pattern.permute.xlu0 0
        %1350 = vperm.xlu0 %1349, %v1237
        %v1351 = vpop.permute.xlu0 %1350
        %1352 = vset.pattern.permute.xlu0 0
        %1353 = vperm.xlu0 %1352, %v1238
        %v1354 = vpop.permute.xlu0 %1353
        %1355 = vset.pattern.permute.xlu0 0
        %1356 = vperm.xlu0 %1355, %v1239
        %v1357 = vpop.permute.xlu0 %1356
        %1358 = vset.pattern.permute.xlu0 0
        %1359 = vperm.xlu0 %1358, %v1240
        %v1360 = vpop.permute.xlu0 %1359
        %1361 = vset.pattern.permute.xlu0 0
        %1362 = vperm.xlu0 %1361, %v1241
        %v1363 = vpop.permute.xlu0 %1362
        %1364 = vset.pattern.permute.xlu0 0
        %1365 = vperm.xlu0 %1364, %v1242
        %v1366 = vpop.permute.xlu0 %1365
        %1367 = vset.pattern.permute.xlu0 0
        %1368 = vperm.xlu0 %1367, %v1243
        %v1369 = vpop.permute.xlu0 %1368
        %1370 = vset.pattern.permute.xlu0 0
        %1371 = vperm.xlu0 %1370, %v1244
        %v1372 = vpop.permute.xlu0 %1371
        %1373 = vset.pattern.permute.xlu0 0
        %1374 = vperm.xlu0 %1373, %v1245
        %v1375 = vpop.permute.xlu0 %1374
        %1376 = vset.pattern.permute.xlu0 0
        %1377 = vperm.xlu0 %1376, %v1246
        %v1378 = vpop.permute.xlu0 %1377
        %1379 = vset.pattern.permute.xlu0 0
        %1380 = vperm.xlu0 %1379, %v1247
        %v1381 = vpop.permute.xlu0 %1380
        %1382 = vset.pattern.permute.xlu0 0
        %1383 = vperm.xlu0 %1382, %v1248
        %v1384 = vpop.permute.xlu0 %1383
        %1385 = vset.pattern.permute.xlu0 0
        %1386 = vperm.xlu0 %1385, %v1249
        %v1387 = vpop.permute.xlu0 %1386
        %1388 = vset.pattern.permute.xlu0 0
        %1389 = vperm.xlu0 %1388, %v1250
        %v1390 = vpop.permute.xlu0 %1389
        %1391 = vset.pattern.permute.xlu0 0
        %1392 = vperm.xlu0 %1391, %v1251
        %v1393 = vpop.permute.xlu0 %1392
        %1394 = vset.pattern.permute.xlu0 0
        %1395 = vperm.xlu0 %1394, %v1252
        %v1396 = vpop.permute.xlu0 %1395
        %1397 = vset.pattern.permute.xlu0 0
        %1398 = vperm.xlu0 %1397, %v1253
        %v1399 = vpop.permute.xlu0 %1398
        %1400 = vset.pattern.permute.xlu0 0
        %1401 = vperm.xlu0 %1400, %v1254
        %v1402 = vpop.permute.xlu0 %1401
        %1403 = vset.pattern.permute.xlu0 0
        %1404 = vperm.xlu0 %1403, %v1255
        %v1405 = vpop.permute.xlu0 %1404
        %1406 = vset.pattern.permute.xlu0 0
        %1407 = vperm.xlu0 %1406, %v1256
        %v1408 = vpop.permute.xlu0 %1407
        %1409 = vset.pattern.permute.xlu0 0
        %1410 = vperm.xlu0 %1409, %v1257
        %v1411 = vpop.permute.xlu0 %1410
        %1412 = vset.pattern.permute.xlu0 0
        %1413 = vperm.xlu0 %1412, %v1258
        %v1414 = vpop.permute.xlu0 %1413
        %1415 = vset.pattern.permute.xlu0 0
        %1416 = vperm.xlu0 %1415, %v1259
        %v1417 = vpop.permute.xlu0 %1416
        %1418 = vset.pattern.permute.xlu0 0
        %1419 = vperm.xlu0 %1418, %v1260
        %v1420 = vpop.permute.xlu0 %1419
        %1421 = vset.pattern.permute.xlu0 0
        %1422 = vperm.xlu0 %1421, %v1261
        %v1423 = vpop.permute.xlu0 %1422
        %1424 = vset.pattern.permute.xlu0 0
        %1425 = vperm.xlu0 %1424, %v1262
        %v1426 = vpop.permute.xlu0 %1425
        %1427 = vset.pattern.permute.xlu0 0
        %1428 = vperm.xlu0 %1427, %v1263
        %v1429 = vpop.permute.xlu0 %1428
        %1430 = vset.pattern.permute.xlu0 0
        %1431 = vperm.xlu0 %1430, %v1264
        %v1432 = vpop.permute.xlu0 %1431
        %1433 = vset.pattern.permute.xlu0 0
        %1434 = vperm.xlu0 %1433, %v1265
        %v1435 = vpop.permute.xlu0 %1434
        %1436 = vset.pattern.permute.xlu0 0
        %1437 = vperm.xlu0 %1436, %v1266
        %v1438 = vpop.permute.xlu0 %1437
        %1439 = vset.pattern.permute.xlu0 0
        %1440 = vperm.xlu0 %1439, %v1267
        %v1441 = vpop.permute.xlu0 %1440
        %1442 = vset.pattern.permute.xlu0 0
        %1443 = vperm.xlu0 %1442, %v1268
        %v1444 = vpop.permute.xlu0 %1443
        %1445 = vset.pattern.permute.xlu0 0
        %1446 = vperm.xlu0 %1445, %v1269
        %v1447 = vpop.permute.xlu0 %1446
        %1448 = vset.pattern.permute.xlu0 0
        %1449 = vperm.xlu0 %1448, %v1270
        %v1450 = vpop.permute.xlu0 %1449
        %1451 = vset.pattern.permute.xlu0 0
        %1452 = vperm.xlu0 %1451, %v1271
        %v1453 = vpop.permute.xlu0 %1452
        %1454 = vset.pattern.permute.xlu0 0
        %1455 = vperm.xlu0 %1454, %v1272
        %v1456 = vpop.permute.xlu0 %1455
        %1457 = vset.pattern.permute.xlu0 0
        %1458 = vperm.xlu0 %1457, %v1273
        %v1459 = vpop.permute.xlu0 %1458
        %1460 = vset.pattern.permute.xlu0 0
        %1461 = vperm.xlu0 %1460, %v1274
        %v1462 = vpop.permute.xlu0 %1461
        %1463 = vset.pattern.permute.xlu0 0
        %1464 = vperm.xlu0 %1463, %v1275
        %v1465 = vpop.permute.xlu0 %1464
        %1466 = vset.pattern.permute.xlu0 0
        %1467 = vperm.xlu0 %1466, %v1276
        %v1468 = vpop.permute.xlu0 %1467
        %vm1469 = vcmp.eq.s32.totalorder %v1279, %v571
        %vm1470 = vcmp.eq.s32.totalorder %v1279, %v572
        %vm1471 = vcmp.eq.s32.totalorder %v1282, %v571
        %vm1472 = vcmp.eq.s32.totalorder %v1282, %v572
        %vm1473 = vcmp.eq.s32.totalorder %v1285, %v571
        %vm1474 = vcmp.eq.s32.totalorder %v1285, %v572
        %vm1475 = vcmp.eq.s32.totalorder %v1288, %v571
        %vm1476 = vcmp.eq.s32.totalorder %v1288, %v572
        %vm1477 = vcmp.eq.s32.totalorder %v1291, %v571
        %vm1478 = vcmp.eq.s32.totalorder %v1291, %v572
        %vm1479 = vcmp.eq.s32.totalorder %v1294, %v571
        %vm1480 = vcmp.eq.s32.totalorder %v1294, %v572
        %vm1481 = vcmp.eq.s32.totalorder %v1297, %v571
        %vm1482 = vcmp.eq.s32.totalorder %v1297, %v572
        %vm1483 = vcmp.eq.s32.totalorder %v1300, %v571
        %vm1484 = vcmp.eq.s32.totalorder %v1300, %v572
        %vm1485 = vcmp.eq.s32.totalorder %v1303, %v571
        %vm1486 = vcmp.eq.s32.totalorder %v1303, %v572
        %vm1487 = vcmp.eq.s32.totalorder %v1306, %v571
        %vm1488 = vcmp.eq.s32.totalorder %v1306, %v572
        %vm1489 = vcmp.eq.s32.totalorder %v1309, %v571
        %vm1490 = vcmp.eq.s32.totalorder %v1309, %v572
        %vm1491 = vcmp.eq.s32.totalorder %v1312, %v571
        %vm1492 = vcmp.eq.s32.totalorder %v1312, %v572
        %vm1493 = vcmp.eq.s32.totalorder %v1315, %v571
        %vm1494 = vcmp.eq.s32.totalorder %v1315, %v572
        %vm1495 = vcmp.eq.s32.totalorder %v1318, %v571
        %vm1496 = vcmp.eq.s32.totalorder %v1318, %v572
        %vm1497 = vcmp.eq.s32.totalorder %v1321, %v571
        %vm1498 = vcmp.eq.s32.totalorder %v1321, %v572
        %vm1499 = vcmp.eq.s32.totalorder %v1324, %v571
        %vm1500 = vcmp.eq.s32.totalorder %v1324, %v572
        %vm1501 = vcmp.eq.s32.totalorder %v1327, %v571
        %vm1502 = vcmp.eq.s32.totalorder %v1327, %v572
        %vm1503 = vcmp.eq.s32.totalorder %v1330, %v571
        %vm1504 = vcmp.eq.s32.totalorder %v1330, %v572
        %vm1505 = vcmp.eq.s32.totalorder %v1333, %v571
        %vm1506 = vcmp.eq.s32.totalorder %v1333, %v572
        %vm1507 = vcmp.eq.s32.totalorder %v1336, %v571
        %vm1508 = vcmp.eq.s32.totalorder %v1336, %v572
        %vm1509 = vcmp.eq.s32.totalorder %v1339, %v571
        %vm1510 = vcmp.eq.s32.totalorder %v1339, %v572
        %vm1511 = vcmp.eq.s32.totalorder %v1342, %v571
        %vm1512 = vcmp.eq.s32.totalorder %v1342, %v572
        %vm1513 = vcmp.eq.s32.totalorder %v1345, %v571
        %vm1514 = vcmp.eq.s32.totalorder %v1345, %v572
        %vm1515 = vcmp.eq.s32.totalorder %v1348, %v571
        %vm1516 = vcmp.eq.s32.totalorder %v1348, %v572
        %vm1517 = vcmp.eq.s32.totalorder %v1351, %v571
        %vm1518 = vcmp.eq.s32.totalorder %v1351, %v572
        %vm1519 = vcmp.eq.s32.totalorder %v1354, %v571
        %vm1520 = vcmp.eq.s32.totalorder %v1354, %v572
        %vm1521 = vcmp.eq.s32.totalorder %v1357, %v571
        %vm1522 = vcmp.eq.s32.totalorder %v1357, %v572
        %vm1523 = vcmp.eq.s32.totalorder %v1360, %v571
        %vm1524 = vcmp.eq.s32.totalorder %v1360, %v572
        %vm1525 = vcmp.eq.s32.totalorder %v1363, %v571
        %vm1526 = vcmp.eq.s32.totalorder %v1363, %v572
        %vm1527 = vcmp.eq.s32.totalorder %v1366, %v571
        %vm1528 = vcmp.eq.s32.totalorder %v1366, %v572
        %vm1529 = vcmp.eq.s32.totalorder %v1369, %v571
        %vm1530 = vcmp.eq.s32.totalorder %v1369, %v572
        %vm1531 = vcmp.eq.s32.totalorder %v1372, %v571
        %vm1532 = vcmp.eq.s32.totalorder %v1372, %v572
        %vm1533 = vcmp.eq.s32.totalorder %v1375, %v571
        %vm1534 = vcmp.eq.s32.totalorder %v1375, %v572
        %vm1535 = vcmp.eq.s32.totalorder %v1378, %v571
        %vm1536 = vcmp.eq.s32.totalorder %v1378, %v572
        %vm1537 = vcmp.eq.s32.totalorder %v1381, %v571
        %vm1538 = vcmp.eq.s32.totalorder %v1381, %v572
        %vm1539 = vcmp.eq.s32.totalorder %v1384, %v571
        %vm1540 = vcmp.eq.s32.totalorder %v1384, %v572
        %vm1541 = vcmp.eq.s32.totalorder %v1387, %v571
        %vm1542 = vcmp.eq.s32.totalorder %v1387, %v572
        %vm1543 = vcmp.eq.s32.totalorder %v1390, %v571
        %vm1544 = vcmp.eq.s32.totalorder %v1390, %v572
        %vm1545 = vcmp.eq.s32.totalorder %v1393, %v571
        %vm1546 = vcmp.eq.s32.totalorder %v1393, %v572
        %vm1547 = vcmp.eq.s32.totalorder %v1396, %v571
        %vm1548 = vcmp.eq.s32.totalorder %v1396, %v572
        %vm1549 = vcmp.eq.s32.totalorder %v1399, %v571
        %vm1550 = vcmp.eq.s32.totalorder %v1399, %v572
        %vm1551 = vcmp.eq.s32.totalorder %v1402, %v571
        %vm1552 = vcmp.eq.s32.totalorder %v1402, %v572
        %vm1553 = vcmp.eq.s32.totalorder %v1405, %v571
        %vm1554 = vcmp.eq.s32.totalorder %v1405, %v572
        %vm1555 = vcmp.eq.s32.totalorder %v1408, %v571
        %vm1556 = vcmp.eq.s32.totalorder %v1408, %v572
        %vm1557 = vcmp.eq.s32.totalorder %v1411, %v571
        %vm1558 = vcmp.eq.s32.totalorder %v1411, %v572
        %vm1559 = vcmp.eq.s32.totalorder %v1414, %v571
        %vm1560 = vcmp.eq.s32.totalorder %v1414, %v572
        %vm1561 = vcmp.eq.s32.totalorder %v1417, %v571
        %vm1562 = vcmp.eq.s32.totalorder %v1417, %v572
        %vm1563 = vcmp.eq.s32.totalorder %v1420, %v571
        %vm1564 = vcmp.eq.s32.totalorder %v1420, %v572
        %vm1565 = vcmp.eq.s32.totalorder %v1423, %v571
        %vm1566 = vcmp.eq.s32.totalorder %v1423, %v572
        %vm1567 = vcmp.eq.s32.totalorder %v1426, %v571
        %vm1568 = vcmp.eq.s32.totalorder %v1426, %v572
        %vm1569 = vcmp.eq.s32.totalorder %v1429, %v571
        %vm1570 = vcmp.eq.s32.totalorder %v1429, %v572
        %vm1571 = vcmp.eq.s32.totalorder %v1432, %v571
        %vm1572 = vcmp.eq.s32.totalorder %v1432, %v572
        %vm1573 = vcmp.eq.s32.totalorder %v1435, %v571
        %vm1574 = vcmp.eq.s32.totalorder %v1435, %v572
        %vm1575 = vcmp.eq.s32.totalorder %v1438, %v571
        %vm1576 = vcmp.eq.s32.totalorder %v1438, %v572
        %vm1577 = vcmp.eq.s32.totalorder %v1441, %v571
        %vm1578 = vcmp.eq.s32.totalorder %v1441, %v572
        %vm1579 = vcmp.eq.s32.totalorder %v1444, %v571
        %vm1580 = vcmp.eq.s32.totalorder %v1444, %v572
        %vm1581 = vcmp.eq.s32.totalorder %v1447, %v571
        %vm1582 = vcmp.eq.s32.totalorder %v1447, %v572
        %vm1583 = vcmp.eq.s32.totalorder %v1450, %v571
        %vm1584 = vcmp.eq.s32.totalorder %v1450, %v572
        %vm1585 = vcmp.eq.s32.totalorder %v1453, %v571
        %vm1586 = vcmp.eq.s32.totalorder %v1453, %v572
        %vm1587 = vcmp.eq.s32.totalorder %v1456, %v571
        %vm1588 = vcmp.eq.s32.totalorder %v1456, %v572
        %vm1589 = vcmp.eq.s32.totalorder %v1459, %v571
        %vm1590 = vcmp.eq.s32.totalorder %v1459, %v572
        %vm1591 = vcmp.eq.s32.totalorder %v1462, %v571
        %vm1592 = vcmp.eq.s32.totalorder %v1462, %v572
        %vm1593 = vcmp.eq.s32.totalorder %v1465, %v571
        %vm1594 = vcmp.eq.s32.totalorder %v1465, %v572
        %vm1595 = vcmp.eq.s32.totalorder %v1468, %v571
        %vm1596 = vcmp.eq.s32.totalorder %v1468, %v572
        %v1597 = vsel %vm1469, 1, 0
        %v1598 = vsel %vm1470, 1, 0
        %v1599 = vsel %vm1471, 1, 0
        %v1600 = vsel %vm1472, 1, 0
        %v1601 = vsel %vm1473, 1, 0
        %v1602 = vsel %vm1474, 1, 0
        %v1603 = vsel %vm1475, 1, 0
        %v1604 = vsel %vm1476, 1, 0
        %v1605 = vsel %vm1477, 1, 0
        %v1606 = vsel %vm1478, 1, 0
        %v1607 = vsel %vm1479, 1, 0
        %v1608 = vsel %vm1480, 1, 0
        %v1609 = vsel %vm1481, 1, 0
        %v1610 = vsel %vm1482, 1, 0
        %v1611 = vsel %vm1483, 1, 0
        %v1612 = vsel %vm1484, 1, 0
        %v1613 = vsel %vm1485, 1, 0
        %v1614 = vsel %vm1486, 1, 0
        %v1615 = vsel %vm1487, 1, 0
        %v1616 = vsel %vm1488, 1, 0
        %v1617 = vsel %vm1489, 1, 0
        %v1618 = vsel %vm1490, 1, 0
        %v1619 = vsel %vm1491, 1, 0
        %v1620 = vsel %vm1492, 1, 0
        %v1621 = vsel %vm1493, 1, 0
        %v1622 = vsel %vm1494, 1, 0
        %v1623 = vsel %vm1495, 1, 0
        %v1624 = vsel %vm1496, 1, 0
        %v1625 = vsel %vm1497, 1, 0
        %v1626 = vsel %vm1498, 1, 0
        %v1627 = vsel %vm1499, 1, 0
        %v1628 = vsel %vm1500, 1, 0
        %v1629 = vsel %vm1501, 1, 0
        %v1630 = vsel %vm1502, 1, 0
        %v1631 = vsel %vm1503, 1, 0
        %v1632 = vsel %vm1504, 1, 0
        %v1633 = vsel %vm1505, 1, 0
        %v1634 = vsel %vm1506, 1, 0
        %v1635 = vsel %vm1507, 1, 0
        %v1636 = vsel %vm1508, 1, 0
        %v1637 = vsel %vm1509, 1, 0
        %v1638 = vsel %vm1510, 1, 0
        %v1639 = vsel %vm1511, 1, 0
        %v1640 = vsel %vm1512, 1, 0
        %v1641 = vsel %vm1513, 1, 0
        %v1642 = vsel %vm1514, 1, 0
        %v1643 = vsel %vm1515, 1, 0
        %v1644 = vsel %vm1516, 1, 0
        %v1645 = vsel %vm1517, 1, 0
        %v1646 = vsel %vm1518, 1, 0
        %v1647 = vsel %vm1519, 1, 0
        %v1648 = vsel %vm1520, 1, 0
        %v1649 = vsel %vm1521, 1, 0
        %v1650 = vsel %vm1522, 1, 0
        %v1651 = vsel %vm1523, 1, 0
        %v1652 = vsel %vm1524, 1, 0
        %v1653 = vsel %vm1525, 1, 0
        %v1654 = vsel %vm1526, 1, 0
        %v1655 = vsel %vm1527, 1, 0
        %v1656 = vsel %vm1528, 1, 0
        %v1657 = vsel %vm1529, 1, 0
        %v1658 = vsel %vm1530, 1, 0
        %v1659 = vsel %vm1531, 1, 0
        %v1660 = vsel %vm1532, 1, 0
        %v1661 = vsel %vm1533, 1, 0
        %v1662 = vsel %vm1534, 1, 0
        %v1663 = vsel %vm1535, 1, 0
        %v1664 = vsel %vm1536, 1, 0
        %v1665 = vsel %vm1537, 1, 0
        %v1666 = vsel %vm1538, 1, 0
        %v1667 = vsel %vm1539, 1, 0
        %v1668 = vsel %vm1540, 1, 0
        %v1669 = vsel %vm1541, 1, 0
        %v1670 = vsel %vm1542, 1, 0
        %v1671 = vsel %vm1543, 1, 0
        %v1672 = vsel %vm1544, 1, 0
        %v1673 = vsel %vm1545, 1, 0
        %v1674 = vsel %vm1546, 1, 0
        %v1675 = vsel %vm1547, 1, 0
        %v1676 = vsel %vm1548, 1, 0
        %v1677 = vsel %vm1549, 1, 0
        %v1678 = vsel %vm1550, 1, 0
        %v1679 = vsel %vm1551, 1, 0
        %v1680 = vsel %vm1552, 1, 0
        %v1681 = vsel %vm1553, 1, 0
        %v1682 = vsel %vm1554, 1, 0
        %v1683 = vsel %vm1555, 1, 0
        %v1684 = vsel %vm1556, 1, 0
        %v1685 = vsel %vm1557, 1, 0
        %v1686 = vsel %vm1558, 1, 0
        %v1687 = vsel %vm1559, 1, 0
        %v1688 = vsel %vm1560, 1, 0
        %v1689 = vsel %vm1561, 1, 0
        %v1690 = vsel %vm1562, 1, 0
        %v1691 = vsel %vm1563, 1, 0
        %v1692 = vsel %vm1564, 1, 0
        %v1693 = vsel %vm1565, 1, 0
        %v1694 = vsel %vm1566, 1, 0
        %v1695 = vsel %vm1567, 1, 0
        %v1696 = vsel %vm1568, 1, 0
        %v1697 = vsel %vm1569, 1, 0
        %v1698 = vsel %vm1570, 1, 0
        %v1699 = vsel %vm1571, 1, 0
        %v1700 = vsel %vm1572, 1, 0
        %v1701 = vsel %vm1573, 1, 0
        %v1702 = vsel %vm1574, 1, 0
        %v1703 = vsel %vm1575, 1, 0
        %v1704 = vsel %vm1576, 1, 0
        %v1705 = vsel %vm1577, 1, 0
        %v1706 = vsel %vm1578, 1, 0
        %v1707 = vsel %vm1579, 1, 0
        %v1708 = vsel %vm1580, 1, 0
        %v1709 = vsel %vm1581, 1, 0
        %v1710 = vsel %vm1582, 1, 0
        %v1711 = vsel %vm1583, 1, 0
        %v1712 = vsel %vm1584, 1, 0
        %v1713 = vsel %vm1585, 1, 0
        %v1714 = vsel %vm1586, 1, 0
        %v1715 = vsel %vm1587, 1, 0
        %v1716 = vsel %vm1588, 1, 0
        %v1717 = vsel %vm1589, 1, 0
        %v1718 = vsel %vm1590, 1, 0
        %v1719 = vsel %vm1591, 1, 0
        %v1720 = vsel %vm1592, 1, 0
        %v1721 = vsel %vm1593, 1, 0
        %v1722 = vsel %vm1594, 1, 0
        %v1723 = vsel %vm1595, 1, 0
        %v1724 = vsel %vm1596, 1, 0
        %v1725 = vcvt.s32.f32 %v1597
        %v1726 = vcvt.s32.f32 %v1598
        %v1727 = vcvt.s32.f32 %v1599
        %v1728 = vcvt.s32.f32 %v1600
        %v1729 = vcvt.s32.f32 %v1601
        %v1730 = vcvt.s32.f32 %v1602
        %v1731 = vcvt.s32.f32 %v1603
        %v1732 = vcvt.s32.f32 %v1604
        %v1733 = vcvt.s32.f32 %v1605
        %v1734 = vcvt.s32.f32 %v1606
        %v1735 = vcvt.s32.f32 %v1607
        %v1736 = vcvt.s32.f32 %v1608
        %v1737 = vcvt.s32.f32 %v1609
        %v1738 = vcvt.s32.f32 %v1610
        %v1739 = vcvt.s32.f32 %v1611
        %v1740 = vcvt.s32.f32 %v1612
        %v1741 = vcvt.s32.f32 %v1613
        %v1742 = vcvt.s32.f32 %v1614
        %v1743 = vcvt.s32.f32 %v1615
        %v1744 = vcvt.s32.f32 %v1616
        %v1745 = vcvt.s32.f32 %v1617
        %v1746 = vcvt.s32.f32 %v1618
        %v1747 = vcvt.s32.f32 %v1619
        %v1748 = vcvt.s32.f32 %v1620
        %v1749 = vcvt.s32.f32 %v1621
        %v1750 = vcvt.s32.f32 %v1622
        %v1751 = vcvt.s32.f32 %v1623
        %v1752 = vcvt.s32.f32 %v1624
        %v1753 = vcvt.s32.f32 %v1625
        %v1754 = vcvt.s32.f32 %v1626
        %v1755 = vcvt.s32.f32 %v1627
        %v1756 = vcvt.s32.f32 %v1628
        %v1757 = vcvt.s32.f32 %v1629
        %v1758 = vcvt.s32.f32 %v1630
        %v1759 = vcvt.s32.f32 %v1631
        %v1760 = vcvt.s32.f32 %v1632
        %v1761 = vcvt.s32.f32 %v1633
        %v1762 = vcvt.s32.f32 %v1634
        %v1763 = vcvt.s32.f32 %v1635
        %v1764 = vcvt.s32.f32 %v1636
        %v1765 = vcvt.s32.f32 %v1637
        %v1766 = vcvt.s32.f32 %v1638
        %v1767 = vcvt.s32.f32 %v1639
        %v1768 = vcvt.s32.f32 %v1640
        %v1769 = vcvt.s32.f32 %v1641
        %v1770 = vcvt.s32.f32 %v1642
        %v1771 = vcvt.s32.f32 %v1643
        %v1772 = vcvt.s32.f32 %v1644
        %v1773 = vcvt.s32.f32 %v1645
        %v1774 = vcvt.s32.f32 %v1646
        %v1775 = vcvt.s32.f32 %v1647
        %v1776 = vcvt.s32.f32 %v1648
        %v1777 = vcvt.s32.f32 %v1649
        %v1778 = vcvt.s32.f32 %v1650
        %v1779 = vcvt.s32.f32 %v1651
        %v1780 = vcvt.s32.f32 %v1652
        %v1781 = vcvt.s32.f32 %v1653
        %v1782 = vcvt.s32.f32 %v1654
        %v1783 = vcvt.s32.f32 %v1655
        %v1784 = vcvt.s32.f32 %v1656
        %v1785 = vcvt.s32.f32 %v1657
        %v1786 = vcvt.s32.f32 %v1658
        %v1787 = vcvt.s32.f32 %v1659
        %v1788 = vcvt.s32.f32 %v1660
        %v1789 = vcvt.s32.f32 %v1661
        %v1790 = vcvt.s32.f32 %v1662
        %v1791 = vcvt.s32.f32 %v1663
        %v1792 = vcvt.s32.f32 %v1664
        %v1793 = vcvt.s32.f32 %v1665
        %v1794 = vcvt.s32.f32 %v1666
        %v1795 = vcvt.s32.f32 %v1667
        %v1796 = vcvt.s32.f32 %v1668
        %v1797 = vcvt.s32.f32 %v1669
        %v1798 = vcvt.s32.f32 %v1670
        %v1799 = vcvt.s32.f32 %v1671
        %v1800 = vcvt.s32.f32 %v1672
        %v1801 = vcvt.s32.f32 %v1673
        %v1802 = vcvt.s32.f32 %v1674
        %v1803 = vcvt.s32.f32 %v1675
        %v1804 = vcvt.s32.f32 %v1676
        %v1805 = vcvt.s32.f32 %v1677
        %v1806 = vcvt.s32.f32 %v1678
        %v1807 = vcvt.s32.f32 %v1679
        %v1808 = vcvt.s32.f32 %v1680
        %v1809 = vcvt.s32.f32 %v1681
        %v1810 = vcvt.s32.f32 %v1682
        %v1811 = vcvt.s32.f32 %v1683
        %v1812 = vcvt.s32.f32 %v1684
        %v1813 = vcvt.s32.f32 %v1685
        %v1814 = vcvt.s32.f32 %v1686
        %v1815 = vcvt.s32.f32 %v1687
        %v1816 = vcvt.s32.f32 %v1688
        %v1817 = vcvt.s32.f32 %v1689
        %v1818 = vcvt.s32.f32 %v1690
        %v1819 = vcvt.s32.f32 %v1691
        %v1820 = vcvt.s32.f32 %v1692
        %v1821 = vcvt.s32.f32 %v1693
        %v1822 = vcvt.s32.f32 %v1694
        %v1823 = vcvt.s32.f32 %v1695
        %v1824 = vcvt.s32.f32 %v1696
        %v1825 = vcvt.s32.f32 %v1697
        %v1826 = vcvt.s32.f32 %v1698
        %v1827 = vcvt.s32.f32 %v1699
        %v1828 = vcvt.s32.f32 %v1700
        %v1829 = vcvt.s32.f32 %v1701
        %v1830 = vcvt.s32.f32 %v1702
        %v1831 = vcvt.s32.f32 %v1703
        %v1832 = vcvt.s32.f32 %v1704
        %v1833 = vcvt.s32.f32 %v1705
        %v1834 = vcvt.s32.f32 %v1706
        %v1835 = vcvt.s32.f32 %v1707
        %v1836 = vcvt.s32.f32 %v1708
        %v1837 = vcvt.s32.f32 %v1709
        %v1838 = vcvt.s32.f32 %v1710
        %v1839 = vcvt.s32.f32 %v1711
        %v1840 = vcvt.s32.f32 %v1712
        %v1841 = vcvt.s32.f32 %v1713
        %v1842 = vcvt.s32.f32 %v1714
        %v1843 = vcvt.s32.f32 %v1715
        %v1844 = vcvt.s32.f32 %v1716
        %v1845 = vcvt.s32.f32 %v1717
        %v1846 = vcvt.s32.f32 %v1718
        %v1847 = vcvt.s32.f32 %v1719
        %v1848 = vcvt.s32.f32 %v1720
        %v1849 = vcvt.s32.f32 %v1721
        %v1850 = vcvt.s32.f32 %v1722
        %v1851 = vcvt.s32.f32 %v1723
        %v1852 = vcvt.s32.f32 %v1724
        %v1853 = vpack.c.bf16 %v1727, %v1725
        %v1854 = vpack.c.bf16 %v1728, %v1726
        %v1855 = vpack.c.bf16 %v1731, %v1729
        %v1856 = vpack.c.bf16 %v1732, %v1730
        %v1857 = vpack.c.bf16 %v1735, %v1733
        %v1858 = vpack.c.bf16 %v1736, %v1734
        %v1859 = vpack.c.bf16 %v1739, %v1737
        %v1860 = vpack.c.bf16 %v1740, %v1738
        %v1861 = vpack.c.bf16 %v1743, %v1741
        %v1862 = vpack.c.bf16 %v1744, %v1742
        %v1863 = vpack.c.bf16 %v1747, %v1745
        %v1864 = vpack.c.bf16 %v1748, %v1746
        %v1865 = vpack.c.bf16 %v1751, %v1749
        %v1866 = vpack.c.bf16 %v1752, %v1750
        %v1867 = vpack.c.bf16 %v1755, %v1753
        %v1868 = vpack.c.bf16 %v1756, %v1754
        %v1869 = vpack.c.bf16 %v1759, %v1757
        %v1870 = vpack.c.bf16 %v1760, %v1758
        %v1871 = vpack.c.bf16 %v1763, %v1761
        %v1872 = vpack.c.bf16 %v1764, %v1762
        %v1873 = vpack.c.bf16 %v1767, %v1765
        %v1874 = vpack.c.bf16 %v1768, %v1766
        %v1875 = vpack.c.bf16 %v1771, %v1769
        %v1876 = vpack.c.bf16 %v1772, %v1770
        %v1877 = vpack.c.bf16 %v1775, %v1773
        %v1878 = vpack.c.bf16 %v1776, %v1774
        %v1879 = vpack.c.bf16 %v1779, %v1777
        %v1880 = vpack.c.bf16 %v1780, %v1778
        %v1881 = vpack.c.bf16 %v1783, %v1781
        %v1882 = vpack.c.bf16 %v1784, %v1782
        %v1883 = vpack.c.bf16 %v1787, %v1785
        %v1884 = vpack.c.bf16 %v1788, %v1786
        %v1885 = vpack.c.bf16 %v1791, %v1789
        %v1886 = vpack.c.bf16 %v1792, %v1790
        %v1887 = vpack.c.bf16 %v1795, %v1793
        %v1888 = vpack.c.bf16 %v1796, %v1794
        %v1889 = vpack.c.bf16 %v1799, %v1797
        %v1890 = vpack.c.bf16 %v1800, %v1798
        %v1891 = vpack.c.bf16 %v1803, %v1801
        %v1892 = vpack.c.bf16 %v1804, %v1802
        %v1893 = vpack.c.bf16 %v1807, %v1805
        %v1894 = vpack.c.bf16 %v1808, %v1806
        %v1895 = vpack.c.bf16 %v1811, %v1809
        %v1896 = vpack.c.bf16 %v1812, %v1810
        %v1897 = vpack.c.bf16 %v1815, %v1813
        %v1898 = vpack.c.bf16 %v1816, %v1814
        %v1899 = vpack.c.bf16 %v1819, %v1817
        %v1900 = vpack.c.bf16 %v1820, %v1818
        %v1901 = vpack.c.bf16 %v1823, %v1821
        %v1902 = vpack.c.bf16 %v1824, %v1822
        %v1903 = vpack.c.bf16 %v1827, %v1825
        %v1904 = vpack.c.bf16 %v1828, %v1826
        %v1905 = vpack.c.bf16 %v1831, %v1829
        %v1906 = vpack.c.bf16 %v1832, %v1830
        %v1907 = vpack.c.bf16 %v1835, %v1833
        %v1908 = vpack.c.bf16 %v1836, %v1834
        %v1909 = vpack.c.bf16 %v1839, %v1837
        %v1910 = vpack.c.bf16 %v1840, %v1838
        %v1911 = vpack.c.bf16 %v1843, %v1841
        %v1912 = vpack.c.bf16 %v1844, %v1842
        %v1913 = vpack.c.bf16 %v1847, %v1845
        %v1914 = vpack.c.bf16 %v1848, %v1846
        %v1915 = vpack.c.bf16 %v1851, %v1849
        %v1916 = vpack.c.bf16 %v1852, %v1850
        %v1917 = vld [vmem:[%s2] sm:$0xf]
        %v1918 = vld [vmem:[%s2 + $0x4] sm:$0xf]
        %v1919 = vld [vmem:[%s2 + $0x8] sm:$0xf]
        %v1920 = vld [vmem:[%s2 + $0xc] sm:$0xf]
        %v1921 = vld [vmem:[%s2 + $0x10] sm:$0xf]
        %v1922 = vld [vmem:[%s2 + $0x14] sm:$0xf]
        %v1923 = vld [vmem:[%s2 + $0x18] sm:$0xf]
        %v1924 = vld [vmem:[%s2 + $0x1c] sm:$0xf]
        %v1925 = vld [vmem:[%s2 + $0x20] sm:$0xf]
        %v1926 = vld [vmem:[%s2 + $0x24] sm:$0xf]
        %v1927 = vld [vmem:[%s2 + $0x28] sm:$0xf]
        %v1928 = vld [vmem:[%s2 + $0x2c] sm:$0xf]
        %v1929 = vld [vmem:[%s2 + $0x30] sm:$0xf]
        %v1930 = vld [vmem:[%s2 + $0x34] sm:$0xf]
        %v1931 = vld [vmem:[%s2 + $0x38] sm:$0xf]
        %v1932 = vld [vmem:[%s2 + $0x3c] sm:$0xf]
        %v1933 = vld [vmem:[%s2 + $0x40] sm:$0xf]
        %v1934 = vld [vmem:[%s2 + $0x44] sm:$0xf]
        %v1935 = vld [vmem:[%s2 + $0x48] sm:$0xf]
        %v1936 = vld [vmem:[%s2 + $0x4c] sm:$0xf]
        %v1937 = vld [vmem:[%s2 + $0x50] sm:$0xf]
        %v1938 = vld [vmem:[%s2 + $0x54] sm:$0xf]
        %v1939 = vld [vmem:[%s2 + $0x58] sm:$0xf]
        %v1940 = vld [vmem:[%s2 + $0x5c] sm:$0xf]
        %v1941 = vld [vmem:[%s2 + $0x60] sm:$0xf]
        %v1942 = vld [vmem:[%s2 + $0x64] sm:$0xf]
        %v1943 = vld [vmem:[%s2 + $0x68] sm:$0xf]
        %v1944 = vld [vmem:[%s2 + $0x6c] sm:$0xf]
        %v1945 = vld [vmem:[%s2 + $0x70] sm:$0xf]
        %v1946 = vld [vmem:[%s2 + $0x74] sm:$0xf]
        %v1947 = vld [vmem:[%s2 + $0x78] sm:$0xf]
        %v1948 = vld [vmem:[%s2 + $0x7c] sm:$0xf]
        %v1949 = vld [vmem:[%s4] sm:$0x1]
        %v1951 = vlaneseq
        %v1952 = vshrl.u32 %v1951, 7
        %v1953 = vsub.s32 0, %v1952
        %v1954 = vrot.slane %v1949, %v1953
        %v1988 = vunpack.c.l.b16 %v1917
        %v1989 = vunpack.c.l.b16 %v1918
        %v1990 = vunpack.c.l.b16 %v1919
        %v1991 = vunpack.c.l.b16 %v1920
        %v1992 = vunpack.c.l.b16 %v1921
        %v1993 = vunpack.c.l.b16 %v1922
        %v1994 = vunpack.c.l.b16 %v1923
        %v1995 = vunpack.c.l.b16 %v1924
        %v1996 = vunpack.c.l.b16 %v1925
        %v1997 = vunpack.c.l.b16 %v1926
        %v1998 = vunpack.c.l.b16 %v1927
        %v1999 = vunpack.c.l.b16 %v1928
        %v2000 = vunpack.c.l.b16 %v1929
        %v2001 = vunpack.c.l.b16 %v1930
        %v2002 = vunpack.c.l.b16 %v1931
        %v2003 = vunpack.c.l.b16 %v1932
        %v2004 = vunpack.c.l.b16 %v1933
        %v2005 = vunpack.c.l.b16 %v1934
        %v2006 = vunpack.c.l.b16 %v1935
        %v2007 = vunpack.c.l.b16 %v1936
        %v2008 = vunpack.c.l.b16 %v1937
        %v2009 = vunpack.c.l.b16 %v1938
        %v2010 = vunpack.c.l.b16 %v1939
        %v2011 = vunpack.c.l.b16 %v1940
        %v2012 = vunpack.c.l.b16 %v1941
        %v2013 = vunpack.c.l.b16 %v1942
        %v2014 = vunpack.c.l.b16 %v1943
        %v2015 = vunpack.c.l.b16 %v1944
        %v2016 = vunpack.c.l.b16 %v1945
        %v2017 = vunpack.c.l.b16 %v1946
        %v2018 = vunpack.c.l.b16 %v1947
        %v2019 = vunpack.c.l.b16 %v1948
        %v2020 = vpack.c.b16 %v1989, %v1988
        %v2021 = vpack.c.b16 %v1991, %v1990
        %v2022 = vpack.c.b16 %v1993, %v1992
        %v2023 = vpack.c.b16 %v1995, %v1994
        %v2024 = vpack.c.b16 %v1997, %v1996
        %v2025 = vpack.c.b16 %v1999, %v1998
        %v2026 = vpack.c.b16 %v2001, %v2000
        %v2027 = vpack.c.b16 %v2003, %v2002
        %v2028 = vpack.c.b16 %v2005, %v2004
        %v2029 = vpack.c.b16 %v2007, %v2006
        %v2030 = vpack.c.b16 %v2009, %v2008
        %v2031 = vpack.c.b16 %v2011, %v2010
        %v2032 = vpack.c.b16 %v2013, %v2012
        %v2033 = vpack.c.b16 %v2015, %v2014
        %v2034 = vpack.c.b16 %v2017, %v2016
        %v2035 = vpack.c.b16 %v2019, %v2018
        %2052 = vmatprep.subr.bf16.mxu0 0
        %2053 = vmatpush1.bf16.msra.mxu0 %v2027
        %2054 = vmatprep.subr.bf16.mxu0 0
        %2055 = vmatpush1.bf16.msra.mxu0 %v2026
        %2056 = vmatprep.subr.bf16.mxu0 0
        %2057 = vmatpush1.bf16.msra.mxu0 %v2025
        %2058 = vmatprep.subr.bf16.mxu0 0
        %2059 = vmatpush1.bf16.msra.mxu0 %v2024
        %2060 = vmatprep.subr.bf16.mxu0 0
        %2061 = vmatpush1.bf16.msra.mxu0 %v2023
        %2062 = vmatprep.subr.bf16.mxu0 0
        %2063 = vmatpush1.bf16.msra.mxu0 %v2022
        %2064 = vmatprep.subr.bf16.mxu0 0
        %2065 = vmatpush1.bf16.msra.mxu0 %v2021
        %2066 = vmatprep.subr.bf16.mxu0 0
        %2067 = vmatpush1.bf16.msra.mxu0 %v2020
        %2068 = vmatprep.subr.bf16.mxu0 0
        %2069 = vmatpush2.bf16.msra.mxu0 %v2035
        %2070 = vmatprep.subr.bf16.mxu0 0
        %2071 = vmatpush2.bf16.msra.mxu0 %v2034
        %2072 = vmatprep.subr.bf16.mxu0 0
        %2073 = vmatpush2.bf16.msra.mxu0 %v2033
        %2074 = vmatprep.subr.bf16.mxu0 0
        %2075 = vmatpush2.bf16.msra.mxu0 %v2032
        %2076 = vmatprep.subr.bf16.mxu0 0
        %2077 = vmatpush2.bf16.msra.mxu0 %v2031
        %2078 = vmatprep.subr.bf16.mxu0 0
        %2079 = vmatpush2.bf16.msra.mxu0 %v2030
        %2080 = vmatprep.subr.bf16.mxu0 0
        %2081 = vmatpush2.bf16.msra.mxu0 %v2029
        %2082 = vmatprep.subr.bf16.mxu0 0
        %2083 = vmatpush2.bf16.msra.mxu0 %v2028
        %2084 = vmatprep.mubr.bf16.mxu0 %v1150
        %2085 = vmatmul.mubr.bf16.gmra.mxu0 %v1149
        %v2086 = vpop.f32.mrf.mxu0
        %v2087 = vadd.f32 %v1954, %v2086
        %v2088 = vpop.f32.mrf.mxu0
        %v2089 = vpop.f32.mrf.mxu0
        %v2090 = vadd.f32 %v1954, %v2089
        %v2091 = vpop.f32.mrf.mxu0
        %2092 = vmatprep.mubr.bf16.mxu0 %v1152
        %2093 = vmatmul.mubr.bf16.gmra.mxu0 %v1151
        %v2094 = vpop.f32.mrf.mxu0
        %v2095 = vadd.f32 %v1954, %v2094
        %v2096 = vpop.f32.mrf.mxu0
        %v2097 = vpop.f32.mrf.mxu0
        %v2098 = vadd.f32 %v1954, %v2097
        %v2099 = vpop.f32.mrf.mxu0
        %2100 = vmatprep.mubr.bf16.mxu0 %v1154
        %2101 = vmatmul.mubr.bf16.gmra.mxu0 %v1153
        %v2102 = vpop.f32.mrf.mxu0
        %v2103 = vadd.f32 %v1954, %v2102
        %v2104 = vpop.f32.mrf.mxu0
        %v2105 = vpop.f32.mrf.mxu0
        %v2106 = vadd.f32 %v1954, %v2105
        %v2107 = vpop.f32.mrf.mxu0
        %2108 = vmatprep.mubr.bf16.mxu0 %v1156
        %2109 = vmatmul.mubr.bf16.gmra.mxu0 %v1155
        %v2110 = vpop.f32.mrf.mxu0
        %v2111 = vadd.f32 %v1954, %v2110
        %v2112 = vpop.f32.mrf.mxu0
        %v2113 = vpop.f32.mrf.mxu0
        %v2114 = vadd.f32 %v1954, %v2113
        %v2115 = vpop.f32.mrf.mxu0
        %2116 = vmatprep.mubr.bf16.mxu0 %v1158
        %2117 = vmatmul.mubr.bf16.gmra.mxu0 %v1157
        %v2118 = vpop.f32.mrf.mxu0
        %v2119 = vadd.f32 %v1954, %v2118
        %v2120 = vpop.f32.mrf.mxu0
        %v2121 = vpop.f32.mrf.mxu0
        %v2122 = vadd.f32 %v1954, %v2121
        %v2123 = vpop.f32.mrf.mxu0
        %2124 = vmatprep.mubr.bf16.mxu0 %v1160
        %2125 = vmatmul.mubr.bf16.gmra.mxu0 %v1159
        %v2126 = vpop.f32.mrf.mxu0
        %v2127 = vadd.f32 %v1954, %v2126
        %v2128 = vpop.f32.mrf.mxu0
        %v2129 = vpop.f32.mrf.mxu0
        %v2130 = vadd.f32 %v1954, %v2129
        %v2131 = vpop.f32.mrf.mxu0
        %2132 = vmatprep.mubr.bf16.mxu0 %v1162
        %2133 = vmatmul.mubr.bf16.gmra.mxu0 %v1161
        %v2134 = vpop.f32.mrf.mxu0
        %v2135 = vadd.f32 %v1954, %v2134
        %v2136 = vpop.f32.mrf.mxu0
        %v2137 = vpop.f32.mrf.mxu0
        %v2138 = vadd.f32 %v1954, %v2137
        %v2139 = vpop.f32.mrf.mxu0
        %2140 = vmatprep.mubr.bf16.mxu0 %v1164
        %2141 = vmatmul.mubr.bf16.gmra.mxu0 %v1163
        %v2142 = vpop.f32.mrf.mxu0
        %v2143 = vadd.f32 %v1954, %v2142
        %v2144 = vpop.f32.mrf.mxu0
        %v2145 = vpop.f32.mrf.mxu0
        %v2146 = vadd.f32 %v1954, %v2145
        %v2147 = vpop.f32.mrf.mxu0
        %2148 = vmatprep.mubr.bf16.mxu0 %v1166
        %2149 = vmatmul.mubr.bf16.gmra.mxu0 %v1165
        %v2150 = vpop.f32.mrf.mxu0
        %v2151 = vadd.f32 %v1954, %v2150
        %v2152 = vpop.f32.mrf.mxu0
        %v2153 = vpop.f32.mrf.mxu0
        %v2154 = vadd.f32 %v1954, %v2153
        %v2155 = vpop.f32.mrf.mxu0
        %2156 = vmatprep.mubr.bf16.mxu0 %v1168
        %2157 = vmatmul.mubr.bf16.gmra.mxu0 %v1167
        %v2158 = vpop.f32.mrf.mxu0
        %v2159 = vadd.f32 %v1954, %v2158
        %v2160 = vpop.f32.mrf.mxu0
        %v2161 = vpop.f32.mrf.mxu0
        %v2162 = vadd.f32 %v1954, %v2161
        %v2163 = vpop.f32.mrf.mxu0
        %2164 = vmatprep.mubr.bf16.mxu0 %v1170
        %2165 = vmatmul.mubr.bf16.gmra.mxu0 %v1169
        %v2166 = vpop.f32.mrf.mxu0
        %v2167 = vadd.f32 %v1954, %v2166
        %v2168 = vpop.f32.mrf.mxu0
        %v2169 = vpop.f32.mrf.mxu0
        %v2170 = vadd.f32 %v1954, %v2169
        %v2171 = vpop.f32.mrf.mxu0
        %2172 = vmatprep.mubr.bf16.mxu0 %v1172
        %2173 = vmatmul.mubr.bf16.gmra.mxu0 %v1171
        %v2174 = vpop.f32.mrf.mxu0
        %v2175 = vadd.f32 %v1954, %v2174
        %v2176 = vpop.f32.mrf.mxu0
        %v2177 = vpop.f32.mrf.mxu0
        %v2178 = vadd.f32 %v1954, %v2177
        %v2179 = vpop.f32.mrf.mxu0
        %2180 = vmatprep.mubr.bf16.mxu0 %v1174
        %2181 = vmatmul.mubr.bf16.gmra.mxu0 %v1173
        %v2182 = vpop.f32.mrf.mxu0
        %v2183 = vadd.f32 %v1954, %v2182
        %v2184 = vpop.f32.mrf.mxu0
        %v2185 = vpop.f32.mrf.mxu0
        %v2186 = vadd.f32 %v1954, %v2185
        %v2187 = vpop.f32.mrf.mxu0
        %2188 = vmatprep.mubr.bf16.mxu0 %v1176
        %2189 = vmatmul.mubr.bf16.gmra.mxu0 %v1175
        %v2190 = vpop.f32.mrf.mxu0
        %v2191 = vadd.f32 %v1954, %v2190
        %v2192 = vpop.f32.mrf.mxu0
        %v2193 = vpop.f32.mrf.mxu0
        %v2194 = vadd.f32 %v1954, %v2193
        %v2195 = vpop.f32.mrf.mxu0
        %2196 = vmatprep.mubr.bf16.mxu0 %v1178
        %2197 = vmatmul.mubr.bf16.gmra.mxu0 %v1177
        %v2198 = vpop.f32.mrf.mxu0
        %v2199 = vadd.f32 %v1954, %v2198
        %v2200 = vpop.f32.mrf.mxu0
        %v2201 = vpop.f32.mrf.mxu0
        %v2202 = vadd.f32 %v1954, %v2201
        %v2203 = vpop.f32.mrf.mxu0
        %2204 = vmatprep.mubr.bf16.mxu0 %v1180
        %2205 = vmatmul.mubr.bf16.gmra.mxu0 %v1179
        %v2206 = vpop.f32.mrf.mxu0
        %v2207 = vadd.f32 %v1954, %v2206
        %v2208 = vpop.f32.mrf.mxu0
        %v2209 = vpop.f32.mrf.mxu0
        %v2210 = vadd.f32 %v1954, %v2209
        %v2211 = vpop.f32.mrf.mxu0
        %2212 = vmatprep.mubr.bf16.mxu0 %v1182
        %2213 = vmatmul.mubr.bf16.gmra.mxu0 %v1181
        %v2214 = vpop.f32.mrf.mxu0
        %v2215 = vadd.f32 %v1954, %v2214
        %v2216 = vpop.f32.mrf.mxu0
        %v2217 = vpop.f32.mrf.mxu0
        %v2218 = vadd.f32 %v1954, %v2217
        %v2219 = vpop.f32.mrf.mxu0
        %2220 = vmatprep.mubr.bf16.mxu0 %v1184
        %2221 = vmatmul.mubr.bf16.gmra.mxu0 %v1183
        %v2222 = vpop.f32.mrf.mxu0
        %v2223 = vadd.f32 %v1954, %v2222
        %v2224 = vpop.f32.mrf.mxu0
        %v2225 = vpop.f32.mrf.mxu0
        %v2226 = vadd.f32 %v1954, %v2225
        %v2227 = vpop.f32.mrf.mxu0
        %2228 = vmatprep.mubr.bf16.mxu0 %v1186
        %2229 = vmatmul.mubr.bf16.gmra.mxu0 %v1185
        %v2230 = vpop.f32.mrf.mxu0
        %v2231 = vadd.f32 %v1954, %v2230
        %v2232 = vpop.f32.mrf.mxu0
        %v2233 = vpop.f32.mrf.mxu0
        %v2234 = vadd.f32 %v1954, %v2233
        %v2235 = vpop.f32.mrf.mxu0
        %2236 = vmatprep.mubr.bf16.mxu0 %v1188
        %2237 = vmatmul.mubr.bf16.gmra.mxu0 %v1187
        %v2238 = vpop.f32.mrf.mxu0
        %v2239 = vadd.f32 %v1954, %v2238
        %v2240 = vpop.f32.mrf.mxu0
        %v2241 = vpop.f32.mrf.mxu0
        %v2242 = vadd.f32 %v1954, %v2241
        %v2243 = vpop.f32.mrf.mxu0
        %2244 = vmatprep.mubr.bf16.mxu0 %v1190
        %2245 = vmatmul.mubr.bf16.gmra.mxu0 %v1189
        %v2246 = vpop.f32.mrf.mxu0
        %v2247 = vadd.f32 %v1954, %v2246
        %v2248 = vpop.f32.mrf.mxu0
        %v2249 = vpop.f32.mrf.mxu0
        %v2250 = vadd.f32 %v1954, %v2249
        %v2251 = vpop.f32.mrf.mxu0
        %2252 = vmatprep.mubr.bf16.mxu0 %v1192
        %2253 = vmatmul.mubr.bf16.gmra.mxu0 %v1191
        %v2254 = vpop.f32.mrf.mxu0
        %v2255 = vadd.f32 %v1954, %v2254
        %v2256 = vpop.f32.mrf.mxu0
        %v2257 = vpop.f32.mrf.mxu0
        %v2258 = vadd.f32 %v1954, %v2257
        %v2259 = vpop.f32.mrf.mxu0
        %2260 = vmatprep.mubr.bf16.mxu0 %v1194
        %2261 = vmatmul.mubr.bf16.gmra.mxu0 %v1193
        %v2262 = vpop.f32.mrf.mxu0
        %v2263 = vadd.f32 %v1954, %v2262
        %v2264 = vpop.f32.mrf.mxu0
        %v2265 = vpop.f32.mrf.mxu0
        %v2266 = vadd.f32 %v1954, %v2265
        %v2267 = vpop.f32.mrf.mxu0
        %2268 = vmatprep.mubr.bf16.mxu0 %v1196
        %2269 = vmatmul.mubr.bf16.gmra.mxu0 %v1195
        %v2270 = vpop.f32.mrf.mxu0
        %v2271 = vadd.f32 %v1954, %v2270
        %v2272 = vpop.f32.mrf.mxu0
        %v2273 = vpop.f32.mrf.mxu0
        %v2274 = vadd.f32 %v1954, %v2273
        %v2275 = vpop.f32.mrf.mxu0
        %2276 = vmatprep.mubr.bf16.mxu0 %v1198
        %2277 = vmatmul.mubr.bf16.gmra.mxu0 %v1197
        %v2278 = vpop.f32.mrf.mxu0
        %v2279 = vadd.f32 %v1954, %v2278
        %v2280 = vpop.f32.mrf.mxu0
        %v2281 = vpop.f32.mrf.mxu0
        %v2282 = vadd.f32 %v1954, %v2281
        %v2283 = vpop.f32.mrf.mxu0
        %2284 = vmatprep.mubr.bf16.mxu0 %v1200
        %2285 = vmatmul.mubr.bf16.gmra.mxu0 %v1199
        %v2286 = vpop.f32.mrf.mxu0
        %v2287 = vadd.f32 %v1954, %v2286
        %v2288 = vpop.f32.mrf.mxu0
        %v2289 = vpop.f32.mrf.mxu0
        %v2290 = vadd.f32 %v1954, %v2289
        %v2291 = vpop.f32.mrf.mxu0
        %2292 = vmatprep.mubr.bf16.mxu0 %v1202
        %2293 = vmatmul.mubr.bf16.gmra.mxu0 %v1201
        %v2294 = vpop.f32.mrf.mxu0
        %v2295 = vadd.f32 %v1954, %v2294
        %v2296 = vpop.f32.mrf.mxu0
        %v2297 = vpop.f32.mrf.mxu0
        %v2298 = vadd.f32 %v1954, %v2297
        %v2299 = vpop.f32.mrf.mxu0
        %2300 = vmatprep.mubr.bf16.mxu0 %v1204
        %2301 = vmatmul.mubr.bf16.gmra.mxu0 %v1203
        %v2302 = vpop.f32.mrf.mxu0
        %v2303 = vadd.f32 %v1954, %v2302
        %v2304 = vpop.f32.mrf.mxu0
        %v2305 = vpop.f32.mrf.mxu0
        %v2306 = vadd.f32 %v1954, %v2305
        %v2307 = vpop.f32.mrf.mxu0
        %2308 = vmatprep.mubr.bf16.mxu0 %v1206
        %2309 = vmatmul.mubr.bf16.gmra.mxu0 %v1205
        %v2310 = vpop.f32.mrf.mxu0
        %v2311 = vadd.f32 %v1954, %v2310
        %v2312 = vpop.f32.mrf.mxu0
        %v2313 = vpop.f32.mrf.mxu0
        %v2314 = vadd.f32 %v1954, %v2313
        %v2315 = vpop.f32.mrf.mxu0
        %2316 = vmatprep.mubr.bf16.mxu0 %v1208
        %2317 = vmatmul.mubr.bf16.gmra.mxu0 %v1207
        %v2318 = vpop.f32.mrf.mxu0
        %v2319 = vadd.f32 %v1954, %v2318
        %v2320 = vpop.f32.mrf.mxu0
        %v2321 = vpop.f32.mrf.mxu0
        %v2322 = vadd.f32 %v1954, %v2321
        %v2323 = vpop.f32.mrf.mxu0
        %2324 = vmatprep.mubr.bf16.mxu0 %v1210
        %2325 = vmatmul.mubr.bf16.gmra.mxu0 %v1209
        %v2326 = vpop.f32.mrf.mxu0
        %v2327 = vadd.f32 %v1954, %v2326
        %v2328 = vpop.f32.mrf.mxu0
        %v2329 = vpop.f32.mrf.mxu0
        %v2330 = vadd.f32 %v1954, %v2329
        %v2331 = vpop.f32.mrf.mxu0
        %2332 = vmatprep.mubr.bf16.mxu0 %v1212
        %2333 = vmatmul.mubr.bf16.gmra.mxu0 %v1211
        %v2334 = vpop.f32.mrf.mxu0
        %v2335 = vadd.f32 %v1954, %v2334
        %v2336 = vpop.f32.mrf.mxu0
        %v2337 = vpop.f32.mrf.mxu0
        %v2338 = vadd.f32 %v1954, %v2337
        %v2339 = vpop.f32.mrf.mxu0
        %2340 = vdwg.mxu0
        %v2341 = vmax.f32 %v2087, 0.0
        %v2342 = vmax.f32 %v2090, 0.0
        %v2343 = vmax.f32 %v2095, 0.0
        %v2344 = vmax.f32 %v2098, 0.0
        %v2345 = vmax.f32 %v2103, 0.0
        %v2346 = vmax.f32 %v2106, 0.0
        %v2347 = vmax.f32 %v2111, 0.0
        %v2348 = vmax.f32 %v2114, 0.0
        %v2349 = vmax.f32 %v2119, 0.0
        %v2350 = vmax.f32 %v2122, 0.0
        %v2351 = vmax.f32 %v2127, 0.0
        %v2352 = vmax.f32 %v2130, 0.0
        %v2353 = vmax.f32 %v2135, 0.0
        %v2354 = vmax.f32 %v2138, 0.0
        %v2355 = vmax.f32 %v2143, 0.0
        %v2356 = vmax.f32 %v2146, 0.0
        %v2357 = vmax.f32 %v2151, 0.0
        %v2358 = vmax.f32 %v2154, 0.0
        %v2359 = vmax.f32 %v2159, 0.0
        %v2360 = vmax.f32 %v2162, 0.0
        %v2361 = vmax.f32 %v2167, 0.0
        %v2362 = vmax.f32 %v2170, 0.0
        %v2363 = vmax.f32 %v2175, 0.0
        %v2364 = vmax.f32 %v2178, 0.0
        %v2365 = vmax.f32 %v2183, 0.0
        %v2366 = vmax.f32 %v2186, 0.0
        %v2367 = vmax.f32 %v2191, 0.0
        %v2368 = vmax.f32 %v2194, 0.0
        %v2369 = vmax.f32 %v2199, 0.0
        %v2370 = vmax.f32 %v2202, 0.0
        %v2371 = vmax.f32 %v2207, 0.0
        %v2372 = vmax.f32 %v2210, 0.0
        %v2373 = vmax.f32 %v2215, 0.0
        %v2374 = vmax.f32 %v2218, 0.0
        %v2375 = vmax.f32 %v2223, 0.0
        %v2376 = vmax.f32 %v2226, 0.0
        %v2377 = vmax.f32 %v2231, 0.0
        %v2378 = vmax.f32 %v2234, 0.0
        %v2379 = vmax.f32 %v2239, 0.0
        %v2380 = vmax.f32 %v2242, 0.0
        %v2381 = vmax.f32 %v2247, 0.0
        %v2382 = vmax.f32 %v2250, 0.0
        %v2383 = vmax.f32 %v2255, 0.0
        %v2384 = vmax.f32 %v2258, 0.0
        %v2385 = vmax.f32 %v2263, 0.0
        %v2386 = vmax.f32 %v2266, 0.0
        %v2387 = vmax.f32 %v2271, 0.0
        %v2388 = vmax.f32 %v2274, 0.0
        %v2389 = vmax.f32 %v2279, 0.0
        %v2390 = vmax.f32 %v2282, 0.0
        %v2391 = vmax.f32 %v2287, 0.0
        %v2392 = vmax.f32 %v2290, 0.0
        %v2393 = vmax.f32 %v2295, 0.0
        %v2394 = vmax.f32 %v2298, 0.0
        %v2395 = vmax.f32 %v2303, 0.0
        %v2396 = vmax.f32 %v2306, 0.0
        %v2397 = vmax.f32 %v2311, 0.0
        %v2398 = vmax.f32 %v2314, 0.0
        %v2399 = vmax.f32 %v2319, 0.0
        %v2400 = vmax.f32 %v2322, 0.0
        %v2401 = vmax.f32 %v2327, 0.0
        %v2402 = vmax.f32 %v2330, 0.0
        %v2403 = vmax.f32 %v2335, 0.0
        %v2404 = vmax.f32 %v2338, 0.0
        %v2405 = vld [vmem:[%s3] sm:$0xf]
        %v2406 = vld [vmem:[%s3 + $0x4] sm:$0xf]
        %v2407 = vld [vmem:[%s3 + $0x8] sm:$0xf]
        %v2408 = vld [vmem:[%s3 + $0xc] sm:$0xf]
        %v2409 = vld [vmem:[%s3 + $0x10] sm:$0xf]
        %v2410 = vld [vmem:[%s3 + $0x14] sm:$0xf]
        %v2411 = vld [vmem:[%s3 + $0x18] sm:$0xf]
        %v2412 = vld [vmem:[%s3 + $0x1c] sm:$0xf]
        %v2413 = vld [vmem:[%s3 + $0x20] sm:$0xf]
        %v2414 = vld [vmem:[%s3 + $0x24] sm:$0xf]
        %v2415 = vld [vmem:[%s3 + $0x28] sm:$0xf]
        %v2416 = vld [vmem:[%s3 + $0x2c] sm:$0xf]
        %v2417 = vld [vmem:[%s3 + $0x30] sm:$0xf]
        %v2418 = vld [vmem:[%s3 + $0x34] sm:$0xf]
        %v2419 = vld [vmem:[%s3 + $0x38] sm:$0xf]
        %v2420 = vld [vmem:[%s3 + $0x3c] sm:$0xf]
        %v2421 = vld [vmem:[%s3 + $0x40] sm:$0xf]
        %v2422 = vld [vmem:[%s3 + $0x44] sm:$0xf]
        %v2423 = vld [vmem:[%s3 + $0x48] sm:$0xf]
        %v2424 = vld [vmem:[%s3 + $0x4c] sm:$0xf]
        %v2425 = vld [vmem:[%s3 + $0x50] sm:$0xf]
        %v2426 = vld [vmem:[%s3 + $0x54] sm:$0xf]
        %v2427 = vld [vmem:[%s3 + $0x58] sm:$0xf]
        %v2428 = vld [vmem:[%s3 + $0x5c] sm:$0xf]
        %v2429 = vld [vmem:[%s3 + $0x60] sm:$0xf]
        %v2430 = vld [vmem:[%s3 + $0x64] sm:$0xf]
        %v2431 = vld [vmem:[%s3 + $0x68] sm:$0xf]
        %v2432 = vld [vmem:[%s3 + $0x6c] sm:$0xf]
        %v2433 = vld [vmem:[%s3 + $0x70] sm:$0xf]
        %v2434 = vld [vmem:[%s3 + $0x74] sm:$0xf]
        %v2435 = vld [vmem:[%s3 + $0x78] sm:$0xf]
        %v2436 = vld [vmem:[%s3 + $0x7c] sm:$0xf]
        %v2437 = vld [vmem:[%s5] sm:$0x1]
        %v2439 = vlaneseq
        %v2440 = vshrl.u32 %v2439, 7
        %v2441 = vsub.s32 0, %v2440
        %v2442 = vrot.slane %v2437, %v2441
        %v2476 = vunpack.c.l.b16 %v2405
        %v2477 = vunpack.c.l.b16 %v2406
        %v2478 = vunpack.c.l.b16 %v2407
        %v2479 = vunpack.c.l.b16 %v2408
        %v2480 = vunpack.c.l.b16 %v2409
        %v2481 = vunpack.c.l.b16 %v2410
        %v2482 = vunpack.c.l.b16 %v2411
        %v2483 = vunpack.c.l.b16 %v2412
        %v2484 = vunpack.c.l.b16 %v2413
        %v2485 = vunpack.c.l.b16 %v2414
        %v2486 = vunpack.c.l.b16 %v2415
        %v2487 = vunpack.c.l.b16 %v2416
        %v2488 = vunpack.c.l.b16 %v2417
        %v2489 = vunpack.c.l.b16 %v2418
        %v2490 = vunpack.c.l.b16 %v2419
        %v2491 = vunpack.c.l.b16 %v2420
        %v2492 = vunpack.c.l.b16 %v2421
        %v2493 = vunpack.c.l.b16 %v2422
        %v2494 = vunpack.c.l.b16 %v2423
        %v2495 = vunpack.c.l.b16 %v2424
        %v2496 = vunpack.c.l.b16 %v2425
        %v2497 = vunpack.c.l.b16 %v2426
        %v2498 = vunpack.c.l.b16 %v2427
        %v2499 = vunpack.c.l.b16 %v2428
        %v2500 = vunpack.c.l.b16 %v2429
        %v2501 = vunpack.c.l.b16 %v2430
        %v2502 = vunpack.c.l.b16 %v2431
        %v2503 = vunpack.c.l.b16 %v2432
        %v2504 = vunpack.c.l.b16 %v2433
        %v2505 = vunpack.c.l.b16 %v2434
        %v2506 = vunpack.c.l.b16 %v2435
        %v2507 = vunpack.c.l.b16 %v2436
        %v2508 = vpack.c.b16 %v2477, %v2476
        %v2509 = vpack.c.b16 %v2479, %v2478
        %v2510 = vpack.c.b16 %v2481, %v2480
        %v2511 = vpack.c.b16 %v2483, %v2482
        %v2512 = vpack.c.b16 %v2485, %v2484
        %v2513 = vpack.c.b16 %v2487, %v2486
        %v2514 = vpack.c.b16 %v2489, %v2488
        %v2515 = vpack.c.b16 %v2491, %v2490
        %v2516 = vpack.c.b16 %v2493, %v2492
        %v2517 = vpack.c.b16 %v2495, %v2494
        %v2518 = vpack.c.b16 %v2497, %v2496
        %v2519 = vpack.c.b16 %v2499, %v2498
        %v2520 = vpack.c.b16 %v2501, %v2500
        %v2521 = vpack.c.b16 %v2503, %v2502
        %v2522 = vpack.c.b16 %v2505, %v2504
        %v2523 = vpack.c.b16 %v2507, %v2506
        %2540 = vmatprep.subr.bf16.mxu0 0
        %2541 = vmatpush1.bf16.msra.mxu0 %v2515
        %2542 = vmatprep.subr.bf16.mxu0 0
        %2543 = vmatpush1.bf16.msra.mxu0 %v2514
        %2544 = vmatprep.subr.bf16.mxu0 0
        %2545 = vmatpush1.bf16.msra.mxu0 %v2513
        %2546 = vmatprep.subr.bf16.mxu0 0
        %2547 = vmatpush1.bf16.msra.mxu0 %v2512
        %2548 = vmatprep.subr.bf16.mxu0 0
        %2549 = vmatpush1.bf16.msra.mxu0 %v2511
        %2550 = vmatprep.subr.bf16.mxu0 0
        %2551 = vmatpush1.bf16.msra.mxu0 %v2510
        %2552 = vmatprep.subr.bf16.mxu0 0
        %2553 = vmatpush1.bf16.msra.mxu0 %v2509
        %2554 = vmatprep.subr.bf16.mxu0 0
        %2555 = vmatpush1.bf16.msra.mxu0 %v2508
        %2556 = vmatprep.subr.bf16.mxu0 0
        %2557 = vmatpush2.bf16.msra.mxu0 %v2523
        %2558 = vmatprep.subr.bf16.mxu0 0
        %2559 = vmatpush2.bf16.msra.mxu0 %v2522
        %2560 = vmatprep.subr.bf16.mxu0 0
        %2561 = vmatpush2.bf16.msra.mxu0 %v2521
        %2562 = vmatprep.subr.bf16.mxu0 0
        %2563 = vmatpush2.bf16.msra.mxu0 %v2520
        %2564 = vmatprep.subr.bf16.mxu0 0
        %2565 = vmatpush2.bf16.msra.mxu0 %v2519
        %2566 = vmatprep.subr.bf16.mxu0 0
        %2567 = vmatpush2.bf16.msra.mxu0 %v2518
        %2568 = vmatprep.subr.bf16.mxu0 0
        %2569 = vmatpush2.bf16.msra.mxu0 %v2517
        %2570 = vmatprep.subr.bf16.mxu0 0
        %2571 = vmatpush2.bf16.msra.mxu0 %v2516
        %2572 = vmatprep.mubr.bf16.mxu0 %v1854
        %2573 = vmatmul.mubr.bf16.gmra.mxu0 %v1853
        %v2574 = vpop.f32.mrf.mxu0
        %v2575 = vadd.f32 %v2442, %v2574
        %v2576 = vpop.f32.mrf.mxu0
        %v2577 = vpop.f32.mrf.mxu0
        %v2578 = vadd.f32 %v2442, %v2577
        %v2579 = vpop.f32.mrf.mxu0
        %2580 = vmatprep.mubr.bf16.mxu0 %v1856
        %2581 = vmatmul.mubr.bf16.gmra.mxu0 %v1855
        %v2582 = vpop.f32.mrf.mxu0
        %v2583 = vadd.f32 %v2442, %v2582
        %v2584 = vpop.f32.mrf.mxu0
        %v2585 = vpop.f32.mrf.mxu0
        %v2586 = vadd.f32 %v2442, %v2585
        %v2587 = vpop.f32.mrf.mxu0
        %2588 = vmatprep.mubr.bf16.mxu0 %v1858
        %2589 = vmatmul.mubr.bf16.gmra.mxu0 %v1857
        %v2590 = vpop.f32.mrf.mxu0
        %v2591 = vadd.f32 %v2442, %v2590
        %v2592 = vpop.f32.mrf.mxu0
        %v2593 = vpop.f32.mrf.mxu0
        %v2594 = vadd.f32 %v2442, %v2593
        %v2595 = vpop.f32.mrf.mxu0
        %2596 = vmatprep.mubr.bf16.mxu0 %v1860
        %2597 = vmatmul.mubr.bf16.gmra.mxu0 %v1859
        %v2598 = vpop.f32.mrf.mxu0
        %v2599 = vadd.f32 %v2442, %v2598
        %v2600 = vpop.f32.mrf.mxu0
        %v2601 = vpop.f32.mrf.mxu0
        %v2602 = vadd.f32 %v2442, %v2601
        %v2603 = vpop.f32.mrf.mxu0
        %2604 = vmatprep.mubr.bf16.mxu0 %v1862
        %2605 = vmatmul.mubr.bf16.gmra.mxu0 %v1861
        %v2606 = vpop.f32.mrf.mxu0
        %v2607 = vadd.f32 %v2442, %v2606
        %v2608 = vpop.f32.mrf.mxu0
        %v2609 = vpop.f32.mrf.mxu0
        %v2610 = vadd.f32 %v2442, %v2609
        %v2611 = vpop.f32.mrf.mxu0
        %2612 = vmatprep.mubr.bf16.mxu0 %v1864
        %2613 = vmatmul.mubr.bf16.gmra.mxu0 %v1863
        %v2614 = vpop.f32.mrf.mxu0
        %v2615 = vadd.f32 %v2442, %v2614
        %v2616 = vpop.f32.mrf.mxu0
        %v2617 = vpop.f32.mrf.mxu0
        %v2618 = vadd.f32 %v2442, %v2617
        %v2619 = vpop.f32.mrf.mxu0
        %2620 = vmatprep.mubr.bf16.mxu0 %v1866
        %2621 = vmatmul.mubr.bf16.gmra.mxu0 %v1865
        %v2622 = vpop.f32.mrf.mxu0
        %v2623 = vadd.f32 %v2442, %v2622
        %v2624 = vpop.f32.mrf.mxu0
        %v2625 = vpop.f32.mrf.mxu0
        %v2626 = vadd.f32 %v2442, %v2625
        %v2627 = vpop.f32.mrf.mxu0
        %2628 = vmatprep.mubr.bf16.mxu0 %v1868
        %2629 = vmatmul.mubr.bf16.gmra.mxu0 %v1867
        %v2630 = vpop.f32.mrf.mxu0
        %v2631 = vadd.f32 %v2442, %v2630
        %v2632 = vpop.f32.mrf.mxu0
        %v2633 = vpop.f32.mrf.mxu0
        %v2634 = vadd.f32 %v2442, %v2633
        %v2635 = vpop.f32.mrf.mxu0
        %2636 = vmatprep.mubr.bf16.mxu0 %v1870
        %2637 = vmatmul.mubr.bf16.gmra.mxu0 %v1869
        %v2638 = vpop.f32.mrf.mxu0
        %v2639 = vadd.f32 %v2442, %v2638
        %v2640 = vpop.f32.mrf.mxu0
        %v2641 = vpop.f32.mrf.mxu0
        %v2642 = vadd.f32 %v2442, %v2641
        %v2643 = vpop.f32.mrf.mxu0
        %2644 = vmatprep.mubr.bf16.mxu0 %v1872
        %2645 = vmatmul.mubr.bf16.gmra.mxu0 %v1871
        %v2646 = vpop.f32.mrf.mxu0
        %v2647 = vadd.f32 %v2442, %v2646
        %v2648 = vpop.f32.mrf.mxu0
        %v2649 = vpop.f32.mrf.mxu0
        %v2650 = vadd.f32 %v2442, %v2649
        %v2651 = vpop.f32.mrf.mxu0
        %2652 = vmatprep.mubr.bf16.mxu0 %v1874
        %2653 = vmatmul.mubr.bf16.gmra.mxu0 %v1873
        %v2654 = vpop.f32.mrf.mxu0
        %v2655 = vadd.f32 %v2442, %v2654
        %v2656 = vpop.f32.mrf.mxu0
        %v2657 = vpop.f32.mrf.mxu0
        %v2658 = vadd.f32 %v2442, %v2657
        %v2659 = vpop.f32.mrf.mxu0
        %2660 = vmatprep.mubr.bf16.mxu0 %v1876
        %2661 = vmatmul.mubr.bf16.gmra.mxu0 %v1875
        %v2662 = vpop.f32.mrf.mxu0
        %v2663 = vadd.f32 %v2442, %v2662
        %v2664 = vpop.f32.mrf.mxu0
        %v2665 = vpop.f32.mrf.mxu0
        %v2666 = vadd.f32 %v2442, %v2665
        %v2667 = vpop.f32.mrf.mxu0
        %2668 = vmatprep.mubr.bf16.mxu0 %v1878
        %2669 = vmatmul.mubr.bf16.gmra.mxu0 %v1877
        %v2670 = vpop.f32.mrf.mxu0
        %v2671 = vadd.f32 %v2442, %v2670
        %v2672 = vpop.f32.mrf.mxu0
        %v2673 = vpop.f32.mrf.mxu0
        %v2674 = vadd.f32 %v2442, %v2673
        %v2675 = vpop.f32.mrf.mxu0
        %2676 = vmatprep.mubr.bf16.mxu0 %v1880
        %2677 = vmatmul.mubr.bf16.gmra.mxu0 %v1879
        %v2678 = vpop.f32.mrf.mxu0
        %v2679 = vadd.f32 %v2442, %v2678
        %v2680 = vpop.f32.mrf.mxu0
        %v2681 = vpop.f32.mrf.mxu0
        %v2682 = vadd.f32 %v2442, %v2681
        %v2683 = vpop.f32.mrf.mxu0
        %2684 = vmatprep.mubr.bf16.mxu0 %v1882
        %2685 = vmatmul.mubr.bf16.gmra.mxu0 %v1881
        %v2686 = vpop.f32.mrf.mxu0
        %v2687 = vadd.f32 %v2442, %v2686
        %v2688 = vpop.f32.mrf.mxu0
        %v2689 = vpop.f32.mrf.mxu0
        %v2690 = vadd.f32 %v2442, %v2689
        %v2691 = vpop.f32.mrf.mxu0
        %2692 = vmatprep.mubr.bf16.mxu0 %v1884
        %2693 = vmatmul.mubr.bf16.gmra.mxu0 %v1883
        %v2694 = vpop.f32.mrf.mxu0
        %v2695 = vadd.f32 %v2442, %v2694
        %v2696 = vpop.f32.mrf.mxu0
        %v2697 = vpop.f32.mrf.mxu0
        %v2698 = vadd.f32 %v2442, %v2697
        %v2699 = vpop.f32.mrf.mxu0
        %2700 = vmatprep.mubr.bf16.mxu0 %v1886
        %2701 = vmatmul.mubr.bf16.gmra.mxu0 %v1885
        %v2702 = vpop.f32.mrf.mxu0
        %v2703 = vadd.f32 %v2442, %v2702
        %v2704 = vpop.f32.mrf.mxu0
        %v2705 = vpop.f32.mrf.mxu0
        %v2706 = vadd.f32 %v2442, %v2705
        %v2707 = vpop.f32.mrf.mxu0
        %2708 = vmatprep.mubr.bf16.mxu0 %v1888
        %2709 = vmatmul.mubr.bf16.gmra.mxu0 %v1887
        %v2710 = vpop.f32.mrf.mxu0
        %v2711 = vadd.f32 %v2442, %v2710
        %v2712 = vpop.f32.mrf.mxu0
        %v2713 = vpop.f32.mrf.mxu0
        %v2714 = vadd.f32 %v2442, %v2713
        %v2715 = vpop.f32.mrf.mxu0
        %2716 = vmatprep.mubr.bf16.mxu0 %v1890
        %2717 = vmatmul.mubr.bf16.gmra.mxu0 %v1889
        %v2718 = vpop.f32.mrf.mxu0
        %v2719 = vadd.f32 %v2442, %v2718
        %v2720 = vpop.f32.mrf.mxu0
        %v2721 = vpop.f32.mrf.mxu0
        %v2722 = vadd.f32 %v2442, %v2721
        %v2723 = vpop.f32.mrf.mxu0
        %2724 = vmatprep.mubr.bf16.mxu0 %v1892
        %2725 = vmatmul.mubr.bf16.gmra.mxu0 %v1891
        %v2726 = vpop.f32.mrf.mxu0
        %v2727 = vadd.f32 %v2442, %v2726
        %v2728 = vpop.f32.mrf.mxu0
        %v2729 = vpop.f32.mrf.mxu0
        %v2730 = vadd.f32 %v2442, %v2729
        %v2731 = vpop.f32.mrf.mxu0
        %2732 = vmatprep.mubr.bf16.mxu0 %v1894
        %2733 = vmatmul.mubr.bf16.gmra.mxu0 %v1893
        %v2734 = vpop.f32.mrf.mxu0
        %v2735 = vadd.f32 %v2442, %v2734
        %v2736 = vpop.f32.mrf.mxu0
        %v2737 = vpop.f32.mrf.mxu0
        %v2738 = vadd.f32 %v2442, %v2737
        %v2739 = vpop.f32.mrf.mxu0
        %2740 = vmatprep.mubr.bf16.mxu0 %v1896
        %2741 = vmatmul.mubr.bf16.gmra.mxu0 %v1895
        %v2742 = vpop.f32.mrf.mxu0
        %v2743 = vadd.f32 %v2442, %v2742
        %v2744 = vpop.f32.mrf.mxu0
        %v2745 = vpop.f32.mrf.mxu0
        %v2746 = vadd.f32 %v2442, %v2745
        %v2747 = vpop.f32.mrf.mxu0
        %2748 = vmatprep.mubr.bf16.mxu0 %v1898
        %2749 = vmatmul.mubr.bf16.gmra.mxu0 %v1897
        %v2750 = vpop.f32.mrf.mxu0
        %v2751 = vadd.f32 %v2442, %v2750
        %v2752 = vpop.f32.mrf.mxu0
        %v2753 = vpop.f32.mrf.mxu0
        %v2754 = vadd.f32 %v2442, %v2753
        %v2755 = vpop.f32.mrf.mxu0
        %2756 = vmatprep.mubr.bf16.mxu0 %v1900
        %2757 = vmatmul.mubr.bf16.gmra.mxu0 %v1899
        %v2758 = vpop.f32.mrf.mxu0
        %v2759 = vadd.f32 %v2442, %v2758
        %v2760 = vpop.f32.mrf.mxu0
        %v2761 = vpop.f32.mrf.mxu0
        %v2762 = vadd.f32 %v2442, %v2761
        %v2763 = vpop.f32.mrf.mxu0
        %2764 = vmatprep.mubr.bf16.mxu0 %v1902
        %2765 = vmatmul.mubr.bf16.gmra.mxu0 %v1901
        %v2766 = vpop.f32.mrf.mxu0
        %v2767 = vadd.f32 %v2442, %v2766
        %v2768 = vpop.f32.mrf.mxu0
        %v2769 = vpop.f32.mrf.mxu0
        %v2770 = vadd.f32 %v2442, %v2769
        %v2771 = vpop.f32.mrf.mxu0
        %2772 = vmatprep.mubr.bf16.mxu0 %v1904
        %2773 = vmatmul.mubr.bf16.gmra.mxu0 %v1903
        %v2774 = vpop.f32.mrf.mxu0
        %v2775 = vadd.f32 %v2442, %v2774
        %v2776 = vpop.f32.mrf.mxu0
        %v2777 = vpop.f32.mrf.mxu0
        %v2778 = vadd.f32 %v2442, %v2777
        %v2779 = vpop.f32.mrf.mxu0
        %2780 = vmatprep.mubr.bf16.mxu0 %v1906
        %2781 = vmatmul.mubr.bf16.gmra.mxu0 %v1905
        %v2782 = vpop.f32.mrf.mxu0
        %v2783 = vadd.f32 %v2442, %v2782
        %v2784 = vpop.f32.mrf.mxu0
        %v2785 = vpop.f32.mrf.mxu0
        %v2786 = vadd.f32 %v2442, %v2785
        %v2787 = vpop.f32.mrf.mxu0
        %2788 = vmatprep.mubr.bf16.mxu0 %v1908
        %2789 = vmatmul.mubr.bf16.gmra.mxu0 %v1907
        %v2790 = vpop.f32.mrf.mxu0
        %v2791 = vadd.f32 %v2442, %v2790
        %v2792 = vpop.f32.mrf.mxu0
        %v2793 = vpop.f32.mrf.mxu0
        %v2794 = vadd.f32 %v2442, %v2793
        %v2795 = vpop.f32.mrf.mxu0
        %2796 = vmatprep.mubr.bf16.mxu0 %v1910
        %2797 = vmatmul.mubr.bf16.gmra.mxu0 %v1909
        %v2798 = vpop.f32.mrf.mxu0
        %v2799 = vadd.f32 %v2442, %v2798
        %v2800 = vpop.f32.mrf.mxu0
        %v2801 = vpop.f32.mrf.mxu0
        %v2802 = vadd.f32 %v2442, %v2801
        %v2803 = vpop.f32.mrf.mxu0
        %2804 = vmatprep.mubr.bf16.mxu0 %v1912
        %2805 = vmatmul.mubr.bf16.gmra.mxu0 %v1911
        %v2806 = vpop.f32.mrf.mxu0
        %v2807 = vadd.f32 %v2442, %v2806
        %v2808 = vpop.f32.mrf.mxu0
        %v2809 = vpop.f32.mrf.mxu0
        %v2810 = vadd.f32 %v2442, %v2809
        %v2811 = vpop.f32.mrf.mxu0
        %2812 = vmatprep.mubr.bf16.mxu0 %v1914
        %2813 = vmatmul.mubr.bf16.gmra.mxu0 %v1913
        %v2814 = vpop.f32.mrf.mxu0
        %v2815 = vadd.f32 %v2442, %v2814
        %v2816 = vpop.f32.mrf.mxu0
        %v2817 = vpop.f32.mrf.mxu0
        %v2818 = vadd.f32 %v2442, %v2817
        %v2819 = vpop.f32.mrf.mxu0
        %2820 = vmatprep.mubr.bf16.mxu0 %v1916
        %2821 = vmatmul.mubr.bf16.gmra.mxu0 %v1915
        %v2822 = vpop.f32.mrf.mxu0
        %v2823 = vadd.f32 %v2442, %v2822
        %v2824 = vpop.f32.mrf.mxu0
        %v2825 = vpop.f32.mrf.mxu0
        %v2826 = vadd.f32 %v2442, %v2825
        %v2827 = vpop.f32.mrf.mxu0
        %2828 = vdwg.mxu0
        %v2829 = vmax.f32 %v2575, 0.0
        %v2830 = vmax.f32 %v2578, 0.0
        %v2831 = vmax.f32 %v2583, 0.0
        %v2832 = vmax.f32 %v2586, 0.0
        %v2833 = vmax.f32 %v2591, 0.0
        %v2834 = vmax.f32 %v2594, 0.0
        %v2835 = vmax.f32 %v2599, 0.0
        %v2836 = vmax.f32 %v2602, 0.0
        %v2837 = vmax.f32 %v2607, 0.0
        %v2838 = vmax.f32 %v2610, 0.0
        %v2839 = vmax.f32 %v2615, 0.0
        %v2840 = vmax.f32 %v2618, 0.0
        %v2841 = vmax.f32 %v2623, 0.0
        %v2842 = vmax.f32 %v2626, 0.0
        %v2843 = vmax.f32 %v2631, 0.0
        %v2844 = vmax.f32 %v2634, 0.0
        %v2845 = vmax.f32 %v2639, 0.0
        %v2846 = vmax.f32 %v2642, 0.0
        %v2847 = vmax.f32 %v2647, 0.0
        %v2848 = vmax.f32 %v2650, 0.0
        %v2849 = vmax.f32 %v2655, 0.0
        %v2850 = vmax.f32 %v2658, 0.0
        %v2851 = vmax.f32 %v2663, 0.0
        %v2852 = vmax.f32 %v2666, 0.0
        %v2853 = vmax.f32 %v2671, 0.0
        %v2854 = vmax.f32 %v2674, 0.0
        %v2855 = vmax.f32 %v2679, 0.0
        %v2856 = vmax.f32 %v2682, 0.0
        %v2857 = vmax.f32 %v2687, 0.0
        %v2858 = vmax.f32 %v2690, 0.0
        %v2859 = vmax.f32 %v2695, 0.0
        %v2860 = vmax.f32 %v2698, 0.0
        %v2861 = vmax.f32 %v2703, 0.0
        %v2862 = vmax.f32 %v2706, 0.0
        %v2863 = vmax.f32 %v2711, 0.0
        %v2864 = vmax.f32 %v2714, 0.0
        %v2865 = vmax.f32 %v2719, 0.0
        %v2866 = vmax.f32 %v2722, 0.0
        %v2867 = vmax.f32 %v2727, 0.0
        %v2868 = vmax.f32 %v2730, 0.0
        %v2869 = vmax.f32 %v2735, 0.0
        %v2870 = vmax.f32 %v2738, 0.0
        %v2871 = vmax.f32 %v2743, 0.0
        %v2872 = vmax.f32 %v2746, 0.0
        %v2873 = vmax.f32 %v2751, 0.0
        %v2874 = vmax.f32 %v2754, 0.0
        %v2875 = vmax.f32 %v2759, 0.0
        %v2876 = vmax.f32 %v2762, 0.0
        %v2877 = vmax.f32 %v2767, 0.0
        %v2878 = vmax.f32 %v2770, 0.0
        %v2879 = vmax.f32 %v2775, 0.0
        %v2880 = vmax.f32 %v2778, 0.0
        %v2881 = vmax.f32 %v2783, 0.0
        %v2882 = vmax.f32 %v2786, 0.0
        %v2883 = vmax.f32 %v2791, 0.0
        %v2884 = vmax.f32 %v2794, 0.0
        %v2885 = vmax.f32 %v2799, 0.0
        %v2886 = vmax.f32 %v2802, 0.0
        %v2887 = vmax.f32 %v2807, 0.0
        %v2888 = vmax.f32 %v2810, 0.0
        %v2889 = vmax.f32 %v2815, 0.0
        %v2890 = vmax.f32 %v2818, 0.0
        %v2891 = vmax.f32 %v2823, 0.0
        %v2892 = vmax.f32 %v2826, 0.0
        %v2893 = vpack.c.bf16 %v2342, %v2341
        %v2894 = vpack.c.bf16 %v2344, %v2343
        %v2895 = vpack.c.bf16 %v2346, %v2345
        %v2896 = vpack.c.bf16 %v2348, %v2347
        %v2897 = vpack.c.bf16 %v2350, %v2349
        %v2898 = vpack.c.bf16 %v2352, %v2351
        %v2899 = vpack.c.bf16 %v2354, %v2353
        %v2900 = vpack.c.bf16 %v2356, %v2355
        %v2901 = vpack.c.bf16 %v2358, %v2357
        %v2902 = vpack.c.bf16 %v2360, %v2359
        %v2903 = vpack.c.bf16 %v2362, %v2361
        %v2904 = vpack.c.bf16 %v2364, %v2363
        %v2905 = vpack.c.bf16 %v2366, %v2365
        %v2906 = vpack.c.bf16 %v2368, %v2367
        %v2907 = vpack.c.bf16 %v2370, %v2369
        %v2908 = vpack.c.bf16 %v2372, %v2371
        %v2909 = vpack.c.bf16 %v2374, %v2373
        %v2910 = vpack.c.bf16 %v2376, %v2375
        %v2911 = vpack.c.bf16 %v2378, %v2377
        %v2912 = vpack.c.bf16 %v2380, %v2379
        %v2913 = vpack.c.bf16 %v2382, %v2381
        %v2914 = vpack.c.bf16 %v2384, %v2383
        %v2915 = vpack.c.bf16 %v2386, %v2385
        %v2916 = vpack.c.bf16 %v2388, %v2387
        %v2917 = vpack.c.bf16 %v2390, %v2389
        %v2918 = vpack.c.bf16 %v2392, %v2391
        %v2919 = vpack.c.bf16 %v2394, %v2393
        %v2920 = vpack.c.bf16 %v2396, %v2395
        %v2921 = vpack.c.bf16 %v2398, %v2397
        %v2922 = vpack.c.bf16 %v2400, %v2399
        %v2923 = vpack.c.bf16 %v2402, %v2401
        %v2924 = vpack.c.bf16 %v2404, %v2403
        %v2925 = vld [vmem:[%s6] sm:$0xf]
        %v2926 = vld [vmem:[%s6 + $0x4] sm:$0xf]
        %v2927 = vld [vmem:[%s6 + $0x8] sm:$0xf]
        %v2928 = vld [vmem:[%s6 + $0xc] sm:$0xf]
        %v2929 = vpack.c.bf16 %v2830, %v2829
        %v2930 = vpack.c.bf16 %v2832, %v2831
        %v2931 = vpack.c.bf16 %v2834, %v2833
        %v2932 = vpack.c.bf16 %v2836, %v2835
        %v2933 = vpack.c.bf16 %v2838, %v2837
        %v2934 = vpack.c.bf16 %v2840, %v2839
        %v2935 = vpack.c.bf16 %v2842, %v2841
        %v2936 = vpack.c.bf16 %v2844, %v2843
        %v2937 = vpack.c.bf16 %v2846, %v2845
        %v2938 = vpack.c.bf16 %v2848, %v2847
        %v2939 = vpack.c.bf16 %v2850, %v2849
        %v2940 = vpack.c.bf16 %v2852, %v2851
        %v2941 = vpack.c.bf16 %v2854, %v2853
        %v2942 = vpack.c.bf16 %v2856, %v2855
        %v2943 = vpack.c.bf16 %v2858, %v2857
        %v2944 = vpack.c.bf16 %v2860, %v2859
        %v2945 = vpack.c.bf16 %v2862, %v2861
        %v2946 = vpack.c.bf16 %v2864, %v2863
        %v2947 = vpack.c.bf16 %v2866, %v2865
        %v2948 = vpack.c.bf16 %v2868, %v2867
        %v2949 = vpack.c.bf16 %v2870, %v2869
        %v2950 = vpack.c.bf16 %v2872, %v2871
        %v2951 = vpack.c.bf16 %v2874, %v2873
        %v2952 = vpack.c.bf16 %v2876, %v2875
        %v2953 = vpack.c.bf16 %v2878, %v2877
        %v2954 = vpack.c.bf16 %v2880, %v2879
        %v2955 = vpack.c.bf16 %v2882, %v2881
        %v2956 = vpack.c.bf16 %v2884, %v2883
        %v2957 = vpack.c.bf16 %v2886, %v2885
        %v2958 = vpack.c.bf16 %v2888, %v2887
        %v2959 = vpack.c.bf16 %v2890, %v2889
        %v2960 = vpack.c.bf16 %v2892, %v2891
        %v2961 = vld [vmem:[%s7] sm:$0xf]
        %v2962 = vld [vmem:[%s7 + $0x4] sm:$0xf]
        %v2963 = vld [vmem:[%s7 + $0x8] sm:$0xf]
        %v2964 = vld [vmem:[%s7 + $0xc] sm:$0xf]
        %v2969 = vunpack.c.l.b16 %v2961
        %v2970 = vunpack.c.l.b16 %v2962
        %v2971 = vunpack.c.l.b16 %v2963
        %v2972 = vunpack.c.l.b16 %v2964
        %v2973 = vpack.c.b16 %v2970, %v2969
        %v2974 = vpack.c.b16 %v2972, %v2971
        %vm2977 = vcmask 261120
        %v2979 = vsel %vm2977, %v2929, 0
        %v2982 = vsel %vm2977, %v2930, 0
        %v2985 = vsel %vm2977, %v2931, 0
        %v2988 = vsel %vm2977, %v2932, 0
        %v2991 = vsel %vm2977, %v2933, 0
        %v2994 = vsel %vm2977, %v2934, 0
        %v2997 = vsel %vm2977, %v2935, 0
        %v3000 = vsel %vm2977, %v2936, 0
        %v3003 = vsel %vm2977, %v2937, 0
        %v3006 = vsel %vm2977, %v2938, 0
        %v3009 = vsel %vm2977, %v2939, 0
        %v3012 = vsel %vm2977, %v2940, 0
        %v3015 = vsel %vm2977, %v2941, 0
        %v3018 = vsel %vm2977, %v2942, 0
        %v3021 = vsel %vm2977, %v2943, 0
        %v3024 = vsel %vm2977, %v2944, 0
        %v3027 = vsel %vm2977, %v2945, 0
        %v3030 = vsel %vm2977, %v2946, 0
        %v3033 = vsel %vm2977, %v2947, 0
        %v3036 = vsel %vm2977, %v2948, 0
        %v3039 = vsel %vm2977, %v2949, 0
        %v3042 = vsel %vm2977, %v2950, 0
        %v3045 = vsel %vm2977, %v2951, 0
        %v3048 = vsel %vm2977, %v2952, 0
        %v3051 = vsel %vm2977, %v2953, 0
        %v3054 = vsel %vm2977, %v2954, 0
        %v3057 = vsel %vm2977, %v2955, 0
        %v3060 = vsel %vm2977, %v2956, 0
        %v3063 = vsel %vm2977, %v2957, 0
        %v3066 = vsel %vm2977, %v2958, 0
        %v3069 = vsel %vm2977, %v2959, 0
        %v3072 = vsel %vm2977, %v2960, 0
        %3074 = vmatprep.subr.bf16.mxu0 0
        %3075 = vmatpush1.bf16.msra.mxu0 0
        %3076 = vmatprep.subr.bf16.mxu0 0
        %3077 = vmatpush1.bf16.msra.mxu0 0
        %3078 = vmatprep.subr.bf16.mxu0 0
        %3079 = vmatpush1.bf16.msra.mxu0 0
        %3080 = vmatprep.subr.bf16.mxu0 0
        %3081 = vmatpush1.bf16.msra.mxu0 0
        %3082 = vmatprep.subr.bf16.mxu0 0
        %3083 = vmatpush1.bf16.msra.mxu0 0
        %3084 = vmatprep.subr.bf16.mxu0 0
        %3085 = vmatpush1.bf16.msra.mxu0 0
        %3086 = vmatprep.subr.bf16.mxu0 0
        %3087 = vmatpush1.bf16.msra.mxu0 %v2974
        %3088 = vmatprep.subr.bf16.mxu0 0
        %3089 = vmatpush1.bf16.msra.mxu0 %v2973
        %3090 = vmatprep.subr.bf16.mxu0 0
        %3091 = vmatpush2.bf16.msra.mxu0 0
        %3092 = vmatprep.subr.bf16.mxu0 0
        %3093 = vmatpush2.bf16.msra.mxu0 0
        %3094 = vmatprep.subr.bf16.mxu0 0
        %3095 = vmatpush2.bf16.msra.mxu0 0
        %3096 = vmatprep.subr.bf16.mxu0 0
        %3097 = vmatpush2.bf16.msra.mxu0 0
        %3098 = vmatprep.subr.bf16.mxu0 0
        %3099 = vmatpush2.bf16.msra.mxu0 0
        %3100 = vmatprep.subr.bf16.mxu0 0
        %3101 = vmatpush2.bf16.msra.mxu0 0
        %3102 = vmatprep.subr.bf16.mxu0 0
        %3103 = vmatpush2.bf16.msra.mxu0 0
        %3104 = vmatprep.subr.bf16.mxu0 0
        %3105 = vmatpush2.bf16.msra.mxu0 0
        %3106 = vmatprep.mubr.bf16.mxu0 0
        %3107 = vmatmul.mubr.bf16.gmra.mxu0 %v2979
        %v3108 = vpop.f32.mrf.mxu0
        %v3109 = vadd.f32 0.0, %v3108
        %v3110 = vpop.f32.mrf.mxu0
        %v3111 = vpop.f32.mrf.mxu0
        %v3112 = vadd.f32 0.0, %v3111
        %v3113 = vpop.f32.mrf.mxu0
        %3114 = vmatprep.mubr.bf16.mxu0 0
        %3115 = vmatmul.mubr.bf16.gmra.mxu0 %v2982
        %v3116 = vpop.f32.mrf.mxu0
        %v3117 = vadd.f32 0.0, %v3116
        %v3118 = vpop.f32.mrf.mxu0
        %v3119 = vpop.f32.mrf.mxu0
        %v3120 = vadd.f32 0.0, %v3119
        %v3121 = vpop.f32.mrf.mxu0
        %3122 = vmatprep.mubr.bf16.mxu0 0
        %3123 = vmatmul.mubr.bf16.gmra.mxu0 %v2985
        %v3124 = vpop.f32.mrf.mxu0
        %v3125 = vadd.f32 0.0, %v3124
        %v3126 = vpop.f32.mrf.mxu0
        %v3127 = vpop.f32.mrf.mxu0
        %v3128 = vadd.f32 0.0, %v3127
        %v3129 = vpop.f32.mrf.mxu0
        %3130 = vmatprep.mubr.bf16.mxu0 0
        %3131 = vmatmul.mubr.bf16.gmra.mxu0 %v2988
        %v3132 = vpop.f32.mrf.mxu0
        %v3133 = vadd.f32 0.0, %v3132
        %v3134 = vpop.f32.mrf.mxu0
        %v3135 = vpop.f32.mrf.mxu0
        %v3136 = vadd.f32 0.0, %v3135
        %v3137 = vpop.f32.mrf.mxu0
        %3138 = vmatprep.mubr.bf16.mxu0 0
        %3139 = vmatmul.mubr.bf16.gmra.mxu0 %v2991
        %v3140 = vpop.f32.mrf.mxu0
        %v3141 = vadd.f32 0.0, %v3140
        %v3142 = vpop.f32.mrf.mxu0
        %v3143 = vpop.f32.mrf.mxu0
        %v3144 = vadd.f32 0.0, %v3143
        %v3145 = vpop.f32.mrf.mxu0
        %3146 = vmatprep.mubr.bf16.mxu0 0
        %3147 = vmatmul.mubr.bf16.gmra.mxu0 %v2994
        %v3148 = vpop.f32.mrf.mxu0
        %v3149 = vadd.f32 0.0, %v3148
        %v3150 = vpop.f32.mrf.mxu0
        %v3151 = vpop.f32.mrf.mxu0
        %v3152 = vadd.f32 0.0, %v3151
        %v3153 = vpop.f32.mrf.mxu0
        %3154 = vmatprep.mubr.bf16.mxu0 0
        %3155 = vmatmul.mubr.bf16.gmra.mxu0 %v2997
        %v3156 = vpop.f32.mrf.mxu0
        %v3157 = vadd.f32 0.0, %v3156
        %v3158 = vpop.f32.mrf.mxu0
        %v3159 = vpop.f32.mrf.mxu0
        %v3160 = vadd.f32 0.0, %v3159
        %v3161 = vpop.f32.mrf.mxu0
        %3162 = vmatprep.mubr.bf16.mxu0 0
        %3163 = vmatmul.mubr.bf16.gmra.mxu0 %v3000
        %v3164 = vpop.f32.mrf.mxu0
        %v3165 = vadd.f32 0.0, %v3164
        %v3166 = vpop.f32.mrf.mxu0
        %v3167 = vpop.f32.mrf.mxu0
        %v3168 = vadd.f32 0.0, %v3167
        %v3169 = vpop.f32.mrf.mxu0
        %3170 = vmatprep.mubr.bf16.mxu0 0
        %3171 = vmatmul.mubr.bf16.gmra.mxu0 %v3003
        %v3172 = vpop.f32.mrf.mxu0
        %v3173 = vadd.f32 0.0, %v3172
        %v3174 = vpop.f32.mrf.mxu0
        %v3175 = vpop.f32.mrf.mxu0
        %v3176 = vadd.f32 0.0, %v3175
        %v3177 = vpop.f32.mrf.mxu0
        %3178 = vmatprep.mubr.bf16.mxu0 0
        %3179 = vmatmul.mubr.bf16.gmra.mxu0 %v3006
        %v3180 = vpop.f32.mrf.mxu0
        %v3181 = vadd.f32 0.0, %v3180
        %v3182 = vpop.f32.mrf.mxu0
        %v3183 = vpop.f32.mrf.mxu0
        %v3184 = vadd.f32 0.0, %v3183
        %v3185 = vpop.f32.mrf.mxu0
        %3186 = vmatprep.mubr.bf16.mxu0 0
        %3187 = vmatmul.mubr.bf16.gmra.mxu0 %v3009
        %v3188 = vpop.f32.mrf.mxu0
        %v3189 = vadd.f32 0.0, %v3188
        %v3190 = vpop.f32.mrf.mxu0
        %v3191 = vpop.f32.mrf.mxu0
        %v3192 = vadd.f32 0.0, %v3191
        %v3193 = vpop.f32.mrf.mxu0
        %3194 = vmatprep.mubr.bf16.mxu0 0
        %3195 = vmatmul.mubr.bf16.gmra.mxu0 %v3012
        %v3196 = vpop.f32.mrf.mxu0
        %v3197 = vadd.f32 0.0, %v3196
        %v3198 = vpop.f32.mrf.mxu0
        %v3199 = vpop.f32.mrf.mxu0
        %v3200 = vadd.f32 0.0, %v3199
        %v3201 = vpop.f32.mrf.mxu0
        %3202 = vmatprep.mubr.bf16.mxu0 0
        %3203 = vmatmul.mubr.bf16.gmra.mxu0 %v3015
        %v3204 = vpop.f32.mrf.mxu0
        %v3205 = vadd.f32 0.0, %v3204
        %v3206 = vpop.f32.mrf.mxu0
        %v3207 = vpop.f32.mrf.mxu0
        %v3208 = vadd.f32 0.0, %v3207
        %v3209 = vpop.f32.mrf.mxu0
        %3210 = vmatprep.mubr.bf16.mxu0 0
        %3211 = vmatmul.mubr.bf16.gmra.mxu0 %v3018
        %v3212 = vpop.f32.mrf.mxu0
        %v3213 = vadd.f32 0.0, %v3212
        %v3214 = vpop.f32.mrf.mxu0
        %v3215 = vpop.f32.mrf.mxu0
        %v3216 = vadd.f32 0.0, %v3215
        %v3217 = vpop.f32.mrf.mxu0
        %3218 = vmatprep.mubr.bf16.mxu0 0
        %3219 = vmatmul.mubr.bf16.gmra.mxu0 %v3021
        %v3220 = vpop.f32.mrf.mxu0
        %v3221 = vadd.f32 0.0, %v3220
        %v3222 = vpop.f32.mrf.mxu0
        %v3223 = vpop.f32.mrf.mxu0
        %v3224 = vadd.f32 0.0, %v3223
        %v3225 = vpop.f32.mrf.mxu0
        %3226 = vmatprep.mubr.bf16.mxu0 0
        %3227 = vmatmul.mubr.bf16.gmra.mxu0 %v3024
        %v3228 = vpop.f32.mrf.mxu0
        %v3229 = vadd.f32 0.0, %v3228
        %v3230 = vpop.f32.mrf.mxu0
        %v3231 = vpop.f32.mrf.mxu0
        %v3232 = vadd.f32 0.0, %v3231
        %v3233 = vpop.f32.mrf.mxu0
        %3234 = vmatprep.mubr.bf16.mxu0 0
        %3235 = vmatmul.mubr.bf16.gmra.mxu0 %v3027
        %v3236 = vpop.f32.mrf.mxu0
        %v3237 = vadd.f32 0.0, %v3236
        %v3238 = vpop.f32.mrf.mxu0
        %v3239 = vpop.f32.mrf.mxu0
        %v3240 = vadd.f32 0.0, %v3239
        %v3241 = vpop.f32.mrf.mxu0
        %3242 = vmatprep.mubr.bf16.mxu0 0
        %3243 = vmatmul.mubr.bf16.gmra.mxu0 %v3030
        %v3244 = vpop.f32.mrf.mxu0
        %v3245 = vadd.f32 0.0, %v3244
        %v3246 = vpop.f32.mrf.mxu0
        %v3247 = vpop.f32.mrf.mxu0
        %v3248 = vadd.f32 0.0, %v3247
        %v3249 = vpop.f32.mrf.mxu0
        %3250 = vmatprep.mubr.bf16.mxu0 0
        %3251 = vmatmul.mubr.bf16.gmra.mxu0 %v3033
        %v3252 = vpop.f32.mrf.mxu0
        %v3253 = vadd.f32 0.0, %v3252
        %v3254 = vpop.f32.mrf.mxu0
        %v3255 = vpop.f32.mrf.mxu0
        %v3256 = vadd.f32 0.0, %v3255
        %v3257 = vpop.f32.mrf.mxu0
        %3258 = vmatprep.mubr.bf16.mxu0 0
        %3259 = vmatmul.mubr.bf16.gmra.mxu0 %v3036
        %v3260 = vpop.f32.mrf.mxu0
        %v3261 = vadd.f32 0.0, %v3260
        %v3262 = vpop.f32.mrf.mxu0
        %v3263 = vpop.f32.mrf.mxu0
        %v3264 = vadd.f32 0.0, %v3263
        %v3265 = vpop.f32.mrf.mxu0
        %3266 = vmatprep.mubr.bf16.mxu0 0
        %3267 = vmatmul.mubr.bf16.gmra.mxu0 %v3039
        %v3268 = vpop.f32.mrf.mxu0
        %v3269 = vadd.f32 0.0, %v3268
        %v3270 = vpop.f32.mrf.mxu0
        %v3271 = vpop.f32.mrf.mxu0
        %v3272 = vadd.f32 0.0, %v3271
        %v3273 = vpop.f32.mrf.mxu0
        %3274 = vmatprep.mubr.bf16.mxu0 0
        %3275 = vmatmul.mubr.bf16.gmra.mxu0 %v3042
        %v3276 = vpop.f32.mrf.mxu0
        %v3277 = vadd.f32 0.0, %v3276
        %v3278 = vpop.f32.mrf.mxu0
        %v3279 = vpop.f32.mrf.mxu0
        %v3280 = vadd.f32 0.0, %v3279
        %v3281 = vpop.f32.mrf.mxu0
        %3282 = vmatprep.mubr.bf16.mxu0 0
        %3283 = vmatmul.mubr.bf16.gmra.mxu0 %v3045
        %v3284 = vpop.f32.mrf.mxu0
        %v3285 = vadd.f32 0.0, %v3284
        %v3286 = vpop.f32.mrf.mxu0
        %v3287 = vpop.f32.mrf.mxu0
        %v3288 = vadd.f32 0.0, %v3287
        %v3289 = vpop.f32.mrf.mxu0
        %3290 = vmatprep.mubr.bf16.mxu0 0
        %3291 = vmatmul.mubr.bf16.gmra.mxu0 %v3048
        %v3292 = vpop.f32.mrf.mxu0
        %v3293 = vadd.f32 0.0, %v3292
        %v3294 = vpop.f32.mrf.mxu0
        %v3295 = vpop.f32.mrf.mxu0
        %v3296 = vadd.f32 0.0, %v3295
        %v3297 = vpop.f32.mrf.mxu0
        %3298 = vmatprep.mubr.bf16.mxu0 0
        %3299 = vmatmul.mubr.bf16.gmra.mxu0 %v3051
        %v3300 = vpop.f32.mrf.mxu0
        %v3301 = vadd.f32 0.0, %v3300
        %v3302 = vpop.f32.mrf.mxu0
        %v3303 = vpop.f32.mrf.mxu0
        %v3304 = vadd.f32 0.0, %v3303
        %v3305 = vpop.f32.mrf.mxu0
        %3306 = vmatprep.mubr.bf16.mxu0 0
        %3307 = vmatmul.mubr.bf16.gmra.mxu0 %v3054
        %v3308 = vpop.f32.mrf.mxu0
        %v3309 = vadd.f32 0.0, %v3308
        %v3310 = vpop.f32.mrf.mxu0
        %v3311 = vpop.f32.mrf.mxu0
        %v3312 = vadd.f32 0.0, %v3311
        %v3313 = vpop.f32.mrf.mxu0
        %3314 = vmatprep.mubr.bf16.mxu0 0
        %3315 = vmatmul.mubr.bf16.gmra.mxu0 %v3057
        %v3316 = vpop.f32.mrf.mxu0
        %v3317 = vadd.f32 0.0, %v3316
        %v3318 = vpop.f32.mrf.mxu0
        %v3319 = vpop.f32.mrf.mxu0
        %v3320 = vadd.f32 0.0, %v3319
        %v3321 = vpop.f32.mrf.mxu0
        %3322 = vmatprep.mubr.bf16.mxu0 0
        %3323 = vmatmul.mubr.bf16.gmra.mxu0 %v3060
        %v3324 = vpop.f32.mrf.mxu0
        %v3325 = vadd.f32 0.0, %v3324
        %v3326 = vpop.f32.mrf.mxu0
        %v3327 = vpop.f32.mrf.mxu0
        %v3328 = vadd.f32 0.0, %v3327
        %v3329 = vpop.f32.mrf.mxu0
        %3330 = vmatprep.mubr.bf16.mxu0 0
        %3331 = vmatmul.mubr.bf16.gmra.mxu0 %v3063
        %v3332 = vpop.f32.mrf.mxu0
        %v3333 = vadd.f32 0.0, %v3332
        %v3334 = vpop.f32.mrf.mxu0
        %v3335 = vpop.f32.mrf.mxu0
        %v3336 = vadd.f32 0.0, %v3335
        %v3337 = vpop.f32.mrf.mxu0
        %3338 = vmatprep.mubr.bf16.mxu0 0
        %3339 = vmatmul.mubr.bf16.gmra.mxu0 %v3066
        %v3340 = vpop.f32.mrf.mxu0
        %v3341 = vadd.f32 0.0, %v3340
        %v3342 = vpop.f32.mrf.mxu0
        %v3343 = vpop.f32.mrf.mxu0
        %v3344 = vadd.f32 0.0, %v3343
        %v3345 = vpop.f32.mrf.mxu0
        %3346 = vmatprep.mubr.bf16.mxu0 0
        %3347 = vmatmul.mubr.bf16.gmra.mxu0 %v3069
        %v3348 = vpop.f32.mrf.mxu0
        %v3349 = vadd.f32 0.0, %v3348
        %v3350 = vpop.f32.mrf.mxu0
        %v3351 = vpop.f32.mrf.mxu0
        %v3352 = vadd.f32 0.0, %v3351
        %v3353 = vpop.f32.mrf.mxu0
        %3354 = vmatprep.mubr.bf16.mxu0 0
        %3355 = vmatmul.mubr.bf16.gmra.mxu0 %v3072
        %v3356 = vpop.f32.mrf.mxu0
        %v3357 = vadd.f32 0.0, %v3356
        %v3358 = vpop.f32.mrf.mxu0
        %v3359 = vpop.f32.mrf.mxu0
        %v3360 = vadd.f32 0.0, %v3359
        %v3361 = vpop.f32.mrf.mxu0
        %3362 = vdwg.mxu0
        %v3367 = vunpack.c.l.b16 %v2925
        %v3368 = vunpack.c.l.b16 %v2926
        %v3369 = vunpack.c.l.b16 %v2927
        %v3370 = vunpack.c.l.b16 %v2928
        %v3371 = vpack.c.b16 %v3368, %v3367
        %v3372 = vpack.c.b16 %v3370, %v3369
        %v3376 = vsel %vm2977, %v2893, 0
        %v3379 = vsel %vm2977, %v2894, 0
        %v3382 = vsel %vm2977, %v2895, 0
        %v3385 = vsel %vm2977, %v2896, 0
        %v3388 = vsel %vm2977, %v2897, 0
        %v3391 = vsel %vm2977, %v2898, 0
        %v3394 = vsel %vm2977, %v2899, 0
        %v3397 = vsel %vm2977, %v2900, 0
        %v3400 = vsel %vm2977, %v2901, 0
        %v3403 = vsel %vm2977, %v2902, 0
        %v3406 = vsel %vm2977, %v2903, 0
        %v3409 = vsel %vm2977, %v2904, 0
        %v3412 = vsel %vm2977, %v2905, 0
        %v3415 = vsel %vm2977, %v2906, 0
        %v3418 = vsel %vm2977, %v2907, 0
        %v3421 = vsel %vm2977, %v2908, 0
        %v3424 = vsel %vm2977, %v2909, 0
        %v3427 = vsel %vm2977, %v2910, 0
        %v3430 = vsel %vm2977, %v2911, 0
        %v3433 = vsel %vm2977, %v2912, 0
        %v3436 = vsel %vm2977, %v2913, 0
        %v3439 = vsel %vm2977, %v2914, 0
        %v3442 = vsel %vm2977, %v2915, 0
        %v3445 = vsel %vm2977, %v2916, 0
        %v3448 = vsel %vm2977, %v2917, 0
        %v3451 = vsel %vm2977, %v2918, 0
        %v3454 = vsel %vm2977, %v2919, 0
        %v3457 = vsel %vm2977, %v2920, 0
        %v3460 = vsel %vm2977, %v2921, 0
        %v3463 = vsel %vm2977, %v2922, 0
        %v3466 = vsel %vm2977, %v2923, 0
        %v3469 = vsel %vm2977, %v2924, 0
        %3471 = vmatprep.subr.bf16.mxu0 0
        %3472 = vmatpush1.bf16.msra.mxu0 0
        %3473 = vmatprep.subr.bf16.mxu0 0
        %3474 = vmatpush1.bf16.msra.mxu0 0
        %3475 = vmatprep.subr.bf16.mxu0 0
        %3476 = vmatpush1.bf16.msra.mxu0 0
        %3477 = vmatprep.subr.bf16.mxu0 0
        %3478 = vmatpush1.bf16.msra.mxu0 0
        %3479 = vmatprep.subr.bf16.mxu0 0
        %3480 = vmatpush1.bf16.msra.mxu0 0
        %3481 = vmatprep.subr.bf16.mxu0 0
        %3482 = vmatpush1.bf16.msra.mxu0 0
        %3483 = vmatprep.subr.bf16.mxu0 0
        %3484 = vmatpush1.bf16.msra.mxu0 %v3372
        %3485 = vmatprep.subr.bf16.mxu0 0
        %3486 = vmatpush1.bf16.msra.mxu0 %v3371
        %3487 = vmatprep.subr.bf16.mxu0 0
        %3488 = vmatpush2.bf16.msra.mxu0 0
        %3489 = vmatprep.subr.bf16.mxu0 0
        %3490 = vmatpush2.bf16.msra.mxu0 0
        %3491 = vmatprep.subr.bf16.mxu0 0
        %3492 = vmatpush2.bf16.msra.mxu0 0
        %3493 = vmatprep.subr.bf16.mxu0 0
        %3494 = vmatpush2.bf16.msra.mxu0 0
        %3495 = vmatprep.subr.bf16.mxu0 0
        %3496 = vmatpush2.bf16.msra.mxu0 0
        %3497 = vmatprep.subr.bf16.mxu0 0
        %3498 = vmatpush2.bf16.msra.mxu0 0
        %3499 = vmatprep.subr.bf16.mxu0 0
        %3500 = vmatpush2.bf16.msra.mxu0 0
        %3501 = vmatprep.subr.bf16.mxu0 0
        %3502 = vmatpush2.bf16.msra.mxu0 0
        %3503 = vmatprep.mubr.bf16.mxu0 0
        %3504 = vmatmul.mubr.bf16.gmra.mxu0 %v3376
        %v3505 = vpop.f32.mrf.mxu0
        %v3506 = vadd.f32 %v3109, %v3505
        %v3507 = vpop.f32.mrf.mxu0
        %v3508 = vpop.f32.mrf.mxu0
        %v3509 = vadd.f32 %v3112, %v3508
        %v3510 = vpop.f32.mrf.mxu0
        %3511 = vmatprep.mubr.bf16.mxu0 0
        %3512 = vmatmul.mubr.bf16.gmra.mxu0 %v3379
        %v3513 = vpop.f32.mrf.mxu0
        %v3514 = vadd.f32 %v3117, %v3513
        %v3515 = vpop.f32.mrf.mxu0
        %v3516 = vpop.f32.mrf.mxu0
        %v3517 = vadd.f32 %v3120, %v3516
        %v3518 = vpop.f32.mrf.mxu0
        %3519 = vmatprep.mubr.bf16.mxu0 0
        %3520 = vmatmul.mubr.bf16.gmra.mxu0 %v3382
        %v3521 = vpop.f32.mrf.mxu0
        %v3522 = vadd.f32 %v3125, %v3521
        %v3523 = vpop.f32.mrf.mxu0
        %v3524 = vpop.f32.mrf.mxu0
        %v3525 = vadd.f32 %v3128, %v3524
        %v3526 = vpop.f32.mrf.mxu0
        %3527 = vmatprep.mubr.bf16.mxu0 0
        %3528 = vmatmul.mubr.bf16.gmra.mxu0 %v3385
        %v3529 = vpop.f32.mrf.mxu0
        %v3530 = vadd.f32 %v3133, %v3529
        %v3531 = vpop.f32.mrf.mxu0
        %v3532 = vpop.f32.mrf.mxu0
        %v3533 = vadd.f32 %v3136, %v3532
        %v3534 = vpop.f32.mrf.mxu0
        %3535 = vmatprep.mubr.bf16.mxu0 0
        %3536 = vmatmul.mubr.bf16.gmra.mxu0 %v3388
        %v3537 = vpop.f32.mrf.mxu0
        %v3538 = vadd.f32 %v3141, %v3537
        %v3539 = vpop.f32.mrf.mxu0
        %v3540 = vpop.f32.mrf.mxu0
        %v3541 = vadd.f32 %v3144, %v3540
        %v3542 = vpop.f32.mrf.mxu0
        %3543 = vmatprep.mubr.bf16.mxu0 0
        %3544 = vmatmul.mubr.bf16.gmra.mxu0 %v3391
        %v3545 = vpop.f32.mrf.mxu0
        %v3546 = vadd.f32 %v3149, %v3545
        %v3547 = vpop.f32.mrf.mxu0
        %v3548 = vpop.f32.mrf.mxu0
        %v3549 = vadd.f32 %v3152, %v3548
        %v3550 = vpop.f32.mrf.mxu0
        %3551 = vmatprep.mubr.bf16.mxu0 0
        %3552 = vmatmul.mubr.bf16.gmra.mxu0 %v3394
        %v3553 = vpop.f32.mrf.mxu0
        %v3554 = vadd.f32 %v3157, %v3553
        %v3555 = vpop.f32.mrf.mxu0
        %v3556 = vpop.f32.mrf.mxu0
        %v3557 = vadd.f32 %v3160, %v3556
        %v3558 = vpop.f32.mrf.mxu0
        %3559 = vmatprep.mubr.bf16.mxu0 0
        %3560 = vmatmul.mubr.bf16.gmra.mxu0 %v3397
        %v3561 = vpop.f32.mrf.mxu0
        %v3562 = vadd.f32 %v3165, %v3561
        %v3563 = vpop.f32.mrf.mxu0
        %v3564 = vpop.f32.mrf.mxu0
        %v3565 = vadd.f32 %v3168, %v3564
        %v3566 = vpop.f32.mrf.mxu0
        %3567 = vmatprep.mubr.bf16.mxu0 0
        %3568 = vmatmul.mubr.bf16.gmra.mxu0 %v3400
        %v3569 = vpop.f32.mrf.mxu0
        %v3570 = vadd.f32 %v3173, %v3569
        %v3571 = vpop.f32.mrf.mxu0
        %v3572 = vpop.f32.mrf.mxu0
        %v3573 = vadd.f32 %v3176, %v3572
        %v3574 = vpop.f32.mrf.mxu0
        %3575 = vmatprep.mubr.bf16.mxu0 0
        %3576 = vmatmul.mubr.bf16.gmra.mxu0 %v3403
        %v3577 = vpop.f32.mrf.mxu0
        %v3578 = vadd.f32 %v3181, %v3577
        %v3579 = vpop.f32.mrf.mxu0
        %v3580 = vpop.f32.mrf.mxu0
        %v3581 = vadd.f32 %v3184, %v3580
        %v3582 = vpop.f32.mrf.mxu0
        %3583 = vmatprep.mubr.bf16.mxu0 0
        %3584 = vmatmul.mubr.bf16.gmra.mxu0 %v3406
        %v3585 = vpop.f32.mrf.mxu0
        %v3586 = vadd.f32 %v3189, %v3585
        %v3587 = vpop.f32.mrf.mxu0
        %v3588 = vpop.f32.mrf.mxu0
        %v3589 = vadd.f32 %v3192, %v3588
        %v3590 = vpop.f32.mrf.mxu0
        %3591 = vmatprep.mubr.bf16.mxu0 0
        %3592 = vmatmul.mubr.bf16.gmra.mxu0 %v3409
        %v3593 = vpop.f32.mrf.mxu0
        %v3594 = vadd.f32 %v3197, %v3593
        %v3595 = vpop.f32.mrf.mxu0
        %v3596 = vpop.f32.mrf.mxu0
        %v3597 = vadd.f32 %v3200, %v3596
        %v3598 = vpop.f32.mrf.mxu0
        %3599 = vmatprep.mubr.bf16.mxu0 0
        %3600 = vmatmul.mubr.bf16.gmra.mxu0 %v3412
        %v3601 = vpop.f32.mrf.mxu0
        %v3602 = vadd.f32 %v3205, %v3601
        %v3603 = vpop.f32.mrf.mxu0
        %v3604 = vpop.f32.mrf.mxu0
        %v3605 = vadd.f32 %v3208, %v3604
        %v3606 = vpop.f32.mrf.mxu0
        %3607 = vmatprep.mubr.bf16.mxu0 0
        %3608 = vmatmul.mubr.bf16.gmra.mxu0 %v3415
        %v3609 = vpop.f32.mrf.mxu0
        %v3610 = vadd.f32 %v3213, %v3609
        %v3611 = vpop.f32.mrf.mxu0
        %v3612 = vpop.f32.mrf.mxu0
        %v3613 = vadd.f32 %v3216, %v3612
        %v3614 = vpop.f32.mrf.mxu0
        %3615 = vmatprep.mubr.bf16.mxu0 0
        %3616 = vmatmul.mubr.bf16.gmra.mxu0 %v3418
        %v3617 = vpop.f32.mrf.mxu0
        %v3618 = vadd.f32 %v3221, %v3617
        %v3619 = vpop.f32.mrf.mxu0
        %v3620 = vpop.f32.mrf.mxu0
        %v3621 = vadd.f32 %v3224, %v3620
        %v3622 = vpop.f32.mrf.mxu0
        %3623 = vmatprep.mubr.bf16.mxu0 0
        %3624 = vmatmul.mubr.bf16.gmra.mxu0 %v3421
        %v3625 = vpop.f32.mrf.mxu0
        %v3626 = vadd.f32 %v3229, %v3625
        %v3627 = vpop.f32.mrf.mxu0
        %v3628 = vpop.f32.mrf.mxu0
        %v3629 = vadd.f32 %v3232, %v3628
        %v3630 = vpop.f32.mrf.mxu0
        %3631 = vmatprep.mubr.bf16.mxu0 0
        %3632 = vmatmul.mubr.bf16.gmra.mxu0 %v3424
        %v3633 = vpop.f32.mrf.mxu0
        %v3634 = vadd.f32 %v3237, %v3633
        %v3635 = vpop.f32.mrf.mxu0
        %v3636 = vpop.f32.mrf.mxu0
        %v3637 = vadd.f32 %v3240, %v3636
        %v3638 = vpop.f32.mrf.mxu0
        %3639 = vmatprep.mubr.bf16.mxu0 0
        %3640 = vmatmul.mubr.bf16.gmra.mxu0 %v3427
        %v3641 = vpop.f32.mrf.mxu0
        %v3642 = vadd.f32 %v3245, %v3641
        %v3643 = vpop.f32.mrf.mxu0
        %v3644 = vpop.f32.mrf.mxu0
        %v3645 = vadd.f32 %v3248, %v3644
        %v3646 = vpop.f32.mrf.mxu0
        %3647 = vmatprep.mubr.bf16.mxu0 0
        %3648 = vmatmul.mubr.bf16.gmra.mxu0 %v3430
        %v3649 = vpop.f32.mrf.mxu0
        %v3650 = vadd.f32 %v3253, %v3649
        %v3651 = vpop.f32.mrf.mxu0
        %v3652 = vpop.f32.mrf.mxu0
        %v3653 = vadd.f32 %v3256, %v3652
        %v3654 = vpop.f32.mrf.mxu0
        %3655 = vmatprep.mubr.bf16.mxu0 0
        %3656 = vmatmul.mubr.bf16.gmra.mxu0 %v3433
        %v3657 = vpop.f32.mrf.mxu0
        %v3658 = vadd.f32 %v3261, %v3657
        %v3659 = vpop.f32.mrf.mxu0
        %v3660 = vpop.f32.mrf.mxu0
        %v3661 = vadd.f32 %v3264, %v3660
        %v3662 = vpop.f32.mrf.mxu0
        %3663 = vmatprep.mubr.bf16.mxu0 0
        %3664 = vmatmul.mubr.bf16.gmra.mxu0 %v3436
        %v3665 = vpop.f32.mrf.mxu0
        %v3666 = vadd.f32 %v3269, %v3665
        %v3667 = vpop.f32.mrf.mxu0
        %v3668 = vpop.f32.mrf.mxu0
        %v3669 = vadd.f32 %v3272, %v3668
        %v3670 = vpop.f32.mrf.mxu0
        %3671 = vmatprep.mubr.bf16.mxu0 0
        %3672 = vmatmul.mubr.bf16.gmra.mxu0 %v3439
        %v3673 = vpop.f32.mrf.mxu0
        %v3674 = vadd.f32 %v3277, %v3673
        %v3675 = vpop.f32.mrf.mxu0
        %v3676 = vpop.f32.mrf.mxu0
        %v3677 = vadd.f32 %v3280, %v3676
        %v3678 = vpop.f32.mrf.mxu0
        %3679 = vmatprep.mubr.bf16.mxu0 0
        %3680 = vmatmul.mubr.bf16.gmra.mxu0 %v3442
        %v3681 = vpop.f32.mrf.mxu0
        %v3682 = vadd.f32 %v3285, %v3681
        %v3683 = vpop.f32.mrf.mxu0
        %v3684 = vpop.f32.mrf.mxu0
        %v3685 = vadd.f32 %v3288, %v3684
        %v3686 = vpop.f32.mrf.mxu0
        %3687 = vmatprep.mubr.bf16.mxu0 0
        %3688 = vmatmul.mubr.bf16.gmra.mxu0 %v3445
        %v3689 = vpop.f32.mrf.mxu0
        %v3690 = vadd.f32 %v3293, %v3689
        %v3691 = vpop.f32.mrf.mxu0
        %v3692 = vpop.f32.mrf.mxu0
        %v3693 = vadd.f32 %v3296, %v3692
        %v3694 = vpop.f32.mrf.mxu0
        %3695 = vmatprep.mubr.bf16.mxu0 0
        %3696 = vmatmul.mubr.bf16.gmra.mxu0 %v3448
        %v3697 = vpop.f32.mrf.mxu0
        %v3698 = vadd.f32 %v3301, %v3697
        %v3699 = vpop.f32.mrf.mxu0
        %v3700 = vpop.f32.mrf.mxu0
        %v3701 = vadd.f32 %v3304, %v3700
        %v3702 = vpop.f32.mrf.mxu0
        %3703 = vmatprep.mubr.bf16.mxu0 0
        %3704 = vmatmul.mubr.bf16.gmra.mxu0 %v3451
        %v3705 = vpop.f32.mrf.mxu0
        %v3706 = vadd.f32 %v3309, %v3705
        %v3707 = vpop.f32.mrf.mxu0
        %v3708 = vpop.f32.mrf.mxu0
        %v3709 = vadd.f32 %v3312, %v3708
        %v3710 = vpop.f32.mrf.mxu0
        %3711 = vmatprep.mubr.bf16.mxu0 0
        %3712 = vmatmul.mubr.bf16.gmra.mxu0 %v3454
        %v3713 = vpop.f32.mrf.mxu0
        %v3714 = vadd.f32 %v3317, %v3713
        %v3715 = vpop.f32.mrf.mxu0
        %v3716 = vpop.f32.mrf.mxu0
        %v3717 = vadd.f32 %v3320, %v3716
        %v3718 = vpop.f32.mrf.mxu0
        %3719 = vmatprep.mubr.bf16.mxu0 0
        %3720 = vmatmul.mubr.bf16.gmra.mxu0 %v3457
        %v3721 = vpop.f32.mrf.mxu0
        %v3722 = vadd.f32 %v3325, %v3721
        %v3723 = vpop.f32.mrf.mxu0
        %v3724 = vpop.f32.mrf.mxu0
        %v3725 = vadd.f32 %v3328, %v3724
        %v3726 = vpop.f32.mrf.mxu0
        %3727 = vmatprep.mubr.bf16.mxu0 0
        %3728 = vmatmul.mubr.bf16.gmra.mxu0 %v3460
        %v3729 = vpop.f32.mrf.mxu0
        %v3730 = vadd.f32 %v3333, %v3729
        %v3731 = vpop.f32.mrf.mxu0
        %v3732 = vpop.f32.mrf.mxu0
        %v3733 = vadd.f32 %v3336, %v3732
        %v3734 = vpop.f32.mrf.mxu0
        %3735 = vmatprep.mubr.bf16.mxu0 0
        %3736 = vmatmul.mubr.bf16.gmra.mxu0 %v3463
        %v3737 = vpop.f32.mrf.mxu0
        %v3738 = vadd.f32 %v3341, %v3737
        %v3739 = vpop.f32.mrf.mxu0
        %v3740 = vpop.f32.mrf.mxu0
        %v3741 = vadd.f32 %v3344, %v3740
        %v3742 = vpop.f32.mrf.mxu0
        %3743 = vmatprep.mubr.bf16.mxu0 0
        %3744 = vmatmul.mubr.bf16.gmra.mxu0 %v3466
        %v3745 = vpop.f32.mrf.mxu0
        %v3746 = vadd.f32 %v3349, %v3745
        %v3747 = vpop.f32.mrf.mxu0
        %v3748 = vpop.f32.mrf.mxu0
        %v3749 = vadd.f32 %v3352, %v3748
        %v3750 = vpop.f32.mrf.mxu0
        %3751 = vmatprep.mubr.bf16.mxu0 0
        %3752 = vmatmul.mubr.bf16.gmra.mxu0 %v3469
        %v3753 = vpop.f32.mrf.mxu0
        %v3754 = vadd.f32 %v3357, %v3753
        %v3755 = vpop.f32.mrf.mxu0
        %v3756 = vpop.f32.mrf.mxu0
        %v3757 = vadd.f32 %v3360, %v3756
        %v3758 = vpop.f32.mrf.mxu0
        %3759 = vdwg.mxu0
        %v3760 = vld [vmem:[%s8] sm:$0x1]
        %v3762 = vlaneseq
        %v3763 = vshrl.u32 %v3762, 7
        %v3764 = vsub.s32 0, %v3763
        %v3765 = vrot.slane %v3760, %v3764
        %v3767 = vadd.f32 %v3506, %v3765
        %v3768 = vadd.f32 %v3509, %v3765
        %v3769 = vadd.f32 %v3514, %v3765
        %v3770 = vadd.f32 %v3517, %v3765
        %v3771 = vadd.f32 %v3522, %v3765
        %v3772 = vadd.f32 %v3525, %v3765
        %v3773 = vadd.f32 %v3530, %v3765
        %v3774 = vadd.f32 %v3533, %v3765
        %v3775 = vadd.f32 %v3538, %v3765
        %v3776 = vadd.f32 %v3541, %v3765
        %v3777 = vadd.f32 %v3546, %v3765
        %v3778 = vadd.f32 %v3549, %v3765
        %v3779 = vadd.f32 %v3554, %v3765
        %v3780 = vadd.f32 %v3557, %v3765
        %v3781 = vadd.f32 %v3562, %v3765
        %v3782 = vadd.f32 %v3565, %v3765
        %v3783 = vadd.f32 %v3570, %v3765
        %v3784 = vadd.f32 %v3573, %v3765
        %v3785 = vadd.f32 %v3578, %v3765
        %v3786 = vadd.f32 %v3581, %v3765
        %v3787 = vadd.f32 %v3586, %v3765
        %v3788 = vadd.f32 %v3589, %v3765
        %v3789 = vadd.f32 %v3594, %v3765
        %v3790 = vadd.f32 %v3597, %v3765
        %v3791 = vadd.f32 %v3602, %v3765
        %v3792 = vadd.f32 %v3605, %v3765
        %v3793 = vadd.f32 %v3610, %v3765
        %v3794 = vadd.f32 %v3613, %v3765
        %v3795 = vadd.f32 %v3618, %v3765
        %v3796 = vadd.f32 %v3621, %v3765
        %v3797 = vadd.f32 %v3626, %v3765
        %v3798 = vadd.f32 %v3629, %v3765
        %v3799 = vadd.f32 %v3634, %v3765
        %v3800 = vadd.f32 %v3637, %v3765
        %v3801 = vadd.f32 %v3642, %v3765
        %v3802 = vadd.f32 %v3645, %v3765
        %v3803 = vadd.f32 %v3650, %v3765
        %v3804 = vadd.f32 %v3653, %v3765
        %v3805 = vadd.f32 %v3658, %v3765
        %v3806 = vadd.f32 %v3661, %v3765
        %v3807 = vadd.f32 %v3666, %v3765
        %v3808 = vadd.f32 %v3669, %v3765
        %v3809 = vadd.f32 %v3674, %v3765
        %v3810 = vadd.f32 %v3677, %v3765
        %v3811 = vadd.f32 %v3682, %v3765
        %v3812 = vadd.f32 %v3685, %v3765
        %v3813 = vadd.f32 %v3690, %v3765
        %v3814 = vadd.f32 %v3693, %v3765
        %v3815 = vadd.f32 %v3698, %v3765
        %v3816 = vadd.f32 %v3701, %v3765
        %v3817 = vadd.f32 %v3706, %v3765
        %v3818 = vadd.f32 %v3709, %v3765
        %v3819 = vadd.f32 %v3714, %v3765
        %v3820 = vadd.f32 %v3717, %v3765
        %v3821 = vadd.f32 %v3722, %v3765
        %v3822 = vadd.f32 %v3725, %v3765
        %v3823 = vadd.f32 %v3730, %v3765
        %v3824 = vadd.f32 %v3733, %v3765
        %v3825 = vadd.f32 %v3738, %v3765
        %v3826 = vadd.f32 %v3741, %v3765
        %v3827 = vadd.f32 %v3746, %v3765
        %v3828 = vadd.f32 %v3749, %v3765
        %v3829 = vadd.f32 %v3754, %v3765
        %v3830 = vadd.f32 %v3757, %v3765
        %v3831 = vmax.f32 %v3767, 0.0
        %v3832 = vmax.f32 %v3768, 0.0
        %v3833 = vmax.f32 %v3769, 0.0
        %v3834 = vmax.f32 %v3770, 0.0
        %v3835 = vmax.f32 %v3771, 0.0
        %v3836 = vmax.f32 %v3772, 0.0
        %v3837 = vmax.f32 %v3773, 0.0
        %v3838 = vmax.f32 %v3774, 0.0
        %v3839 = vmax.f32 %v3775, 0.0
        %v3840 = vmax.f32 %v3776, 0.0
        %v3841 = vmax.f32 %v3777, 0.0
        %v3842 = vmax.f32 %v3778, 0.0
        %v3843 = vmax.f32 %v3779, 0.0
        %v3844 = vmax.f32 %v3780, 0.0
        %v3845 = vmax.f32 %v3781, 0.0
        %v3846 = vmax.f32 %v3782, 0.0
        %v3847 = vmax.f32 %v3783, 0.0
        %v3848 = vmax.f32 %v3784, 0.0
        %v3849 = vmax.f32 %v3785, 0.0
        %v3850 = vmax.f32 %v3786, 0.0
        %v3851 = vmax.f32 %v3787, 0.0
        %v3852 = vmax.f32 %v3788, 0.0
        %v3853 = vmax.f32 %v3789, 0.0
        %v3854 = vmax.f32 %v3790, 0.0
        %v3855 = vmax.f32 %v3791, 0.0
        %v3856 = vmax.f32 %v3792, 0.0
        %v3857 = vmax.f32 %v3793, 0.0
        %v3858 = vmax.f32 %v3794, 0.0
        %v3859 = vmax.f32 %v3795, 0.0
        %v3860 = vmax.f32 %v3796, 0.0
        %v3861 = vmax.f32 %v3797, 0.0
        %v3862 = vmax.f32 %v3798, 0.0
        %v3863 = vmax.f32 %v3799, 0.0
        %v3864 = vmax.f32 %v3800, 0.0
        %v3865 = vmax.f32 %v3801, 0.0
        %v3866 = vmax.f32 %v3802, 0.0
        %v3867 = vmax.f32 %v3803, 0.0
        %v3868 = vmax.f32 %v3804, 0.0
        %v3869 = vmax.f32 %v3805, 0.0
        %v3870 = vmax.f32 %v3806, 0.0
        %v3871 = vmax.f32 %v3807, 0.0
        %v3872 = vmax.f32 %v3808, 0.0
        %v3873 = vmax.f32 %v3809, 0.0
        %v3874 = vmax.f32 %v3810, 0.0
        %v3875 = vmax.f32 %v3811, 0.0
        %v3876 = vmax.f32 %v3812, 0.0
        %v3877 = vmax.f32 %v3813, 0.0
        %v3878 = vmax.f32 %v3814, 0.0
        %v3879 = vmax.f32 %v3815, 0.0
        %v3880 = vmax.f32 %v3816, 0.0
        %v3881 = vmax.f32 %v3817, 0.0
        %v3882 = vmax.f32 %v3818, 0.0
        %v3883 = vmax.f32 %v3819, 0.0
        %v3884 = vmax.f32 %v3820, 0.0
        %v3885 = vmax.f32 %v3821, 0.0
        %v3886 = vmax.f32 %v3822, 0.0
        %v3887 = vmax.f32 %v3823, 0.0
        %v3888 = vmax.f32 %v3824, 0.0
        %v3889 = vmax.f32 %v3825, 0.0
        %v3890 = vmax.f32 %v3826, 0.0
        %v3891 = vmax.f32 %v3827, 0.0
        %v3892 = vmax.f32 %v3828, 0.0
        %v3893 = vmax.f32 %v3829, 0.0
        %v3894 = vmax.f32 %v3830, 0.0
        %v3895 = vpack.c.bf16 %v3832, %v3831
        %v3896 = vpack.c.bf16 %v3834, %v3833
        %v3897 = vpack.c.bf16 %v3836, %v3835
        %v3898 = vpack.c.bf16 %v3838, %v3837
        %v3899 = vpack.c.bf16 %v3840, %v3839
        %v3900 = vpack.c.bf16 %v3842, %v3841
        %v3901 = vpack.c.bf16 %v3844, %v3843
        %v3902 = vpack.c.bf16 %v3846, %v3845
        %v3903 = vpack.c.bf16 %v3848, %v3847
        %v3904 = vpack.c.bf16 %v3850, %v3849
        %v3905 = vpack.c.bf16 %v3852, %v3851
        %v3906 = vpack.c.bf16 %v3854, %v3853
        %v3907 = vpack.c.bf16 %v3856, %v3855
        %v3908 = vpack.c.bf16 %v3858, %v3857
        %v3909 = vpack.c.bf16 %v3860, %v3859
        %v3910 = vpack.c.bf16 %v3862, %v3861
        %v3911 = vpack.c.bf16 %v3864, %v3863
        %v3912 = vpack.c.bf16 %v3866, %v3865
        %v3913 = vpack.c.bf16 %v3868, %v3867
        %v3914 = vpack.c.bf16 %v3870, %v3869
        %v3915 = vpack.c.bf16 %v3872, %v3871
        %v3916 = vpack.c.bf16 %v3874, %v3873
        %v3917 = vpack.c.bf16 %v3876, %v3875
        %v3918 = vpack.c.bf16 %v3878, %v3877
        %v3919 = vpack.c.bf16 %v3880, %v3879
        %v3920 = vpack.c.bf16 %v3882, %v3881
        %v3921 = vpack.c.bf16 %v3884, %v3883
        %v3922 = vpack.c.bf16 %v3886, %v3885
        %v3923 = vpack.c.bf16 %v3888, %v3887
        %v3924 = vpack.c.bf16 %v3890, %v3889
        %v3925 = vpack.c.bf16 %v3892, %v3891
        %v3926 = vpack.c.bf16 %v3894, %v3893
        %v3927 = vld [vmem:[%s9] sm:$0xf]
        %v3928 = vld [vmem:[%s9 + $0x4] sm:$0xf]
        %v3929 = vld [vmem:[%s9 + $0x8] sm:$0xf]
        %v3930 = vld [vmem:[%s9 + $0xc] sm:$0xf]
        %v3931 = vld [vmem:[%s10] sm:$0x1]
        %v3933 = vlaneseq
        %v3934 = vshrl.u32 %v3933, 7
        %v3935 = vsub.s32 0, %v3934
        %v3936 = vrot.slane %v3931, %v3935
        %v3942 = vunpack.c.l.b16 %v3927
        %v3943 = vunpack.c.l.b16 %v3928
        %v3944 = vunpack.c.l.b16 %v3929
        %v3945 = vunpack.c.l.b16 %v3930
        %v3946 = vpack.c.b16 %v3943, %v3942
        %v3947 = vpack.c.b16 %v3945, %v3944
        %v3951 = vsel %vm2977, %v3895, 0
        %v3954 = vsel %vm2977, %v3896, 0
        %v3957 = vsel %vm2977, %v3897, 0
        %v3960 = vsel %vm2977, %v3898, 0
        %v3963 = vsel %vm2977, %v3899, 0
        %v3966 = vsel %vm2977, %v3900, 0
        %v3969 = vsel %vm2977, %v3901, 0
        %v3972 = vsel %vm2977, %v3902, 0
        %v3975 = vsel %vm2977, %v3903, 0
        %v3978 = vsel %vm2977, %v3904, 0
        %v3981 = vsel %vm2977, %v3905, 0
        %v3984 = vsel %vm2977, %v3906, 0
        %v3987 = vsel %vm2977, %v3907, 0
        %v3990 = vsel %vm2977, %v3908, 0
        %v3993 = vsel %vm2977, %v3909, 0
        %v3996 = vsel %vm2977, %v3910, 0
        %v3999 = vsel %vm2977, %v3911, 0
        %v4002 = vsel %vm2977, %v3912, 0
        %v4005 = vsel %vm2977, %v3913, 0
        %v4008 = vsel %vm2977, %v3914, 0
        %v4011 = vsel %vm2977, %v3915, 0
        %v4014 = vsel %vm2977, %v3916, 0
        %v4017 = vsel %vm2977, %v3917, 0
        %v4020 = vsel %vm2977, %v3918, 0
        %v4023 = vsel %vm2977, %v3919, 0
        %v4026 = vsel %vm2977, %v3920, 0
        %v4029 = vsel %vm2977, %v3921, 0
        %v4032 = vsel %vm2977, %v3922, 0
        %v4035 = vsel %vm2977, %v3923, 0
        %v4038 = vsel %vm2977, %v3924, 0
        %v4041 = vsel %vm2977, %v3925, 0
        %v4044 = vsel %vm2977, %v3926, 0
        %4046 = vmatprep.subr.bf16.mxu0 0
        %4047 = vmatpush1.bf16.msra.mxu0 0
        %4048 = vmatprep.subr.bf16.mxu0 0
        %4049 = vmatpush1.bf16.msra.mxu0 0
        %4050 = vmatprep.subr.bf16.mxu0 0
        %4051 = vmatpush1.bf16.msra.mxu0 0
        %4052 = vmatprep.subr.bf16.mxu0 0
        %4053 = vmatpush1.bf16.msra.mxu0 0
        %4054 = vmatprep.subr.bf16.mxu0 0
        %4055 = vmatpush1.bf16.msra.mxu0 0
        %4056 = vmatprep.subr.bf16.mxu0 0
        %4057 = vmatpush1.bf16.msra.mxu0 0
        %4058 = vmatprep.subr.bf16.mxu0 0
        %4059 = vmatpush1.bf16.msra.mxu0 %v3947
        %4060 = vmatprep.subr.bf16.mxu0 0
        %4061 = vmatpush1.bf16.msra.mxu0 %v3946
        %4062 = vmatprep.subr.bf16.mxu0 0
        %4063 = vmatpush2.bf16.msra.mxu0 0
        %4064 = vmatprep.subr.bf16.mxu0 0
        %4065 = vmatpush2.bf16.msra.mxu0 0
        %4066 = vmatprep.subr.bf16.mxu0 0
        %4067 = vmatpush2.bf16.msra.mxu0 0
        %4068 = vmatprep.subr.bf16.mxu0 0
        %4069 = vmatpush2.bf16.msra.mxu0 0
        %4070 = vmatprep.subr.bf16.mxu0 0
        %4071 = vmatpush2.bf16.msra.mxu0 0
        %4072 = vmatprep.subr.bf16.mxu0 0
        %4073 = vmatpush2.bf16.msra.mxu0 0
        %4074 = vmatprep.subr.bf16.mxu0 0
        %4075 = vmatpush2.bf16.msra.mxu0 0
        %4076 = vmatprep.subr.bf16.mxu0 0
        %4077 = vmatpush2.bf16.msra.mxu0 0
        %4078 = vmatprep.mubr.bf16.mxu0 0
        %4079 = vmatmul.mubr.bf16.gmra.mxu0 %v3951
        %v4080 = vpop.f32.mrf.mxu0
        %v4081 = vadd.f32 %v3936, %v4080
        %v4082 = vpop.f32.mrf.mxu0
        %v4083 = vpop.f32.mrf.mxu0
        %v4084 = vadd.f32 %v3936, %v4083
        %v4085 = vpop.f32.mrf.mxu0
        %4086 = vmatprep.mubr.bf16.mxu0 0
        %4087 = vmatmul.mubr.bf16.gmra.mxu0 %v3954
        %v4088 = vpop.f32.mrf.mxu0
        %v4089 = vadd.f32 %v3936, %v4088
        %v4090 = vpop.f32.mrf.mxu0
        %v4091 = vpop.f32.mrf.mxu0
        %v4092 = vadd.f32 %v3936, %v4091
        %v4093 = vpop.f32.mrf.mxu0
        %4094 = vmatprep.mubr.bf16.mxu0 0
        %4095 = vmatmul.mubr.bf16.gmra.mxu0 %v3957
        %v4096 = vpop.f32.mrf.mxu0
        %v4097 = vadd.f32 %v3936, %v4096
        %v4098 = vpop.f32.mrf.mxu0
        %v4099 = vpop.f32.mrf.mxu0
        %v4100 = vadd.f32 %v3936, %v4099
        %v4101 = vpop.f32.mrf.mxu0
        %4102 = vmatprep.mubr.bf16.mxu0 0
        %4103 = vmatmul.mubr.bf16.gmra.mxu0 %v3960
        %v4104 = vpop.f32.mrf.mxu0
        %v4105 = vadd.f32 %v3936, %v4104
        %v4106 = vpop.f32.mrf.mxu0
        %v4107 = vpop.f32.mrf.mxu0
        %v4108 = vadd.f32 %v3936, %v4107
        %v4109 = vpop.f32.mrf.mxu0
        %4110 = vmatprep.mubr.bf16.mxu0 0
        %4111 = vmatmul.mubr.bf16.gmra.mxu0 %v3963
        %v4112 = vpop.f32.mrf.mxu0
        %v4113 = vadd.f32 %v3936, %v4112
        %v4114 = vpop.f32.mrf.mxu0
        %v4115 = vpop.f32.mrf.mxu0
        %v4116 = vadd.f32 %v3936, %v4115
        %v4117 = vpop.f32.mrf.mxu0
        %4118 = vmatprep.mubr.bf16.mxu0 0
        %4119 = vmatmul.mubr.bf16.gmra.mxu0 %v3966
        %v4120 = vpop.f32.mrf.mxu0
        %v4121 = vadd.f32 %v3936, %v4120
        %v4122 = vpop.f32.mrf.mxu0
        %v4123 = vpop.f32.mrf.mxu0
        %v4124 = vadd.f32 %v3936, %v4123
        %v4125 = vpop.f32.mrf.mxu0
        %4126 = vmatprep.mubr.bf16.mxu0 0
        %4127 = vmatmul.mubr.bf16.gmra.mxu0 %v3969
        %v4128 = vpop.f32.mrf.mxu0
        %v4129 = vadd.f32 %v3936, %v4128
        %v4130 = vpop.f32.mrf.mxu0
        %v4131 = vpop.f32.mrf.mxu0
        %v4132 = vadd.f32 %v3936, %v4131
        %v4133 = vpop.f32.mrf.mxu0
        %4134 = vmatprep.mubr.bf16.mxu0 0
        %4135 = vmatmul.mubr.bf16.gmra.mxu0 %v3972
        %v4136 = vpop.f32.mrf.mxu0
        %v4137 = vadd.f32 %v3936, %v4136
        %v4138 = vpop.f32.mrf.mxu0
        %v4139 = vpop.f32.mrf.mxu0
        %v4140 = vadd.f32 %v3936, %v4139
        %v4141 = vpop.f32.mrf.mxu0
        %4142 = vmatprep.mubr.bf16.mxu0 0
        %4143 = vmatmul.mubr.bf16.gmra.mxu0 %v3975
        %v4144 = vpop.f32.mrf.mxu0
        %v4145 = vadd.f32 %v3936, %v4144
        %v4146 = vpop.f32.mrf.mxu0
        %v4147 = vpop.f32.mrf.mxu0
        %v4148 = vadd.f32 %v3936, %v4147
        %v4149 = vpop.f32.mrf.mxu0
        %4150 = vmatprep.mubr.bf16.mxu0 0
        %4151 = vmatmul.mubr.bf16.gmra.mxu0 %v3978
        %v4152 = vpop.f32.mrf.mxu0
        %v4153 = vadd.f32 %v3936, %v4152
        %v4154 = vpop.f32.mrf.mxu0
        %v4155 = vpop.f32.mrf.mxu0
        %v4156 = vadd.f32 %v3936, %v4155
        %v4157 = vpop.f32.mrf.mxu0
        %4158 = vmatprep.mubr.bf16.mxu0 0
        %4159 = vmatmul.mubr.bf16.gmra.mxu0 %v3981
        %v4160 = vpop.f32.mrf.mxu0
        %v4161 = vadd.f32 %v3936, %v4160
        %v4162 = vpop.f32.mrf.mxu0
        %v4163 = vpop.f32.mrf.mxu0
        %v4164 = vadd.f32 %v3936, %v4163
        %v4165 = vpop.f32.mrf.mxu0
        %4166 = vmatprep.mubr.bf16.mxu0 0
        %4167 = vmatmul.mubr.bf16.gmra.mxu0 %v3984
        %v4168 = vpop.f32.mrf.mxu0
        %v4169 = vadd.f32 %v3936, %v4168
        %v4170 = vpop.f32.mrf.mxu0
        %v4171 = vpop.f32.mrf.mxu0
        %v4172 = vadd.f32 %v3936, %v4171
        %v4173 = vpop.f32.mrf.mxu0
        %4174 = vmatprep.mubr.bf16.mxu0 0
        %4175 = vmatmul.mubr.bf16.gmra.mxu0 %v3987
        %v4176 = vpop.f32.mrf.mxu0
        %v4177 = vadd.f32 %v3936, %v4176
        %v4178 = vpop.f32.mrf.mxu0
        %v4179 = vpop.f32.mrf.mxu0
        %v4180 = vadd.f32 %v3936, %v4179
        %v4181 = vpop.f32.mrf.mxu0
        %4182 = vmatprep.mubr.bf16.mxu0 0
        %4183 = vmatmul.mubr.bf16.gmra.mxu0 %v3990
        %v4184 = vpop.f32.mrf.mxu0
        %v4185 = vadd.f32 %v3936, %v4184
        %v4186 = vpop.f32.mrf.mxu0
        %v4187 = vpop.f32.mrf.mxu0
        %v4188 = vadd.f32 %v3936, %v4187
        %v4189 = vpop.f32.mrf.mxu0
        %4190 = vmatprep.mubr.bf16.mxu0 0
        %4191 = vmatmul.mubr.bf16.gmra.mxu0 %v3993
        %v4192 = vpop.f32.mrf.mxu0
        %v4193 = vadd.f32 %v3936, %v4192
        %v4194 = vpop.f32.mrf.mxu0
        %v4195 = vpop.f32.mrf.mxu0
        %v4196 = vadd.f32 %v3936, %v4195
        %v4197 = vpop.f32.mrf.mxu0
        %4198 = vmatprep.mubr.bf16.mxu0 0
        %4199 = vmatmul.mubr.bf16.gmra.mxu0 %v3996
        %v4200 = vpop.f32.mrf.mxu0
        %v4201 = vadd.f32 %v3936, %v4200
        %v4202 = vpop.f32.mrf.mxu0
        %v4203 = vpop.f32.mrf.mxu0
        %v4204 = vadd.f32 %v3936, %v4203
        %v4205 = vpop.f32.mrf.mxu0
        %4206 = vmatprep.mubr.bf16.mxu0 0
        %4207 = vmatmul.mubr.bf16.gmra.mxu0 %v3999
        %v4208 = vpop.f32.mrf.mxu0
        %v4209 = vadd.f32 %v3936, %v4208
        %v4210 = vpop.f32.mrf.mxu0
        %v4211 = vpop.f32.mrf.mxu0
        %v4212 = vadd.f32 %v3936, %v4211
        %v4213 = vpop.f32.mrf.mxu0
        %4214 = vmatprep.mubr.bf16.mxu0 0
        %4215 = vmatmul.mubr.bf16.gmra.mxu0 %v4002
        %v4216 = vpop.f32.mrf.mxu0
        %v4217 = vadd.f32 %v3936, %v4216
        %v4218 = vpop.f32.mrf.mxu0
        %v4219 = vpop.f32.mrf.mxu0
        %v4220 = vadd.f32 %v3936, %v4219
        %v4221 = vpop.f32.mrf.mxu0
        %4222 = vmatprep.mubr.bf16.mxu0 0
        %4223 = vmatmul.mubr.bf16.gmra.mxu0 %v4005
        %v4224 = vpop.f32.mrf.mxu0
        %v4225 = vadd.f32 %v3936, %v4224
        %v4226 = vpop.f32.mrf.mxu0
        %v4227 = vpop.f32.mrf.mxu0
        %v4228 = vadd.f32 %v3936, %v4227
        %v4229 = vpop.f32.mrf.mxu0
        %4230 = vmatprep.mubr.bf16.mxu0 0
        %4231 = vmatmul.mubr.bf16.gmra.mxu0 %v4008
        %v4232 = vpop.f32.mrf.mxu0
        %v4233 = vadd.f32 %v3936, %v4232
        %v4234 = vpop.f32.mrf.mxu0
        %v4235 = vpop.f32.mrf.mxu0
        %v4236 = vadd.f32 %v3936, %v4235
        %v4237 = vpop.f32.mrf.mxu0
        %4238 = vmatprep.mubr.bf16.mxu0 0
        %4239 = vmatmul.mubr.bf16.gmra.mxu0 %v4011
        %v4240 = vpop.f32.mrf.mxu0
        %v4241 = vadd.f32 %v3936, %v4240
        %v4242 = vpop.f32.mrf.mxu0
        %v4243 = vpop.f32.mrf.mxu0
        %v4244 = vadd.f32 %v3936, %v4243
        %v4245 = vpop.f32.mrf.mxu0
        %4246 = vmatprep.mubr.bf16.mxu0 0
        %4247 = vmatmul.mubr.bf16.gmra.mxu0 %v4014
        %v4248 = vpop.f32.mrf.mxu0
        %v4249 = vadd.f32 %v3936, %v4248
        %v4250 = vpop.f32.mrf.mxu0
        %v4251 = vpop.f32.mrf.mxu0
        %v4252 = vadd.f32 %v3936, %v4251
        %v4253 = vpop.f32.mrf.mxu0
        %4254 = vmatprep.mubr.bf16.mxu0 0
        %4255 = vmatmul.mubr.bf16.gmra.mxu0 %v4017
        %v4256 = vpop.f32.mrf.mxu0
        %v4257 = vadd.f32 %v3936, %v4256
        %v4258 = vpop.f32.mrf.mxu0
        %v4259 = vpop.f32.mrf.mxu0
        %v4260 = vadd.f32 %v3936, %v4259
        %v4261 = vpop.f32.mrf.mxu0
        %4262 = vmatprep.mubr.bf16.mxu0 0
        %4263 = vmatmul.mubr.bf16.gmra.mxu0 %v4020
        %v4264 = vpop.f32.mrf.mxu0
        %v4265 = vadd.f32 %v3936, %v4264
        %v4266 = vpop.f32.mrf.mxu0
        %v4267 = vpop.f32.mrf.mxu0
        %v4268 = vadd.f32 %v3936, %v4267
        %v4269 = vpop.f32.mrf.mxu0
        %4270 = vmatprep.mubr.bf16.mxu0 0
        %4271 = vmatmul.mubr.bf16.gmra.mxu0 %v4023
        %v4272 = vpop.f32.mrf.mxu0
        %v4273 = vadd.f32 %v3936, %v4272
        %v4274 = vpop.f32.mrf.mxu0
        %v4275 = vpop.f32.mrf.mxu0
        %v4276 = vadd.f32 %v3936, %v4275
        %v4277 = vpop.f32.mrf.mxu0
        %4278 = vmatprep.mubr.bf16.mxu0 0
        %4279 = vmatmul.mubr.bf16.gmra.mxu0 %v4026
        %v4280 = vpop.f32.mrf.mxu0
        %v4281 = vadd.f32 %v3936, %v4280
        %v4282 = vpop.f32.mrf.mxu0
        %v4283 = vpop.f32.mrf.mxu0
        %v4284 = vadd.f32 %v3936, %v4283
        %v4285 = vpop.f32.mrf.mxu0
        %4286 = vmatprep.mubr.bf16.mxu0 0
        %4287 = vmatmul.mubr.bf16.gmra.mxu0 %v4029
        %v4288 = vpop.f32.mrf.mxu0
        %v4289 = vadd.f32 %v3936, %v4288
        %v4290 = vpop.f32.mrf.mxu0
        %v4291 = vpop.f32.mrf.mxu0
        %v4292 = vadd.f32 %v3936, %v4291
        %v4293 = vpop.f32.mrf.mxu0
        %4294 = vmatprep.mubr.bf16.mxu0 0
        %4295 = vmatmul.mubr.bf16.gmra.mxu0 %v4032
        %v4296 = vpop.f32.mrf.mxu0
        %v4297 = vadd.f32 %v3936, %v4296
        %v4298 = vpop.f32.mrf.mxu0
        %v4299 = vpop.f32.mrf.mxu0
        %v4300 = vadd.f32 %v3936, %v4299
        %v4301 = vpop.f32.mrf.mxu0
        %4302 = vmatprep.mubr.bf16.mxu0 0
        %4303 = vmatmul.mubr.bf16.gmra.mxu0 %v4035
        %v4304 = vpop.f32.mrf.mxu0
        %v4305 = vadd.f32 %v3936, %v4304
        %v4306 = vpop.f32.mrf.mxu0
        %v4307 = vpop.f32.mrf.mxu0
        %v4308 = vadd.f32 %v3936, %v4307
        %v4309 = vpop.f32.mrf.mxu0
        %4310 = vmatprep.mubr.bf16.mxu0 0
        %4311 = vmatmul.mubr.bf16.gmra.mxu0 %v4038
        %v4312 = vpop.f32.mrf.mxu0
        %v4313 = vadd.f32 %v3936, %v4312
        %v4314 = vpop.f32.mrf.mxu0
        %v4315 = vpop.f32.mrf.mxu0
        %v4316 = vadd.f32 %v3936, %v4315
        %v4317 = vpop.f32.mrf.mxu0
        %4318 = vmatprep.mubr.bf16.mxu0 0
        %4319 = vmatmul.mubr.bf16.gmra.mxu0 %v4041
        %v4320 = vpop.f32.mrf.mxu0
        %v4321 = vadd.f32 %v3936, %v4320
        %v4322 = vpop.f32.mrf.mxu0
        %v4323 = vpop.f32.mrf.mxu0
        %v4324 = vadd.f32 %v3936, %v4323
        %v4325 = vpop.f32.mrf.mxu0
        %4326 = vmatprep.mubr.bf16.mxu0 0
        %4327 = vmatmul.mubr.bf16.gmra.mxu0 %v4044
        %v4328 = vpop.f32.mrf.mxu0
        %v4329 = vadd.f32 %v3936, %v4328
        %v4330 = vpop.f32.mrf.mxu0
        %v4331 = vpop.f32.mrf.mxu0
        %v4332 = vadd.f32 %v3936, %v4331
        %v4333 = vpop.f32.mrf.mxu0
        %4334 = vdwg.mxu0
        %v4335 = vmax.f32 %v4081, 0.0
        %v4336 = vmax.f32 %v4084, 0.0
        %v4337 = vmax.f32 %v4089, 0.0
        %v4338 = vmax.f32 %v4092, 0.0
        %v4339 = vmax.f32 %v4097, 0.0
        %v4340 = vmax.f32 %v4100, 0.0
        %v4341 = vmax.f32 %v4105, 0.0
        %v4342 = vmax.f32 %v4108, 0.0
        %v4343 = vmax.f32 %v4113, 0.0
        %v4344 = vmax.f32 %v4116, 0.0
        %v4345 = vmax.f32 %v4121, 0.0
        %v4346 = vmax.f32 %v4124, 0.0
        %v4347 = vmax.f32 %v4129, 0.0
        %v4348 = vmax.f32 %v4132, 0.0
        %v4349 = vmax.f32 %v4137, 0.0
        %v4350 = vmax.f32 %v4140, 0.0
        %v4351 = vmax.f32 %v4145, 0.0
        %v4352 = vmax.f32 %v4148, 0.0
        %v4353 = vmax.f32 %v4153, 0.0
        %v4354 = vmax.f32 %v4156, 0.0
        %v4355 = vmax.f32 %v4161, 0.0
        %v4356 = vmax.f32 %v4164, 0.0
        %v4357 = vmax.f32 %v4169, 0.0
        %v4358 = vmax.f32 %v4172, 0.0
        %v4359 = vmax.f32 %v4177, 0.0
        %v4360 = vmax.f32 %v4180, 0.0
        %v4361 = vmax.f32 %v4185, 0.0
        %v4362 = vmax.f32 %v4188, 0.0
        %v4363 = vmax.f32 %v4193, 0.0
        %v4364 = vmax.f32 %v4196, 0.0
        %v4365 = vmax.f32 %v4201, 0.0
        %v4366 = vmax.f32 %v4204, 0.0
        %v4367 = vmax.f32 %v4209, 0.0
        %v4368 = vmax.f32 %v4212, 0.0
        %v4369 = vmax.f32 %v4217, 0.0
        %v4370 = vmax.f32 %v4220, 0.0
        %v4371 = vmax.f32 %v4225, 0.0
        %v4372 = vmax.f32 %v4228, 0.0
        %v4373 = vmax.f32 %v4233, 0.0
        %v4374 = vmax.f32 %v4236, 0.0
        %v4375 = vmax.f32 %v4241, 0.0
        %v4376 = vmax.f32 %v4244, 0.0
        %v4377 = vmax.f32 %v4249, 0.0
        %v4378 = vmax.f32 %v4252, 0.0
        %v4379 = vmax.f32 %v4257, 0.0
        %v4380 = vmax.f32 %v4260, 0.0
        %v4381 = vmax.f32 %v4265, 0.0
        %v4382 = vmax.f32 %v4268, 0.0
        %v4383 = vmax.f32 %v4273, 0.0
        %v4384 = vmax.f32 %v4276, 0.0
        %v4385 = vmax.f32 %v4281, 0.0
        %v4386 = vmax.f32 %v4284, 0.0
        %v4387 = vmax.f32 %v4289, 0.0
        %v4388 = vmax.f32 %v4292, 0.0
        %v4389 = vmax.f32 %v4297, 0.0
        %v4390 = vmax.f32 %v4300, 0.0
        %v4391 = vmax.f32 %v4305, 0.0
        %v4392 = vmax.f32 %v4308, 0.0
        %v4393 = vmax.f32 %v4313, 0.0
        %v4394 = vmax.f32 %v4316, 0.0
        %v4395 = vmax.f32 %v4321, 0.0
        %v4396 = vmax.f32 %v4324, 0.0
        %v4397 = vmax.f32 %v4329, 0.0
        %v4398 = vmax.f32 %v4332, 0.0
        %v4399 = vld [vmem:[%s11] sm:$0xf]
        %v4400 = vpack.c.bf16 %v4336, %v4335
        %v4401 = vpack.c.bf16 %v4338, %v4337
        %v4402 = vpack.c.bf16 %v4340, %v4339
        %v4403 = vpack.c.bf16 %v4342, %v4341
        %v4404 = vpack.c.bf16 %v4344, %v4343
        %v4405 = vpack.c.bf16 %v4346, %v4345
        %v4406 = vpack.c.bf16 %v4348, %v4347
        %v4407 = vpack.c.bf16 %v4350, %v4349
        %v4408 = vpack.c.bf16 %v4352, %v4351
        %v4409 = vpack.c.bf16 %v4354, %v4353
        %v4410 = vpack.c.bf16 %v4356, %v4355
        %v4411 = vpack.c.bf16 %v4358, %v4357
        %v4412 = vpack.c.bf16 %v4360, %v4359
        %v4413 = vpack.c.bf16 %v4362, %v4361
        %v4414 = vpack.c.bf16 %v4364, %v4363
        %v4415 = vpack.c.bf16 %v4366, %v4365
        %v4416 = vpack.c.bf16 %v4368, %v4367
        %v4417 = vpack.c.bf16 %v4370, %v4369
        %v4418 = vpack.c.bf16 %v4372, %v4371
        %v4419 = vpack.c.bf16 %v4374, %v4373
        %v4420 = vpack.c.bf16 %v4376, %v4375
        %v4421 = vpack.c.bf16 %v4378, %v4377
        %v4422 = vpack.c.bf16 %v4380, %v4379
        %v4423 = vpack.c.bf16 %v4382, %v4381
        %v4424 = vpack.c.bf16 %v4384, %v4383
        %v4425 = vpack.c.bf16 %v4386, %v4385
        %v4426 = vpack.c.bf16 %v4388, %v4387
        %v4427 = vpack.c.bf16 %v4390, %v4389
        %v4428 = vpack.c.bf16 %v4392, %v4391
        %v4429 = vpack.c.bf16 %v4394, %v4393
        %v4430 = vpack.c.bf16 %v4396, %v4395
        %v4431 = vpack.c.bf16 %v4398, %v4397
        %vm4432 = vcmask 130048
        %v4434 = vsel %vm4432, %v4399, 0
        %v4437 = vsel %vm4432, %v4400, 0
        %v4440 = vsel %vm4432, %v4401, 0
        %v4443 = vsel %vm4432, %v4402, 0
        %v4446 = vsel %vm4432, %v4403, 0
        %v4449 = vsel %vm4432, %v4404, 0
        %v4452 = vsel %vm4432, %v4405, 0
        %v4455 = vsel %vm4432, %v4406, 0
        %v4458 = vsel %vm4432, %v4407, 0
        %v4461 = vsel %vm4432, %v4408, 0
        %v4464 = vsel %vm4432, %v4409, 0
        %v4467 = vsel %vm4432, %v4410, 0
        %v4470 = vsel %vm4432, %v4411, 0
        %v4473 = vsel %vm4432, %v4412, 0
        %v4476 = vsel %vm4432, %v4413, 0
        %v4479 = vsel %vm4432, %v4414, 0
        %v4482 = vsel %vm4432, %v4415, 0
        %v4485 = vsel %vm4432, %v4416, 0
        %v4488 = vsel %vm4432, %v4417, 0
        %v4491 = vsel %vm4432, %v4418, 0
        %v4494 = vsel %vm4432, %v4419, 0
        %v4497 = vsel %vm4432, %v4420, 0
        %v4500 = vsel %vm4432, %v4421, 0
        %v4503 = vsel %vm4432, %v4422, 0
        %v4506 = vsel %vm4432, %v4423, 0
        %v4509 = vsel %vm4432, %v4424, 0
        %v4512 = vsel %vm4432, %v4425, 0
        %v4515 = vsel %vm4432, %v4426, 0
        %v4518 = vsel %vm4432, %v4427, 0
        %v4521 = vsel %vm4432, %v4428, 0
        %v4524 = vsel %vm4432, %v4429, 0
        %v4527 = vsel %vm4432, %v4430, 0
        %v4530 = vsel %vm4432, %v4431, 0
        %4532 = vmatprep.subr.bf16.mxu0 0
        %4533 = vmatpush1.bf16.xpose.msra.mxu0 %v4458
        %4534 = vmatprep.subr.bf16.mxu0 0
        %4535 = vmatpush1.bf16.xpose.msra.mxu0 %v4455
        %4536 = vmatprep.subr.bf16.mxu0 0
        %4537 = vmatpush1.bf16.xpose.msra.mxu0 %v4452
        %4538 = vmatprep.subr.bf16.mxu0 0
        %4539 = vmatpush1.bf16.xpose.msra.mxu0 %v4449
        %4540 = vmatprep.subr.bf16.mxu0 0
        %4541 = vmatpush1.bf16.xpose.msra.mxu0 %v4446
        %4542 = vmatprep.subr.bf16.mxu0 0
        %4543 = vmatpush1.bf16.xpose.msra.mxu0 %v4443
        %4544 = vmatprep.subr.bf16.mxu0 0
        %4545 = vmatpush1.bf16.xpose.msra.mxu0 %v4440
        %4546 = vmatprep.subr.bf16.mxu0 0
        %4547 = vmatpush1.bf16.xpose.msra.mxu0 %v4437
        %4548 = vmatprep.subr.bf16.mxu0 0
        %4549 = vmatpush2.bf16.xpose.msra.mxu0 %v4482
        %4550 = vmatprep.subr.bf16.mxu0 0
        %4551 = vmatpush2.bf16.xpose.msra.mxu0 %v4479
        %4552 = vmatprep.subr.bf16.mxu0 0
        %4553 = vmatpush2.bf16.xpose.msra.mxu0 %v4476
        %4554 = vmatprep.subr.bf16.mxu0 0
        %4555 = vmatpush2.bf16.xpose.msra.mxu0 %v4473
        %4556 = vmatprep.subr.bf16.mxu0 0
        %4557 = vmatpush2.bf16.xpose.msra.mxu0 %v4470
        %4558 = vmatprep.subr.bf16.mxu0 0
        %4559 = vmatpush2.bf16.xpose.msra.mxu0 %v4467
        %4560 = vmatprep.subr.bf16.mxu0 0
        %4561 = vmatpush2.bf16.xpose.msra.mxu0 %v4464
        %4562 = vmatprep.subr.bf16.mxu0 0
        %4563 = vmatpush2.bf16.xpose.msra.mxu0 %v4461
        %4564 = vmatprep.mubr.bf16.mxu0 0
        %4565 = vmatmul.mubr.bf16.gmra.mxu0 %v4434
        %v4566 = vpop.f32.mrf.mxu0
        %v4567 = vadd.f32 0.0, %v4566
        %v4568 = vpop.f32.mrf.mxu0
        %v4569 = vadd.f32 0.0, %v4568
        %v4570 = vpop.f32.mrf.mxu0
        %v4571 = vpop.f32.mrf.mxu0
        %4572 = vdwg.mxu0
        %4573 = vmatprep.subr.bf16.mxu0 0
        %4574 = vmatpush1.bf16.xpose.msra.mxu0 %v4506
        %4575 = vmatprep.subr.bf16.mxu0 0
        %4576 = vmatpush1.bf16.xpose.msra.mxu0 %v4503
        %4577 = vmatprep.subr.bf16.mxu0 0
        %4578 = vmatpush1.bf16.xpose.msra.mxu0 %v4500
        %4579 = vmatprep.subr.bf16.mxu0 0
        %4580 = vmatpush1.bf16.xpose.msra.mxu0 %v4497
        %4581 = vmatprep.subr.bf16.mxu0 0
        %4582 = vmatpush1.bf16.xpose.msra.mxu0 %v4494
        %4583 = vmatprep.subr.bf16.mxu0 0
        %4584 = vmatpush1.bf16.xpose.msra.mxu0 %v4491
        %4585 = vmatprep.subr.bf16.mxu0 0
        %4586 = vmatpush1.bf16.xpose.msra.mxu0 %v4488
        %4587 = vmatprep.subr.bf16.mxu0 0
        %4588 = vmatpush1.bf16.xpose.msra.mxu0 %v4485
        %4589 = vmatprep.subr.bf16.mxu0 0
        %4590 = vmatpush2.bf16.xpose.msra.mxu0 %v4530
        %4591 = vmatprep.subr.bf16.mxu0 0
        %4592 = vmatpush2.bf16.xpose.msra.mxu0 %v4527
        %4593 = vmatprep.subr.bf16.mxu0 0
        %4594 = vmatpush2.bf16.xpose.msra.mxu0 %v4524
        %4595 = vmatprep.subr.bf16.mxu0 0
        %4596 = vmatpush2.bf16.xpose.msra.mxu0 %v4521
        %4597 = vmatprep.subr.bf16.mxu0 0
        %4598 = vmatpush2.bf16.xpose.msra.mxu0 %v4518
        %4599 = vmatprep.subr.bf16.mxu0 0
        %4600 = vmatpush2.bf16.xpose.msra.mxu0 %v4515
        %4601 = vmatprep.subr.bf16.mxu0 0
        %4602 = vmatpush2.bf16.xpose.msra.mxu0 %v4512
        %4603 = vmatprep.subr.bf16.mxu0 0
        %4604 = vmatpush2.bf16.xpose.msra.mxu0 %v4509
        %4605 = vmatprep.mubr.bf16.mxu0 0
        %4606 = vmatmul.mubr.bf16.gmra.mxu0 %v4434
        %v4607 = vpop.f32.mrf.mxu0
        %v4608 = vadd.f32 0.0, %v4607
        %v4609 = vpop.f32.mrf.mxu0
        %v4610 = vadd.f32 0.0, %v4609
        %v4611 = vpop.f32.mrf.mxu0
        %v4612 = vpop.f32.mrf.mxu0
        %4613 = vdwg.mxu0
        %v4614 = vld [vmem:[#allocation2] sm:$0x1]
        %4616 = vset.pattern.permute.xlu0 0
        %4617 = vperm.xlu0 %4616, %v4614
        %v4618 = vpop.permute.xlu0 %4617
        %v4620 = vlaneseq
        %v4621 = vshrl.u32 %v4620, 7
        %v4622 = vsub.s32 0, %v4621
        %v4623 = vrot.slane %v4618, %v4622
        %v4624 = vadd.f32 %v4567, %v4623
        %v4625 = vadd.f32 %v4569, %v4623
        %v4626 = vadd.f32 %v4608, %v4623
        %v4627 = vadd.f32 %v4610, %v4623
        %v4632 = vcombine.low %v4624, %v4625
        %v4633 = vcombine.low %v4626, %v4627
        %v4635 = vunpack.c.l.s4 1966171168
        %v4636 = vunpack.c.0.s8 %v4635
        %v4637 = vlaneseq
        %v4638 = vshrl.u32 %v4637, 7
        %v4639 = vsub.s32 %v4636, %v4638
        %v4640 = vrot.slane %v4632, %v4639
        %v4642 = vunpack.c.l.s4 1966171168
        %v4643 = vunpack.c.0.s8 %v4642
        %v4644 = vlaneseq
        %v4645 = vshrl.u32 %v4644, 7
        %v4646 = vsub.s32 %v4643, %v4645
        %v4647 = vrot.slane %v4633, %v4646
        %v4648 = vcombine.low %v4640, %v4647
        %v4650 = vunpack.c.l.s4 1966171168
        %v4651 = vunpack.c.0.s8 %v4650
        %v4652 = vlaneseq
        %v4653 = vshrl.u32 %v4652, 7
        %v4654 = vsub.s32 %v4651, %v4653
        %v4655 = vrot.slane %v4648, %v4654
        %v4657 = vlaneseq
        %vm4658 = vcmp.ge.s32.totalorder %v4657, 0
        %vm4659 = vcmp.lt.s32.totalorder %v4657, 512
        %vm4660 = vmand %vm4658, %vm4659
        %4661 = vst.msk [vmem:[%s476] sm:$0xf] %vm4660, %v4655
        %s4662 = sand.u32 %s320, 1
        %s4663 = scalar_lea.sflag [#allocation4], %s4662
        %s4664 = sand.u32 %s320, 1
        %s4665 = smul.addr %s4664, 4
        %s4666 = scalar_lea.vmem [#allocation3], %s4665
        // Predicated region
        $region73: #{tpu_custom_call.1} parent=71 // pred_check
          %p4667 = pneg %p330
        $region74: #{tpu_custom_call.1} parent=71 // pred_check_branch
          %4669 = sbr.rel (%p4667) target = $region76
        $region75: #{tpu_custom_call.1} parent=71 // pred_region
          %s4671 = ssub.s32 64, 64
          %4672 = vsyncadd %s4663, %s4671
          %s4673 = smul.addr %s29, 4
          %s4674 = smul.addr %s4673, 16
          %s4675 = scalar_lea.hbm %s13, %s4674
          %s4677 = sshll.u32 %s4666, 4
          %s4678 = int_to_ptr.vmem [resolvable:$true] %s4677
          %4680 = dma.vmem_to_hbm [thread:$0]  %s4678, 64, %s4675, %s4663
        $region76: #{tpu_custom_call.1} parent=71 // pred_fallthru
          _
      $region72: #{tpu_custom_call.1} parent=5 // pred_fallthru
        _
      %p4681 = scmp.le.s32.totalorder 2, %s24
      // Predicated region
      $region77: #{tpu_custom_call.1} parent=5 // pred_check
        %p4682 = pneg %p4681
      $region78: #{tpu_custom_call.1} parent=5 // pred_check_branch
        %4684 = sbr.rel (%p4682) target = $region80
      $region79: #{tpu_custom_call.1} parent=5 // pred_region
        %s4685 = ssub.s32 %s24, 2
        // Predicated region
        $region81: #{tpu_custom_call.1} parent=79 // pred_check
          %p4686 = pneg %p336
        $region82: #{tpu_custom_call.1} parent=79 // pred_check_branch
          %4688 = sbr.rel (%p4686) target = $region84
        $region83: #{tpu_custom_call.1} parent=79 // pred_region
          %s4689 = sand.u32 %s321, 1
          %s4690 = scalar_lea.sflag [#allocation4], %s4689
          %s4691 = sand.u32 %s321, 1
          %s4692 = smul.addr %s4691, 4
          %s4693 = scalar_lea.vmem [#allocation3], %s4692
          %4694 = dma.done %s4690, 64
        $region84: #{tpu_custom_call.1} parent=79 // pred_fallthru
          _
      $region80: #{tpu_custom_call.1} parent=5 // pred_fallthru
        _
    $region6: #{tpu_custom_call.1} parent=1 // loop_footer
      %s28 = sadd.s32 1, %s24
    $region7: #{tpu_custom_call.1} parent=1 // loop_footer_branch
      %23 = sbr.rel target = $region3
    $region8: #{tpu_custom_call.1} parent=1 // loop_exit
      _
    %4695 = vsyncpa [#allocation4], 1
    %s4696 = scalar_lea.sflag [#allocation4], 1
    %4697 = vsyncpa %s4696, 1

</llo_original>
